<compile_context>
chip_gen: v7x
topology: tpu7x:2x2x1
jax: 0.10.0
libtpu: 0.0.40
codegen_flags: <defaults>
</compile_context>

<pallas_src>
import functools

import jax
import jax.numpy as jnp
from jax.experimental import pallas as pl
from jax.experimental.pallas import tpu as pltpu

_LANE = 128   # vreg lane width  (last-dim tile)
_SUB = 8      # vreg sublanes    (second-to-last-dim tile)
_VMEM_LIMIT = 48 * 1024 * 1024   # explicit scoped-VMEM budget; fits v5e/v6e/v7x


def _rup(x, m):
    return ((x + m - 1) // m) * m


def _pad_to(a, shape):
    return jnp.pad(a, [(0, s - d) for d, s in zip(a.shape, shape)])


# ----------------------------- Pallas kernels ------------------------------

def _gru_kernel(x_ref, wx_ref, wh_ref, bx_ref, bh_ref, hout_ref):
    """Single-layer GRU over time, returns last hidden state.

    x_ref: [Bblk, L, E] (batch-major), wx: [E, 3H], wh: [H, 3H], bx/bh: [1, 3H].
    Gate order (r, z, n) and bias placement match PyTorch nn.GRU.
    """
    Bb, L, E = x_ref.shape
    H = wh_ref.shape[0]

    # Hoisted input projection: one large MXU matmul over all timesteps.
    # (Bb and L are multiples of 8, E of 128 -> the reshape is tile-aligned, no copy.)
    x2 = x_ref[...].reshape(Bb * L, E)
    gx_all = (jnp.dot(x2, wx_ref[...], preferred_element_type=jnp.float32)
              + bx_ref[...]).reshape(Bb, L, 3 * H)

    wh = wh_ref[...]
    bh = jnp.broadcast_to(bh_ref[...], (Bb, 3 * H))   # broadcast hoisted out of the loop
    h = jnp.zeros((Bb, H), jnp.float32)

    # Statically unrolled recurrence: only the [Bb,H]@[H,3H] matmul + gates stay serial.
    for t in range(L):
        gx = gx_all[:, t, :]                                               # [Bb, 3H]
        gh = jnp.dot(h, wh, preferred_element_type=jnp.float32) + bh       # [Bb, 3H]
        r = jax.nn.sigmoid(gx[:, :H] + gh[:, :H])
        z = jax.nn.sigmoid(gx[:, H:2 * H] + gh[:, H:2 * H])
        n = jnp.tanh(gx[:, 2 * H:] + r * gh[:, 2 * H:])
        h = (1.0 - z) * n + z * h

    hout_ref[...] = h


def _attn_head_kernel(v_ref, q_ref, wv_ref, bv_ref, wq_ref, bq_ref, wa_ref,
                      wqn_ref, bqn_ref, wvn_ref, bvn_ref,
                      w1_ref, b1_ref, w2_ref, b2_ref,
                      joint_ref, logits_ref,
                      joint_sc, hidden_sc, *, k_actual):
    """Fused NewAttention + attended feature + q_net/v_net + fusion + SimpleClassifier.

    Grid = (batch blocks, classifier-output blocks).  The full attention / fusion /
    classifier-hidden path is computed once per batch block (at c == 0) and kept
    resident in VMEM scratch; each c step only streams one cls_w2 tile.
    """
    c = pl.program_id(1)

    @pl.when(c == 0)
    def _():
        Bb, K, D = v_ref.shape
        H = wq_ref.shape[1]
        v = v_ref[...]                                                      # [Bb, K, D]

        # v / q projections.  Dims are (8,128)-aligned -> reshape is a no-op relayout.
        v_proj = jnp.maximum(
            jnp.dot(v.reshape(Bb * K, D), wv_ref[...],
                    preferred_element_type=jnp.float32) + bv_ref[...],
            0.0).reshape(Bb, K, H)                                          # [Bb, K, H]
        q_proj = jnp.maximum(
            jnp.dot(q_ref[...], wq_ref[...],
                    preferred_element_type=jnp.float32) + bq_ref[...], 0.0)  # [Bb, H]

        # Attention logits: fold the rank-1 projection into q_proj (VPU mul) and
        # lane-reduce, instead of an N=1 MXU matmul with a lane-width-1 result.
        # (The scalar logit bias is dropped: softmax is shift-invariant.)
        qw = q_proj * wa_ref[...]                                           # [Bb, H]
        logits = jnp.sum(v_proj * qw[:, None, :], axis=-1)                  # [Bb, K]
        if K > k_actual:   # mask padded objects out of the softmax
            mask = jax.lax.broadcasted_iota(jnp.int32, (Bb, K), 1) < k_actual
            logits = jnp.where(mask, logits, -1e30)

        m = jnp.max(logits, axis=1, keepdims=True)
        e = jnp.exp(logits - m)
        att = e / jnp.sum(e, axis=1, keepdims=True)                         # softmax over K
        v_emb = jnp.sum(att[:, :, None] * v, axis=1)                        # [Bb, D]

        # q_net / v_net (FCNet = Linear+ReLU; weight_norm is a reparametrization).
        q_repr = jnp.maximum(
            jnp.dot(q_ref[...], wqn_ref[...],
                    preferred_element_type=jnp.float32) + bqn_ref[...], 0.0)
        v_repr = jnp.maximum(
            jnp.dot(v_emb, wvn_ref[...],
                    preferred_element_type=jnp.float32) + bvn_ref[...], 0.0)
        joint = q_repr * v_repr                                             # [Bb, H]
        hidden = jnp.maximum(
            jnp.dot(joint, w1_ref[...],
                    preferred_element_type=jnp.float32) + b1_ref[...], 0.0)  # [Bb, 2H]

        joint_sc[...] = joint
        hidden_sc[...] = hidden
        joint_ref[...] = joint     # output block is resident across the c axis

    # Classifier output tile for this c block (weight tile streamed, hidden resident).
    logits_ref[...] = (jnp.dot(hidden_sc[...], w2_ref[...],
                               preferred_element_type=jnp.float32) + b2_ref[...])


# ------------------------------ JAX wrappers --------------------------------

def _gru_last_hidden(w_emb_p, pp, b_blk):
    Bp, L, Ep = w_emb_p.shape
    Hp = pp["gru_wh"].shape[0]
    return pl.pallas_call(
        _gru_kernel,
        out_shape=jax.ShapeDtypeStruct((Bp, Hp), jnp.float32),
        grid=(Bp // b_blk,),
        in_specs=[
            pl.BlockSpec((b_blk, L, Ep), lambda i: (i, 0, 0)),
            pl.BlockSpec((Ep, 3 * Hp), lambda i: (0, 0)),   # weights: constant index map,
            pl.BlockSpec((Hp, 3 * Hp), lambda i: (0, 0)),   # DMA'd once, stay resident
            pl.BlockSpec((1, 3 * Hp), lambda i: (0, 0)),
            pl.BlockSpec((1, 3 * Hp), lambda i: (0, 0)),
        ],
        out_specs=pl.BlockSpec((b_blk, Hp), lambda i: (i, 0)),
        compiler_params=pltpu.CompilerParams(
            dimension_semantics=("parallel",),
            vmem_limit_bytes=_VMEM_LIMIT),
    )(w_emb_p, pp["gru_wx"], pp["gru_wh"], pp["gru_bx"], pp["gru_bh"])


def _attn_head(v_p, q_emb_p, pp, b_blk, c_blk, k_actual):
    Bp, Kp, Dp = v_p.shape
    Hp = pp["att_wq"].shape[1]
    H2p = pp["cls_w1"].shape[1]
    Cp = pp["cls_w2"].shape[1]

    kernel = functools.partial(_attn_head_kernel, k_actual=k_actual)
    return pl.pallas_call(
        kernel,
        out_shape=(jax.ShapeDtypeStruct((Bp, Hp), jnp.float32),
                   jax.ShapeDtypeStruct((Bp, Cp), jnp.float32)),
        grid=(Bp // b_blk, Cp // c_blk),
        in_specs=[
            pl.BlockSpec((b_blk, Kp, Dp), lambda i, c: (i, 0, 0)),
            pl.BlockSpec((b_blk, Hp), lambda i, c: (i, 0)),
            pl.BlockSpec((Dp, Hp), lambda i, c: (0, 0)),
            pl.BlockSpec((1, Hp), lambda i, c: (0, 0)),
            pl.BlockSpec((Hp, Hp), lambda i, c: (0, 0)),
            pl.BlockSpec((1, Hp), lambda i, c: (0, 0)),
            pl.BlockSpec((1, Hp), lambda i, c: (0, 0)),
            pl.BlockSpec((Hp, Hp), lambda i, c: (0, 0)),
            pl.BlockSpec((1, Hp), lambda i, c: (0, 0)),
            pl.BlockSpec((Dp, Hp), lambda i, c: (0, 0)),
            pl.BlockSpec((1, Hp), lambda i, c: (0, 0)),
            pl.BlockSpec((Hp, H2p), lambda i, c: (0, 0)),
            pl.BlockSpec((1, H2p), lambda i, c: (0, 0)),
            pl.BlockSpec((H2p, c_blk), lambda i, c: (0, c)),   # classifier weight streamed over c
            pl.BlockSpec((1, c_blk), lambda i, c: (0, c)),
        ],
        out_specs=(pl.BlockSpec((b_blk, Hp), lambda i, c: (i, 0)),
                   pl.BlockSpec((b_blk, c_blk), lambda i, c: (i, c))),
        scratch_shapes=[pltpu.VMEM((b_blk, Hp), jnp.float32),
                        pltpu.VMEM((b_blk, H2p), jnp.float32)],
        compiler_params=pltpu.CompilerParams(
            dimension_semantics=("parallel", "arbitrary"),
            vmem_limit_bytes=_VMEM_LIMIT),
    )(v_p, q_emb_p, pp["att_wv"], pp["att_bv"], pp["att_wq"], pp["att_bq"],
      pp["att_wa"], pp["qnet_w"], pp["qnet_b"], pp["vnet_w"], pp["vnet_b"],
      pp["cls_w1"], pp["cls_b1"], pp["cls_w2"], pp["cls_b2"])


def _pad_params(params, Ep, Hp, Dp, H2p, Cp):
    """Zero-pad all weights to (8,128)-aligned shapes; GRU gates padded gate-wise."""
    E, H3 = params["gru_wx"].shape
    H = H3 // 3

    def pad_gates(w, rows_p):   # [rows, 3H] -> [rows_p, 3Hp], each gate padded separately
        return jnp.concatenate(
            [_pad_to(w[:, g * H:(g + 1) * H], (rows_p, Hp)) for g in range(3)], axis=1)

    return {
        "emb_table": _pad_to(params["emb_table"], (params["emb_table"].shape[0], Ep)),
        "gru_wx": pad_gates(params["gru_wx"], Ep),
        "gru_wh": pad_gates(params["gru_wh"], Hp),
        "gru_bx": pad_gates(params["gru_bx"], 1),
        "gru_bh": pad_gates(params["gru_bh"], 1),
        "att_wv": _pad_to(params["att_wv"], (Dp, Hp)),
        "att_bv": _pad_to(params["att_bv"], (1, Hp)),
        "att_wq": _pad_to(params["att_wq"], (Hp, Hp)),
        "att_bq": _pad_to(params["att_bq"], (1, Hp)),
        "att_wa": _pad_to(params["att_wa"].T, (1, Hp)),   # used as a broadcast row
        "qnet_w": _pad_to(params["qnet_w"], (Hp, Hp)),
        "qnet_b": _pad_to(params["qnet_b"], (1, Hp)),
        "vnet_w": _pad_to(params["vnet_w"], (Dp, Hp)),
        "vnet_b": _pad_to(params["vnet_b"], (1, Hp)),
        "cls_w1": _pad_to(params["cls_w1"], (Hp, H2p)),
        "cls_b1": _pad_to(params["cls_b1"], (1, H2p)),
        "cls_w2": _pad_to(params["cls_w2"], (H2p, Cp)),
        "cls_b2": _pad_to(params["cls_b2"], (1, Cp)),
    }


def base_model_forward(v, q, params):
    """Pallas implementation of BaseModel.forward. Returns (joint_repr, ce_logits, w_emb)."""
    B, K, D = v.shape
    L = q.shape[1]
    E = params["emb_table"].shape[1]
    H = params["att_wq"].shape[0]
    H2 = params["cls_w1"].shape[1]
    C = params["cls_w2"].shape[1]

    # Tile / pad geometry (lane dims -> 128, sublane/batch dims -> 8).
    b_blk = 64 if B > 64 else _rup(B, _SUB)
    Bp = _rup(B, b_blk)
    Kp = _rup(K, _SUB)
    Dp, Ep, Hp, H2p = (_rup(x, _LANE) for x in (D, E, H, H2))
    c_blk = min(_rup(C, _LANE), 256)
    Cp = _rup(C, c_blk)

    pp = _pad_params(params, Ep, Hp, Dp, H2p, Cp)

    # Embedding lookup (glue, plain JAX gather), padded for the kernels.
    q_pad = jnp.pad(q, ((0, Bp - B), (0, 0)))
    w_emb_p = pp["emb_table"][q_pad]                     # [Bp, L, Ep]
    w_emb = w_emb_p[:B, :, :E]                           # returned, matches nn.Embedding(q)

    v_p = _pad_to(v, (Bp, Kp, Dp))

    q_emb_p = _gru_last_hidden(w_emb_p, pp, b_blk)                       # [Bp, Hp]
    joint_p, ce_p = _attn_head(v_p, q_emb_p, pp, b_blk, c_blk, K)        # [Bp,Hp], [Bp,Cp]

    return joint_p[:B, :H], ce_p[:B, :C], w_emb


# --------------------------- pure-JAX reference ------------------------------

def base_model_forward_ref(v, q, params):
    w_emb = params["emb_table"][q]
    B, L, E = w_emb.shape
    H = params["gru_wh"].shape[0]
    h = jnp.zeros((B, H), jnp.float32)
    for t in range(L):
        gx = w_emb[:, t, :] @ params["gru_wx"] + params["gru_bx"]
        gh = h @ params["gru_wh"] + params["gru_bh"]
        r = jax.nn.sigmoid(gx[:, :H] + gh[:, :H])
        z = jax.nn.sigmoid(gx[:, H:2 * H] + gh[:, H:2 * H])
        n = jnp.tanh(gx[:, 2 * H:] + r * gh[:, 2 * H:])
        h = (1.0 - z) * n + z * h
    q_emb = h
    v_proj = jax.nn.relu(v @ params["att_wv"] + params["att_bv"])
    q_proj = jax.nn.relu(q_emb @ params["att_wq"] + params["att_bq"])
    logits = (v_proj * q_proj[:, None, :]) @ params["att_wa"] + params["att_ba"]
    att = jax.nn.softmax(logits[..., 0], axis=1)
    v_emb = jnp.sum(att[:, :, None] * v, axis=1)
    q_repr = jax.nn.relu(q_emb @ params["qnet_w"] + params["qnet_b"])
    v_repr = jax.nn.relu(v_emb @ params["vnet_w"] + params["vnet_b"])
    joint = q_repr * v_repr
    hid = jax.nn.relu(joint @ params["cls_w1"] + params["cls_b1"])
    ce = hid @ params["cls_w2"] + params["cls_b2"]
    return joint, ce, w_emb


# --------------------------------- main --------------------------------------

def make_params(key, ntoken, emb_dim, num_hid, obj_dim, num_class):
    ks = jax.random.split(key, 16)
    s = 0.1
    return {
        "emb_table": s * jax.random.normal(ks[0], (ntoken, emb_dim), jnp.float32),
        "gru_wx": s * jax.random.normal(ks[1], (emb_dim, 3 * num_hid), jnp.float32),
        "gru_wh": s * jax.random.normal(ks[2], (num_hid, 3 * num_hid), jnp.float32),
        "gru_bx": s * jax.random.normal(ks[3], (1, 3 * num_hid), jnp.float32),
        "gru_bh": s * jax.random.normal(ks[4], (1, 3 * num_hid), jnp.float32),
        "att_wv": s * jax.random.normal(ks[5], (obj_dim, num_hid), jnp.float32),
        "att_bv": s * jax.random.normal(ks[6], (1, num_hid), jnp.float32),
        "att_wq": s * jax.random.normal(ks[7], (num_hid, num_hid), jnp.float32),
        "att_bq": s * jax.random.normal(ks[8], (1, num_hid), jnp.float32),
        "att_wa": s * jax.random.normal(ks[9], (num_hid, 1), jnp.float32),
        "att_ba": s * jax.random.normal(ks[10], (1, 1), jnp.float32),
        "qnet_w": s * jax.random.normal(ks[11], (num_hid, num_hid), jnp.float32),
        "qnet_b": jnp.zeros((1, num_hid), jnp.float32),
        "vnet_w": s * jax.random.normal(ks[12], (obj_dim, num_hid), jnp.float32),
        "vnet_b": jnp.zeros((1, num_hid), jnp.float32),
        "cls_w1": s * jax.random.normal(ks[13], (num_hid, 2 * num_hid), jnp.float32),
        "cls_b1": jnp.zeros((1, 2 * num_hid), jnp.float32),
        "cls_w2": s * jax.random.normal(ks[14], (2 * num_hid, num_class), jnp.float32),
        "cls_b2": jnp.zeros((1, num_class), jnp.float32),
    }


if __name__ == "__main__":
    # Small shapes consistent with the forward signature.
    B, K, D = 2, 8, 32          # batch, num_objs, obj_dim
    L, E = 8, 32                # seq_length, word-embedding dim
    H, C = 32, 16               # num_hid, num_class
    NTOKEN = 50

    key = jax.random.PRNGKey(0)
    kp, kv, kq = jax.random.split(key, 3)
    params = make_params(kp, NTOKEN, E, H, D, C)
    v = jax.random.normal(kv, (B, K, D), jnp.float32)
    q = jax.random.randint(kq, (B, L), 0, NTOKEN, dtype=jnp.int32)

    joint_repr, ce_logits, w_emb = jax.block_until_ready(
        base_model_forward(v, q, params))

    # Correctness check against a pure-JAX reference of the same math.
    j_ref, c_ref, w_ref = base_model_forward_ref(v, q, params)
    assert jnp.allclose(joint_repr, j_ref, atol=1e-4, rtol=1e-4)
    assert jnp.allclose(ce_logits, c_ref, atol=1e-4, rtol=1e-4)
    assert jnp.allclose(w_emb, w_ref, atol=1e-6, rtol=1e-6)

    print("KERNEL_OK")
</pallas_src>

<mosaic_0001>
module attributes {stable_mosaic.version = 11 : i64} {
  func.func @_gru_kernel(%arg0: i32, %arg1: memref<8x8x128xf32, #tpu.memory_space<vmem>>, %arg2: memref<128x384xf32, #tpu.memory_space<vmem>>, %arg3: memref<128x384xf32, #tpu.memory_space<vmem>>, %arg4: memref<1x384xf32, #tpu.memory_space<vmem>>, %arg5: memref<1x384xf32, #tpu.memory_space<vmem>>, %arg6: memref<8x128xf32, #tpu.memory_space<vmem>>) attributes {dimension_semantics = [#tpu.dimension_semantics<parallel>], iteration_bounds = array<i64: 1>, scalar_prefetch = 0 : i64, scratch_operands = 0 : i64, tpu.core_type = #tpu.core_type<tc>, window_params = [{transform_indices = @transform_0, window_bounds = array<i64: 8, 8, 128>}, {pipeline_mode = #tpu.pipeline_mode<synchronous>, transform_indices = @transform_1, window_bounds = array<i64: 128, 384>}, {pipeline_mode = #tpu.pipeline_mode<synchronous>, transform_indices = @transform_2, window_bounds = array<i64: 128, 384>}, {pipeline_mode = #tpu.pipeline_mode<synchronous>, transform_indices = @transform_3, window_bounds = array<i64: 1, 384>}, {pipeline_mode = #tpu.pipeline_mode<synchronous>, transform_indices = @transform_4, window_bounds = array<i64: 1, 384>}, {transform_indices = @transform_5, window_bounds = array<i64: 8, 128>}]} {
    %c0 = arith.constant 0 : index
    %c0_0 = arith.constant 0 : index
    %c0_1 = arith.constant 0 : index
    %0 = vector.load %arg1[%c0, %c0_0, %c0_1] : memref<8x8x128xf32, #tpu.memory_space<vmem>>, vector<8x8x128xf32>
    %1 = vector.shape_cast %0 : vector<8x8x128xf32> to vector<64x128xf32>
    %c0_2 = arith.constant 0 : index
    %c0_3 = arith.constant 0 : index
    %2 = vector.load %arg2[%c0_2, %c0_3] : memref<128x384xf32, #tpu.memory_space<vmem>>, vector<128x384xf32>
    %cst = arith.constant dense<0.000000e+00> : vector<64x384xf32>
    %3 = tpu.matmul %1, %2, %cst {dimension_numbers = #tpu.dot_dimension_numbers<[1], [0], [0], [1], [0, 0, 1, 1], [], []>} : vector<64x128xf32>, vector<128x384xf32>, vector<64x384xf32> -> vector<64x384xf32>
    %c0_4 = arith.constant 0 : index
    %c0_5 = arith.constant 0 : index
    %4 = vector.load %arg4[%c0_4, %c0_5] : memref<1x384xf32, #tpu.memory_space<vmem>>, vector<1x384xf32>
    %5 = vector.broadcast %4 : vector<1x384xf32> to vector<64x384xf32>
    %6 = arith.addf %3, %5 : vector<64x384xf32>
    %7 = vector.shape_cast %6 : vector<64x384xf32> to vector<8x8x384xf32>
    %c0_6 = arith.constant 0 : index
    %c0_7 = arith.constant 0 : index
    %8 = vector.load %arg3[%c0_6, %c0_7] : memref<128x384xf32, #tpu.memory_space<vmem>>, vector<128x384xf32>
    %c0_8 = arith.constant 0 : index
    %c0_9 = arith.constant 0 : index
    %9 = vector.load %arg5[%c0_8, %c0_9] : memref<1x384xf32, #tpu.memory_space<vmem>>, vector<1x384xf32>
    %10 = vector.shape_cast %9 : vector<1x384xf32> to vector<1x384xf32>
    %11 = vector.broadcast %10 : vector<1x384xf32> to vector<8x384xf32>
    %cst_10 = arith.constant 0.000000e+00 : f32
    %12 = vector.broadcast %cst_10 : f32 to vector<8x128xf32>
    %13 = vector.extract_strided_slice %7 {offsets = [0, 0, 0], sizes = [8, 1, 384], strides = [1, 1, 1]} : vector<8x8x384xf32> to vector<8x1x384xf32>
    %14 = vector.shape_cast %13 : vector<8x1x384xf32> to vector<8x384xf32>
    %cst_11 = arith.constant dense<0.000000e+00> : vector<8x384xf32>
    %15 = tpu.matmul %12, %8, %cst_11 {dimension_numbers = #tpu.dot_dimension_numbers<[1], [0], [0], [1], [0, 0, 1, 1], [], []>} : vector<8x128xf32>, vector<128x384xf32>, vector<8x384xf32> -> vector<8x384xf32>
    %16 = arith.addf %15, %11 : vector<8x384xf32>
    %17 = vector.extract_strided_slice %14 {offsets = [0, 0], sizes = [8, 128], strides = [1, 1]} : vector<8x384xf32> to vector<8x128xf32>
    %18 = vector.extract_strided_slice %16 {offsets = [0, 0], sizes = [8, 128], strides = [1, 1]} : vector<8x384xf32> to vector<8x128xf32>
    %19 = arith.addf %17, %18 : vector<8x128xf32>
    %20 = arith.negf %19 : vector<8x128xf32>
    %21 = math.exp %20 : vector<8x128xf32>
    %cst_12 = arith.constant 1.000000e+00 : f32
    %22 = vector.broadcast %cst_12 : f32 to vector<8x128xf32>
    %23 = arith.addf %22, %21 : vector<8x128xf32>
    %24 = arith.divf %22, %23 : vector<8x128xf32>
    %25 = vector.extract_strided_slice %14 {offsets = [0, 128], sizes = [8, 128], strides = [1, 1]} : vector<8x384xf32> to vector<8x128xf32>
    %26 = vector.extract_strided_slice %16 {offsets = [0, 128], sizes = [8, 128], strides = [1, 1]} : vector<8x384xf32> to vector<8x128xf32>
    %27 = arith.addf %25, %26 : vector<8x128xf32>
    %28 = arith.negf %27 : vector<8x128xf32>
    %29 = math.exp %28 : vector<8x128xf32>
    %cst_13 = arith.constant 1.000000e+00 : f32
    %30 = vector.broadcast %cst_13 : f32 to vector<8x128xf32>
    %31 = arith.addf %30, %29 : vector<8x128xf32>
    %32 = arith.divf %30, %31 : vector<8x128xf32>
    %33 = vector.extract_strided_slice %14 {offsets = [0, 256], sizes = [8, 128], strides = [1, 1]} : vector<8x384xf32> to vector<8x128xf32>
    %34 = vector.extract_strided_slice %16 {offsets = [0, 256], sizes = [8, 128], strides = [1, 1]} : vector<8x384xf32> to vector<8x128xf32>
    %35 = arith.mulf %24, %34 : vector<8x128xf32>
    %36 = arith.addf %33, %35 : vector<8x128xf32>
    %37 = math.tanh %36 : vector<8x128xf32>
    %cst_14 = arith.constant 1.000000e+00 : f32
    %38 = vector.broadcast %cst_14 : f32 to vector<8x128xf32>
    %39 = arith.subf %38, %32 : vector<8x128xf32>
    %40 = arith.mulf %39, %37 : vector<8x128xf32>
    %41 = arith.mulf %32, %12 : vector<8x128xf32>
    %42 = arith.addf %40, %41 : vector<8x128xf32>
    %43 = vector.extract_strided_slice %7 {offsets = [0, 1, 0], sizes = [8, 1, 384], strides = [1, 1, 1]} : vector<8x8x384xf32> to vector<8x1x384xf32>
    %44 = vector.shape_cast %43 : vector<8x1x384xf32> to vector<8x384xf32>
    %cst_15 = arith.constant dense<0.000000e+00> : vector<8x384xf32>
    %45 = tpu.matmul %42, %8, %cst_15 {dimension_numbers = #tpu.dot_dimension_numbers<[1], [0], [0], [1], [0, 0, 1, 1], [], []>} : vector<8x128xf32>, vector<128x384xf32>, vector<8x384xf32> -> vector<8x384xf32>
    %46 = arith.addf %45, %11 : vector<8x384xf32>
    %47 = vector.extract_strided_slice %44 {offsets = [0, 0], sizes = [8, 128], strides = [1, 1]} : vector<8x384xf32> to vector<8x128xf32>
    %48 = vector.extract_strided_slice %46 {offsets = [0, 0], sizes = [8, 128], strides = [1, 1]} : vector<8x384xf32> to vector<8x128xf32>
    %49 = arith.addf %47, %48 : vector<8x128xf32>
    %50 = arith.negf %49 : vector<8x128xf32>
    %51 = math.exp %50 : vector<8x128xf32>
    %cst_16 = arith.constant 1.000000e+00 : f32
    %52 = vector.broadcast %cst_16 : f32 to vector<8x128xf32>
    %53 = arith.addf %52, %51 : vector<8x128xf32>
    %54 = arith.divf %52, %53 : vector<8x128xf32>
    %55 = vector.extract_strided_slice %44 {offsets = [0, 128], sizes = [8, 128], strides = [1, 1]} : vector<8x384xf32> to vector<8x128xf32>
    %56 = vector.extract_strided_slice %46 {offsets = [0, 128], sizes = [8, 128], strides = [1, 1]} : vector<8x384xf32> to vector<8x128xf32>
    %57 = arith.addf %55, %56 : vector<8x128xf32>
    %58 = arith.negf %57 : vector<8x128xf32>
    %59 = math.exp %58 : vector<8x128xf32>
    %cst_17 = arith.constant 1.000000e+00 : f32
    %60 = vector.broadcast %cst_17 : f32 to vector<8x128xf32>
    %61 = arith.addf %60, %59 : vector<8x128xf32>
    %62 = arith.divf %60, %61 : vector<8x128xf32>
    %63 = vector.extract_strided_slice %44 {offsets = [0, 256], sizes = [8, 128], strides = [1, 1]} : vector<8x384xf32> to vector<8x128xf32>
    %64 = vector.extract_strided_slice %46 {offsets = [0, 256], sizes = [8, 128], strides = [1, 1]} : vector<8x384xf32> to vector<8x128xf32>
    %65 = arith.mulf %54, %64 : vector<8x128xf32>
    %66 = arith.addf %63, %65 : vector<8x128xf32>
    %67 = math.tanh %66 : vector<8x128xf32>
    %cst_18 = arith.constant 1.000000e+00 : f32
    %68 = vector.broadcast %cst_18 : f32 to vector<8x128xf32>
    %69 = arith.subf %68, %62 : vector<8x128xf32>
    %70 = arith.mulf %69, %67 : vector<8x128xf32>
    %71 = arith.mulf %62, %42 : vector<8x128xf32>
    %72 = arith.addf %70, %71 : vector<8x128xf32>
    %73 = vector.extract_strided_slice %7 {offsets = [0, 2, 0], sizes = [8, 1, 384], strides = [1, 1, 1]} : vector<8x8x384xf32> to vector<8x1x384xf32>
    %74 = vector.shape_cast %73 : vector<8x1x384xf32> to vector<8x384xf32>
    %cst_19 = arith.constant dense<0.000000e+00> : vector<8x384xf32>
    %75 = tpu.matmul %72, %8, %cst_19 {dimension_numbers = #tpu.dot_dimension_numbers<[1], [0], [0], [1], [0, 0, 1, 1], [], []>} : vector<8x128xf32>, vector<128x384xf32>, vector<8x384xf32> -> vector<8x384xf32>
    %76 = arith.addf %75, %11 : vector<8x384xf32>
    %77 = vector.extract_strided_slice %74 {offsets = [0, 0], sizes = [8, 128], strides = [1, 1]} : vector<8x384xf32> to vector<8x128xf32>
    %78 = vector.extract_strided_slice %76 {offsets = [0, 0], sizes = [8, 128], strides = [1, 1]} : vector<8x384xf32> to vector<8x128xf32>
    %79 = arith.addf %77, %78 : vector<8x128xf32>
    %80 = arith.negf %79 : vector<8x128xf32>
    %81 = math.exp %80 : vector<8x128xf32>
    %cst_20 = arith.constant 1.000000e+00 : f32
    %82 = vector.broadcast %cst_20 : f32 to vector<8x128xf32>
    %83 = arith.addf %82, %81 : vector<8x128xf32>
    %84 = arith.divf %82, %83 : vector<8x128xf32>
    %85 = vector.extract_strided_slice %74 {offsets = [0, 128], sizes = [8, 128], strides = [1, 1]} : vector<8x384xf32> to vector<8x128xf32>
    %86 = vector.extract_strided_slice %76 {offsets = [0, 128], sizes = [8, 128], strides = [1, 1]} : vector<8x384xf32> to vector<8x128xf32>
    %87 = arith.addf %85, %86 : vector<8x128xf32>
    %88 = arith.negf %87 : vector<8x128xf32>
    %89 = math.exp %88 : vector<8x128xf32>
    %cst_21 = arith.constant 1.000000e+00 : f32
    %90 = vector.broadcast %cst_21 : f32 to vector<8x128xf32>
    %91 = arith.addf %90, %89 : vector<8x128xf32>
    %92 = arith.divf %90, %91 : vector<8x128xf32>
    %93 = vector.extract_strided_slice %74 {offsets = [0, 256], sizes = [8, 128], strides = [1, 1]} : vector<8x384xf32> to vector<8x128xf32>
    %94 = vector.extract_strided_slice %76 {offsets = [0, 256], sizes = [8, 128], strides = [1, 1]} : vector<8x384xf32> to vector<8x128xf32>
    %95 = arith.mulf %84, %94 : vector<8x128xf32>
    %96 = arith.addf %93, %95 : vector<8x128xf32>
    %97 = math.tanh %96 : vector<8x128xf32>
    %cst_22 = arith.constant 1.000000e+00 : f32
    %98 = vector.broadcast %cst_22 : f32 to vector<8x128xf32>
    %99 = arith.subf %98, %92 : vector<8x128xf32>
    %100 = arith.mulf %99, %97 : vector<8x128xf32>
    %101 = arith.mulf %92, %72 : vector<8x128xf32>
    %102 = arith.addf %100, %101 : vector<8x128xf32>
    %103 = vector.extract_strided_slice %7 {offsets = [0, 3, 0], sizes = [8, 1, 384], strides = [1, 1, 1]} : vector<8x8x384xf32> to vector<8x1x384xf32>
    %104 = vector.shape_cast %103 : vector<8x1x384xf32> to vector<8x384xf32>
    %cst_23 = arith.constant dense<0.000000e+00> : vector<8x384xf32>
    %105 = tpu.matmul %102, %8, %cst_23 {dimension_numbers = #tpu.dot_dimension_numbers<[1], [0], [0], [1], [0, 0, 1, 1], [], []>} : vector<8x128xf32>, vector<128x384xf32>, vector<8x384xf32> -> vector<8x384xf32>
    %106 = arith.addf %105, %11 : vector<8x384xf32>
    %107 = vector.extract_strided_slice %104 {offsets = [0, 0], sizes = [8, 128], strides = [1, 1]} : vector<8x384xf32> to vector<8x128xf32>
    %108 = vector.extract_strided_slice %106 {offsets = [0, 0], sizes = [8, 128], strides = [1, 1]} : vector<8x384xf32> to vector<8x128xf32>
    %109 = arith.addf %107, %108 : vector<8x128xf32>
    %110 = arith.negf %109 : vector<8x128xf32>
    %111 = math.exp %110 : vector<8x128xf32>
    %cst_24 = arith.constant 1.000000e+00 : f32
    %112 = vector.broadcast %cst_24 : f32 to vector<8x128xf32>
    %113 = arith.addf %112, %111 : vector<8x128xf32>
    %114 = arith.divf %112, %113 : vector<8x128xf32>
    %115 = vector.extract_strided_slice %104 {offsets = [0, 128], sizes = [8, 128], strides = [1, 1]} : vector<8x384xf32> to vector<8x128xf32>
    %116 = vector.extract_strided_slice %106 {offsets = [0, 128], sizes = [8, 128], strides = [1, 1]} : vector<8x384xf32> to vector<8x128xf32>
    %117 = arith.addf %115, %116 : vector<8x128xf32>
    %118 = arith.negf %117 : vector<8x128xf32>
    %119 = math.exp %118 : vector<8x128xf32>
    %cst_25 = arith.constant 1.000000e+00 : f32
    %120 = vector.broadcast %cst_25 : f32 to vector<8x128xf32>
    %121 = arith.addf %120, %119 : vector<8x128xf32>
    %122 = arith.divf %120, %121 : vector<8x128xf32>
    %123 = vector.extract_strided_slice %104 {offsets = [0, 256], sizes = [8, 128], strides = [1, 1]} : vector<8x384xf32> to vector<8x128xf32>
    %124 = vector.extract_strided_slice %106 {offsets = [0, 256], sizes = [8, 128], strides = [1, 1]} : vector<8x384xf32> to vector<8x128xf32>
    %125 = arith.mulf %114, %124 : vector<8x128xf32>
    %126 = arith.addf %123, %125 : vector<8x128xf32>
    %127 = math.tanh %126 : vector<8x128xf32>
    %cst_26 = arith.constant 1.000000e+00 : f32
    %128 = vector.broadcast %cst_26 : f32 to vector<8x128xf32>
    %129 = arith.subf %128, %122 : vector<8x128xf32>
    %130 = arith.mulf %129, %127 : vector<8x128xf32>
    %131 = arith.mulf %122, %102 : vector<8x128xf32>
    %132 = arith.addf %130, %131 : vector<8x128xf32>
    %133 = vector.extract_strided_slice %7 {offsets = [0, 4, 0], sizes = [8, 1, 384], strides = [1, 1, 1]} : vector<8x8x384xf32> to vector<8x1x384xf32>
    %134 = vector.shape_cast %133 : vector<8x1x384xf32> to vector<8x384xf32>
    %cst_27 = arith.constant dense<0.000000e+00> : vector<8x384xf32>
    %135 = tpu.matmul %132, %8, %cst_27 {dimension_numbers = #tpu.dot_dimension_numbers<[1], [0], [0], [1], [0, 0, 1, 1], [], []>} : vector<8x128xf32>, vector<128x384xf32>, vector<8x384xf32> -> vector<8x384xf32>
    %136 = arith.addf %135, %11 : vector<8x384xf32>
    %137 = vector.extract_strided_slice %134 {offsets = [0, 0], sizes = [8, 128], strides = [1, 1]} : vector<8x384xf32> to vector<8x128xf32>
    %138 = vector.extract_strided_slice %136 {offsets = [0, 0], sizes = [8, 128], strides = [1, 1]} : vector<8x384xf32> to vector<8x128xf32>
    %139 = arith.addf %137, %138 : vector<8x128xf32>
    %140 = arith.negf %139 : vector<8x128xf32>
    %141 = math.exp %140 : vector<8x128xf32>
    %cst_28 = arith.constant 1.000000e+00 : f32
    %142 = vector.broadcast %cst_28 : f32 to vector<8x128xf32>
    %143 = arith.addf %142, %141 : vector<8x128xf32>
    %144 = arith.divf %142, %143 : vector<8x128xf32>
    %145 = vector.extract_strided_slice %134 {offsets = [0, 128], sizes = [8, 128], strides = [1, 1]} : vector<8x384xf32> to vector<8x128xf32>
    %146 = vector.extract_strided_slice %136 {offsets = [0, 128], sizes = [8, 128], strides = [1, 1]} : vector<8x384xf32> to vector<8x128xf32>
    %147 = arith.addf %145, %146 : vector<8x128xf32>
    %148 = arith.negf %147 : vector<8x128xf32>
    %149 = math.exp %148 : vector<8x128xf32>
    %cst_29 = arith.constant 1.000000e+00 : f32
    %150 = vector.broadcast %cst_29 : f32 to vector<8x128xf32>
    %151 = arith.addf %150, %149 : vector<8x128xf32>
    %152 = arith.divf %150, %151 : vector<8x128xf32>
    %153 = vector.extract_strided_slice %134 {offsets = [0, 256], sizes = [8, 128], strides = [1, 1]} : vector<8x384xf32> to vector<8x128xf32>
    %154 = vector.extract_strided_slice %136 {offsets = [0, 256], sizes = [8, 128], strides = [1, 1]} : vector<8x384xf32> to vector<8x128xf32>
    %155 = arith.mulf %144, %154 : vector<8x128xf32>
    %156 = arith.addf %153, %155 : vector<8x128xf32>
    %157 = math.tanh %156 : vector<8x128xf32>
    %cst_30 = arith.constant 1.000000e+00 : f32
    %158 = vector.broadcast %cst_30 : f32 to vector<8x128xf32>
    %159 = arith.subf %158, %152 : vector<8x128xf32>
    %160 = arith.mulf %159, %157 : vector<8x128xf32>
    %161 = arith.mulf %152, %132 : vector<8x128xf32>
    %162 = arith.addf %160, %161 : vector<8x128xf32>
    %163 = vector.extract_strided_slice %7 {offsets = [0, 5, 0], sizes = [8, 1, 384], strides = [1, 1, 1]} : vector<8x8x384xf32> to vector<8x1x384xf32>
    %164 = vector.shape_cast %163 : vector<8x1x384xf32> to vector<8x384xf32>
    %cst_31 = arith.constant dense<0.000000e+00> : vector<8x384xf32>
    %165 = tpu.matmul %162, %8, %cst_31 {dimension_numbers = #tpu.dot_dimension_numbers<[1], [0], [0], [1], [0, 0, 1, 1], [], []>} : vector<8x128xf32>, vector<128x384xf32>, vector<8x384xf32> -> vector<8x384xf32>
    %166 = arith.addf %165, %11 : vector<8x384xf32>
    %167 = vector.extract_strided_slice %164 {offsets = [0, 0], sizes = [8, 128], strides = [1, 1]} : vector<8x384xf32> to vector<8x128xf32>
    %168 = vector.extract_strided_slice %166 {offsets = [0, 0], sizes = [8, 128], strides = [1, 1]} : vector<8x384xf32> to vector<8x128xf32>
    %169 = arith.addf %167, %168 : vector<8x128xf32>
    %170 = arith.negf %169 : vector<8x128xf32>
    %171 = math.exp %170 : vector<8x128xf32>
    %cst_32 = arith.constant 1.000000e+00 : f32
    %172 = vector.broadcast %cst_32 : f32 to vector<8x128xf32>
    %173 = arith.addf %172, %171 : vector<8x128xf32>
    %174 = arith.divf %172, %173 : vector<8x128xf32>
    %175 = vector.extract_strided_slice %164 {offsets = [0, 128], sizes = [8, 128], strides = [1, 1]} : vector<8x384xf32> to vector<8x128xf32>
    %176 = vector.extract_strided_slice %166 {offsets = [0, 128], sizes = [8, 128], strides = [1, 1]} : vector<8x384xf32> to vector<8x128xf32>
    %177 = arith.addf %175, %176 : vector<8x128xf32>
    %178 = arith.negf %177 : vector<8x128xf32>
    %179 = math.exp %178 : vector<8x128xf32>
    %cst_33 = arith.constant 1.000000e+00 : f32
    %180 = vector.broadcast %cst_33 : f32 to vector<8x128xf32>
    %181 = arith.addf %180, %179 : vector<8x128xf32>
    %182 = arith.divf %180, %181 : vector<8x128xf32>
    %183 = vector.extract_strided_slice %164 {offsets = [0, 256], sizes = [8, 128], strides = [1, 1]} : vector<8x384xf32> to vector<8x128xf32>
    %184 = vector.extract_strided_slice %166 {offsets = [0, 256], sizes = [8, 128], strides = [1, 1]} : vector<8x384xf32> to vector<8x128xf32>
    %185 = arith.mulf %174, %184 : vector<8x128xf32>
    %186 = arith.addf %183, %185 : vector<8x128xf32>
    %187 = math.tanh %186 : vector<8x128xf32>
    %cst_34 = arith.constant 1.000000e+00 : f32
    %188 = vector.broadcast %cst_34 : f32 to vector<8x128xf32>
    %189 = arith.subf %188, %182 : vector<8x128xf32>
    %190 = arith.mulf %189, %187 : vector<8x128xf32>
    %191 = arith.mulf %182, %162 : vector<8x128xf32>
    %192 = arith.addf %190, %191 : vector<8x128xf32>
    %193 = vector.extract_strided_slice %7 {offsets = [0, 6, 0], sizes = [8, 1, 384], strides = [1, 1, 1]} : vector<8x8x384xf32> to vector<8x1x384xf32>
    %194 = vector.shape_cast %193 : vector<8x1x384xf32> to vector<8x384xf32>
    %cst_35 = arith.constant dense<0.000000e+00> : vector<8x384xf32>
    %195 = tpu.matmul %192, %8, %cst_35 {dimension_numbers = #tpu.dot_dimension_numbers<[1], [0], [0], [1], [0, 0, 1, 1], [], []>} : vector<8x128xf32>, vector<128x384xf32>, vector<8x384xf32> -> vector<8x384xf32>
    %196 = arith.addf %195, %11 : vector<8x384xf32>
    %197 = vector.extract_strided_slice %194 {offsets = [0, 0], sizes = [8, 128], strides = [1, 1]} : vector<8x384xf32> to vector<8x128xf32>
    %198 = vector.extract_strided_slice %196 {offsets = [0, 0], sizes = [8, 128], strides = [1, 1]} : vector<8x384xf32> to vector<8x128xf32>
    %199 = arith.addf %197, %198 : vector<8x128xf32>
    %200 = arith.negf %199 : vector<8x128xf32>
    %201 = math.exp %200 : vector<8x128xf32>
    %cst_36 = arith.constant 1.000000e+00 : f32
    %202 = vector.broadcast %cst_36 : f32 to vector<8x128xf32>
    %203 = arith.addf %202, %201 : vector<8x128xf32>
    %204 = arith.divf %202, %203 : vector<8x128xf32>
    %205 = vector.extract_strided_slice %194 {offsets = [0, 128], sizes = [8, 128], strides = [1, 1]} : vector<8x384xf32> to vector<8x128xf32>
    %206 = vector.extract_strided_slice %196 {offsets = [0, 128], sizes = [8, 128], strides = [1, 1]} : vector<8x384xf32> to vector<8x128xf32>
    %207 = arith.addf %205, %206 : vector<8x128xf32>
    %208 = arith.negf %207 : vector<8x128xf32>
    %209 = math.exp %208 : vector<8x128xf32>
    %cst_37 = arith.constant 1.000000e+00 : f32
    %210 = vector.broadcast %cst_37 : f32 to vector<8x128xf32>
    %211 = arith.addf %210, %209 : vector<8x128xf32>
    %212 = arith.divf %210, %211 : vector<8x128xf32>
    %213 = vector.extract_strided_slice %194 {offsets = [0, 256], sizes = [8, 128], strides = [1, 1]} : vector<8x384xf32> to vector<8x128xf32>
    %214 = vector.extract_strided_slice %196 {offsets = [0, 256], sizes = [8, 128], strides = [1, 1]} : vector<8x384xf32> to vector<8x128xf32>
    %215 = arith.mulf %204, %214 : vector<8x128xf32>
    %216 = arith.addf %213, %215 : vector<8x128xf32>
    %217 = math.tanh %216 : vector<8x128xf32>
    %cst_38 = arith.constant 1.000000e+00 : f32
    %218 = vector.broadcast %cst_38 : f32 to vector<8x128xf32>
    %219 = arith.subf %218, %212 : vector<8x128xf32>
    %220 = arith.mulf %219, %217 : vector<8x128xf32>
    %221 = arith.mulf %212, %192 : vector<8x128xf32>
    %222 = arith.addf %220, %221 : vector<8x128xf32>
    %223 = vector.extract_strided_slice %7 {offsets = [0, 7, 0], sizes = [8, 1, 384], strides = [1, 1, 1]} : vector<8x8x384xf32> to vector<8x1x384xf32>
    %224 = vector.shape_cast %223 : vector<8x1x384xf32> to vector<8x384xf32>
    %cst_39 = arith.constant dense<0.000000e+00> : vector<8x384xf32>
    %225 = tpu.matmul %222, %8, %cst_39 {dimension_numbers = #tpu.dot_dimension_numbers<[1], [0], [0], [1], [0, 0, 1, 1], [], []>} : vector<8x128xf32>, vector<128x384xf32>, vector<8x384xf32> -> vector<8x384xf32>
    %226 = arith.addf %225, %11 : vector<8x384xf32>
    %227 = vector.extract_strided_slice %224 {offsets = [0, 0], sizes = [8, 128], strides = [1, 1]} : vector<8x384xf32> to vector<8x128xf32>
    %228 = vector.extract_strided_slice %226 {offsets = [0, 0], sizes = [8, 128], strides = [1, 1]} : vector<8x384xf32> to vector<8x128xf32>
    %229 = arith.addf %227, %228 : vector<8x128xf32>
    %230 = arith.negf %229 : vector<8x128xf32>
    %231 = math.exp %230 : vector<8x128xf32>
    %cst_40 = arith.constant 1.000000e+00 : f32
    %232 = vector.broadcast %cst_40 : f32 to vector<8x128xf32>
    %233 = arith.addf %232, %231 : vector<8x128xf32>
    %234 = arith.divf %232, %233 : vector<8x128xf32>
    %235 = vector.extract_strided_slice %224 {offsets = [0, 128], sizes = [8, 128], strides = [1, 1]} : vector<8x384xf32> to vector<8x128xf32>
    %236 = vector.extract_strided_slice %226 {offsets = [0, 128], sizes = [8, 128], strides = [1, 1]} : vector<8x384xf32> to vector<8x128xf32>
    %237 = arith.addf %235, %236 : vector<8x128xf32>
    %238 = arith.negf %237 : vector<8x128xf32>
    %239 = math.exp %238 : vector<8x128xf32>
    %cst_41 = arith.constant 1.000000e+00 : f32
    %240 = vector.broadcast %cst_41 : f32 to vector<8x128xf32>
    %241 = arith.addf %240, %239 : vector<8x128xf32>
    %242 = arith.divf %240, %241 : vector<8x128xf32>
    %243 = vector.extract_strided_slice %224 {offsets = [0, 256], sizes = [8, 128], strides = [1, 1]} : vector<8x384xf32> to vector<8x128xf32>
    %244 = vector.extract_strided_slice %226 {offsets = [0, 256], sizes = [8, 128], strides = [1, 1]} : vector<8x384xf32> to vector<8x128xf32>
    %245 = arith.mulf %234, %244 : vector<8x128xf32>
    %246 = arith.addf %243, %245 : vector<8x128xf32>
    %247 = math.tanh %246 : vector<8x128xf32>
    %cst_42 = arith.constant 1.000000e+00 : f32
    %248 = vector.broadcast %cst_42 : f32 to vector<8x128xf32>
    %249 = arith.subf %248, %242 : vector<8x128xf32>
    %250 = arith.mulf %249, %247 : vector<8x128xf32>
    %251 = arith.mulf %242, %222 : vector<8x128xf32>
    %252 = arith.addf %250, %251 : vector<8x128xf32>
    %c0_43 = arith.constant 0 : index
    %c0_44 = arith.constant 0 : index
    %253 = vector.load %arg6[%c0_43, %c0_44] : memref<8x128xf32, #tpu.memory_space<vmem>>, vector<8x128xf32>
    tpu.vector_store %arg6[%c0_43, %c0_44], %252 {strides = array<i32>} : memref<8x128xf32, #tpu.memory_space<vmem>>, vector<8x128xf32>,
    return
  }
  func.func @transform_0(%arg0: i32) -> (i32, i32, i32) {
    %c0_i32 = arith.constant 0 : i32
    %c0_i32_0 = arith.constant 0 : i32
    %c0_i32_1 = arith.constant 0 : i32
    return %arg0, %c0_i32, %c0_i32_0 : i32, i32, i32
  }
  func.func @transform_1(%arg0: i32) -> (i32, i32) {
    %c0_i32 = arith.constant 0 : i32
    %c0_i32_0 = arith.constant 0 : i32
    %c0_i32_1 = arith.constant 0 : i32
    return %c0_i32, %c0_i32_0 : i32, i32
  }
  func.func @transform_2(%arg0: i32) -> (i32, i32) {
    %c0_i32 = arith.constant 0 : i32
    %c0_i32_0 = arith.constant 0 : i32
    %c0_i32_1 = arith.constant 0 : i32
    return %c0_i32, %c0_i32_0 : i32, i32
  }
  func.func @transform_3(%arg0: i32) -> (i32, i32) {
    %c0_i32 = arith.constant 0 : i32
    %c0_i32_0 = arith.constant 0 : i32
    %c0_i32_1 = arith.constant 0 : i32
    return %c0_i32, %c0_i32_0 : i32, i32
  }
  func.func @transform_4(%arg0: i32) -> (i32, i32) {
    %c0_i32 = arith.constant 0 : i32
    %c0_i32_0 = arith.constant 0 : i32
    %c0_i32_1 = arith.constant 0 : i32
    return %c0_i32, %c0_i32_0 : i32, i32
  }
  func.func @transform_5(%arg0: i32) -> (i32, i32) {
    %c0_i32 = arith.constant 0 : i32
    %c0_i32_0 = arith.constant 0 : i32
    return %arg0, %c0_i32 : i32, i32
  }
}

</mosaic_0001>

<llo_original>
// kernel: tpu_custom_call.1
$region0: #{tpu_custom_call.1}
  #allocation0 [shape = 'u32[]', space=smem, size = 0x4, offset = 0x4, fixed_abs, tag = 'smem constant byte address 0x4 - core index']
  #allocation1 [shape = 'u32[144,128]{1,0:T(1,128)}', space=vmem, size = 0x12000, scoped, tag = 'internal scratch']
  %s0 = inlined_call_operand.hbm [shape: f32[8,8,128], index: 0, kind: input, shape index: {}]
  %s1 = inlined_call_operand.hbm [shape: f32[128,384], index: 1, kind: input, shape index: {}]
  %s2 = inlined_call_operand.hbm [shape: f32[128,384], index: 2, kind: input, shape index: {}]
  %s3 = inlined_call_operand.vmem [shape: f32[1,384], index: 3, kind: input, shape index: {}]
  %s4 = inlined_call_operand.vmem [shape: f32[1,384], index: 4, kind: input, shape index: {}]
  %s5 = inlined_call_operand.hbm [shape: f32[8,128], index: 5, kind: output, shape index: {}]
  %s6 = sld [smem:[#allocation0]]
  $region42: #{tpu_custom_call.1} parent=0
    _
  %s8 = ssub.s32 1, %s6
  %s9 = scalar_select 0, %s8, %s6
  $region1: #{tpu_custom_call.1} parent=0
    #allocation2 [shape = 'u8[32768]{0}', space=vmem, size = 0x8000, scoped, tag = 'input window, operand 0, single buffered']
    #allocation3 [shape = 's32[1]{0}', space=sflag, size = 0x4, scoped, tag = 'scoped memory for tpu_custom_call.1']
    #allocation4 [shape = 's32[1]{0}', space=sflag, size = 0x4, scoped, tag = 'scoped memory for tpu_custom_call.1']
    #allocation5 [shape = 'u8[196608]{0}', space=vmem, size = 0x30000, scoped, tag = 'input window, operand 1, single buffered']
    #allocation6 [shape = 's32[1]{0}', space=sflag, size = 0x4, scoped, tag = 'scoped memory for tpu_custom_call.1']
    #allocation7 [shape = 'u8[196608]{0}', space=vmem, size = 0x30000, scoped, tag = 'input window, operand 2, single buffered']
    #allocation8 [shape = 'u8[4096]{0}', space=vmem, size = 0x1000, scoped, tag = 'output window, operand 0, single buffered']
    %10 = vsyncpa [#allocation3], 0
    %11 = vsyncpa [#allocation6], 0
    %12 = vsyncpa [#allocation4], 0
    // Predicated region
    $region2: #{tpu_custom_call.1} parent=1 // pred_check
      _
    $region3: #{tpu_custom_call.1} parent=1 // pred_check_branch
      %14 = sbr.rel (0) target = $region5
    $region4: #{tpu_custom_call.1} parent=1 // pred_region
      %s16 = ssub.s32 1024, 1024
      %17 = vsyncadd [#allocation3], %s16
      %s18 = sshll.u32 [#allocation2], 4
      %s19 = int_to_ptr.vmem [resolvable:$true] %s18
      %24 = dma.hbm_to_vmem [thread:$0]  %s0, 1024, %s19, [#allocation3], 128, 128, 8
    $region5: #{tpu_custom_call.1} parent=1 // pred_fallthru
      _
    // Predicated region
    $region6: #{tpu_custom_call.1} parent=1 // pred_check
      _
    $region7: #{tpu_custom_call.1} parent=1 // pred_check_branch
      %26 = sbr.rel (0) target = $region9
    $region8: #{tpu_custom_call.1} parent=1 // pred_region
      %s28 = ssub.s32 6144, 6144
      %29 = vsyncadd [#allocation6], %s28
      %s30 = sshll.u32 [#allocation5], 4
      %s31 = int_to_ptr.vmem [resolvable:$true] %s30
      %36 = dma.hbm_to_vmem [thread:$0]  %s1, 6144, %s31, [#allocation6], 384, 384, 24
    $region9: #{tpu_custom_call.1} parent=1 // pred_fallthru
      _
    // Predicated region
    $region10: #{tpu_custom_call.1} parent=1 // pred_check
      _
    $region11: #{tpu_custom_call.1} parent=1 // pred_check_branch
      %38 = sbr.rel (0) target = $region13
    $region12: #{tpu_custom_call.1} parent=1 // pred_region
      %s40 = ssub.s32 6144, 6144
      %41 = vsyncadd [#allocation6], %s40
      %s42 = sshll.u32 [#allocation7], 4
      %s43 = int_to_ptr.vmem [resolvable:$true] %s42
      %48 = dma.hbm_to_vmem [thread:$0]  %s2, 6144, %s43, [#allocation6], 384, 384, 24
    $region13: #{tpu_custom_call.1} parent=1 // pred_fallthru
      _
    // Predicated region
    $region14: #{tpu_custom_call.1} parent=1 // pred_check
      _
    $region15: #{tpu_custom_call.1} parent=1 // pred_check_branch
      %50 = sbr.rel (0) target = $region17
    $region16: #{tpu_custom_call.1} parent=1 // pred_region
      _
    $region17: #{tpu_custom_call.1} parent=1 // pred_fallthru
      _
    // Predicated region
    $region18: #{tpu_custom_call.1} parent=1 // pred_check
      _
    $region19: #{tpu_custom_call.1} parent=1 // pred_check_branch
      %52 = sbr.rel (0) target = $region21
    $region20: #{tpu_custom_call.1} parent=1 // pred_region
      _
    $region21: #{tpu_custom_call.1} parent=1 // pred_fallthru
      _
    // Predicated region
    $region22: #{tpu_custom_call.1} parent=1 // pred_check
      _
    $region23: #{tpu_custom_call.1} parent=1 // pred_check_branch
      %54 = sbr.rel (0) target = $region25
    $region24: #{tpu_custom_call.1} parent=1 // pred_region
      %55 = dma.done [#allocation3], 1024
    $region25: #{tpu_custom_call.1} parent=1 // pred_fallthru
      _
    // Predicated region
    $region26: #{tpu_custom_call.1} parent=1 // pred_check
      _
    $region27: #{tpu_custom_call.1} parent=1 // pred_check_branch
      %57 = sbr.rel (0) target = $region29
    $region28: #{tpu_custom_call.1} parent=1 // pred_region
      %58 = dma.done [#allocation6], 6144
    $region29: #{tpu_custom_call.1} parent=1 // pred_fallthru
      _
    // Predicated region
    $region30: #{tpu_custom_call.1} parent=1 // pred_check
      _
    $region31: #{tpu_custom_call.1} parent=1 // pred_check_branch
      %60 = sbr.rel (0) target = $region33
    $region32: #{tpu_custom_call.1} parent=1 // pred_region
      %61 = dma.done [#allocation6], 6144
    $region33: #{tpu_custom_call.1} parent=1 // pred_fallthru
      _
    %v62 = vld [vmem:[#allocation2] sm:$0xff]
    %v63 = vld [vmem:[#allocation2 + $0x8] sm:$0xff]
    %v64 = vld [vmem:[#allocation2 + $0x10] sm:$0xff]
    %v65 = vld [vmem:[#allocation2 + $0x18] sm:$0xff]
    %v66 = vld [vmem:[#allocation2 + $0x20] sm:$0xff]
    %v67 = vld [vmem:[#allocation2 + $0x28] sm:$0xff]
    %v68 = vld [vmem:[#allocation2 + $0x30] sm:$0xff]
    %v69 = vld [vmem:[#allocation2 + $0x38] sm:$0xff]
    %v70 = vld [vmem:[#allocation5] sm:$0xff]
    %v71 = vld [vmem:[#allocation5 + $0x8] sm:$0xff]
    %v72 = vld [vmem:[#allocation5 + $0x10] sm:$0xff]
    %v73 = vld [vmem:[#allocation5 + $0x18] sm:$0xff]
    %v74 = vld [vmem:[#allocation5 + $0x20] sm:$0xff]
    %v75 = vld [vmem:[#allocation5 + $0x28] sm:$0xff]
    %v76 = vld [vmem:[#allocation5 + $0x30] sm:$0xff]
    %v77 = vld [vmem:[#allocation5 + $0x38] sm:$0xff]
    %v78 = vld [vmem:[#allocation5 + $0x40] sm:$0xff]
    %v79 = vld [vmem:[#allocation5 + $0x48] sm:$0xff]
    %v80 = vld [vmem:[#allocation5 + $0x50] sm:$0xff]
    %v81 = vld [vmem:[#allocation5 + $0x58] sm:$0xff]
    %v82 = vld [vmem:[#allocation5 + $0x60] sm:$0xff]
    %v83 = vld [vmem:[#allocation5 + $0x68] sm:$0xff]
    %v84 = vld [vmem:[#allocation5 + $0x70] sm:$0xff]
    %v85 = vld [vmem:[#allocation5 + $0x78] sm:$0xff]
    %v86 = vld [vmem:[#allocation5 + $0x80] sm:$0xff]
    %v87 = vld [vmem:[#allocation5 + $0x88] sm:$0xff]
    %v88 = vld [vmem:[#allocation5 + $0x90] sm:$0xff]
    %v89 = vld [vmem:[#allocation5 + $0x98] sm:$0xff]
    %v90 = vld [vmem:[#allocation5 + $0xa0] sm:$0xff]
    %v91 = vld [vmem:[#allocation5 + $0xa8] sm:$0xff]
    %v92 = vld [vmem:[#allocation5 + $0xb0] sm:$0xff]
    %v93 = vld [vmem:[#allocation5 + $0xb8] sm:$0xff]
    %v94 = vld [vmem:[#allocation5 + $0xc0] sm:$0xff]
    %v95 = vld [vmem:[#allocation5 + $0xc8] sm:$0xff]
    %v96 = vld [vmem:[#allocation5 + $0xd0] sm:$0xff]
    %v97 = vld [vmem:[#allocation5 + $0xd8] sm:$0xff]
    %v98 = vld [vmem:[#allocation5 + $0xe0] sm:$0xff]
    %v99 = vld [vmem:[#allocation5 + $0xe8] sm:$0xff]
    %v100 = vld [vmem:[#allocation5 + $0xf0] sm:$0xff]
    %v101 = vld [vmem:[#allocation5 + $0xf8] sm:$0xff]
    %v102 = vld [vmem:[#allocation5 + $0x100] sm:$0xff]
    %v103 = vld [vmem:[#allocation5 + $0x108] sm:$0xff]
    %v104 = vld [vmem:[#allocation5 + $0x110] sm:$0xff]
    %v105 = vld [vmem:[#allocation5 + $0x118] sm:$0xff]
    %v106 = vld [vmem:[#allocation5 + $0x120] sm:$0xff]
    %v107 = vld [vmem:[#allocation5 + $0x128] sm:$0xff]
    %v108 = vld [vmem:[#allocation5 + $0x130] sm:$0xff]
    %v109 = vld [vmem:[#allocation5 + $0x138] sm:$0xff]
    %v110 = vld [vmem:[#allocation5 + $0x140] sm:$0xff]
    %v111 = vld [vmem:[#allocation5 + $0x148] sm:$0xff]
    %v112 = vld [vmem:[#allocation5 + $0x150] sm:$0xff]
    %v113 = vld [vmem:[#allocation5 + $0x158] sm:$0xff]
    %v114 = vld [vmem:[#allocation5 + $0x160] sm:$0xff]
    %v115 = vld [vmem:[#allocation5 + $0x168] sm:$0xff]
    %v116 = vld [vmem:[#allocation5 + $0x170] sm:$0xff]
    %v117 = vld [vmem:[#allocation5 + $0x178] sm:$0xff]
    %v118 = vld [vmem:[%s3] sm:$0x7]
    %v120 = vlaneseq
    %v121 = vshrl.u32 %v120, 7
    %v122 = vsub.s32 0, %v121
    %v123 = vrot.slane %v118, %v122
    %v124 = vlaneseq
    %v125 = vshrl.u32 %v124, 7
    %v126 = vsub.s32 1, %v125
    %v127 = vrot.slane %v118, %v126
    %v128 = vlaneseq
    %v129 = vshrl.u32 %v128, 7
    %v130 = vsub.s32 2, %v129
    %v131 = vrot.slane %v118, %v130
    %135 = vmatprep.subr.mxu0 %v71
    %136 = vmatpush1.msra.mxu0 %v70
    %137 = vmatprep.subr.mxu0 %v74
    %138 = vmatpush1.msra.mxu0 %v73
    %139 = vmatprep.subr.mxu0 %v77
    %140 = vmatpush1.msra.mxu0 %v76
    %141 = vmatprep.subr.mxu0 %v80
    %142 = vmatpush1.msra.mxu0 %v79
    %143 = vmatprep.subr.mxu0 %v83
    %144 = vmatpush1.msra.mxu0 %v82
    %145 = vmatprep.subr.mxu0 %v86
    %146 = vmatpush1.msra.mxu0 %v85
    %147 = vmatprep.subr.mxu0 %v89
    %148 = vmatpush1.msra.mxu0 %v88
    %149 = vmatprep.subr.mxu0 %v92
    %150 = vmatpush1.msra.mxu0 %v91
    %151 = vmatprep.subr.mxu0 %v95
    %152 = vmatpush1.msra.mxu0 %v94
    %153 = vmatprep.subr.mxu0 %v98
    %154 = vmatpush1.msra.mxu0 %v97
    %155 = vmatprep.subr.mxu0 %v101
    %156 = vmatpush1.msra.mxu0 %v100
    %157 = vmatprep.subr.mxu0 %v104
    %158 = vmatpush1.msra.mxu0 %v103
    %159 = vmatprep.subr.mxu0 %v107
    %160 = vmatpush1.msra.mxu0 %v106
    %161 = vmatprep.subr.mxu0 %v110
    %162 = vmatpush1.msra.mxu0 %v109
    %163 = vmatprep.subr.mxu0 %v113
    %164 = vmatpush1.msra.mxu0 %v112
    %165 = vmatprep.subr.mxu0 %v116
    %166 = vmatpush1.msra.mxu0 %v115
    %167 = vmatprep.subr.mxu0 0.0
    %168 = vmatpush1.msra.mxu0 0.0
    %169 = vmatprep.subr.mxu0 0.0
    %170 = vmatpush1.msra.mxu0 0.0
    %171 = vmatprep.subr.mxu0 0.0
    %172 = vmatpush1.msra.mxu0 0.0
    %173 = vmatprep.subr.mxu0 0.0
    %174 = vmatpush1.msra.mxu0 0.0
    %175 = vmatprep.subr.mxu0 0.0
    %176 = vmatpush1.msra.mxu0 0.0
    %177 = vmatprep.subr.mxu0 0.0
    %178 = vmatpush1.msra.mxu0 0.0
    %179 = vmatprep.subr.mxu0 0.0
    %180 = vmatpush1.msra.mxu0 0.0
    %181 = vmatprep.subr.mxu0 0.0
    %182 = vmatpush1.msra.mxu0 0.0
    %183 = vmatprep.subr.mxu0 0.0
    %184 = vmatpush1.msra.mxu0 0.0
    %185 = vmatprep.subr.mxu0 0.0
    %186 = vmatpush1.msra.mxu0 0.0
    %187 = vmatprep.subr.mxu0 0.0
    %188 = vmatpush1.msra.mxu0 0.0
    %189 = vmatprep.subr.mxu0 0.0
    %190 = vmatpush1.msra.mxu0 0.0
    %191 = vmatprep.subr.mxu0 0.0
    %192 = vmatpush1.msra.mxu0 0.0
    %193 = vmatprep.subr.mxu0 0.0
    %194 = vmatpush1.msra.mxu0 0.0
    %195 = vmatprep.subr.mxu0 0.0
    %196 = vmatpush1.msra.mxu0 0.0
    %197 = vmatprep.subr.mxu0 0.0
    %198 = vmatpush1.msra.mxu0 0.0
    %199 = vmatprep.mubr.f32.mxu0 0.0
    %200 = vmatmul.mubr.f32.gmra.mrb[0].mxu0 %v62
    %v201 = vpop.f32.mrb[0].mxu0
    %v202 = vadd.f32 %v123, %v201
    %v203 = vpop.f32.mrb[0].mxu0
    %v204 = vadd.f32 %v127, %v203
    %205 = vmatprep.mubr.f32.mxu0 0.0
    %206 = vmatmul.mubr.f32.gmra.mrb[0].mxu0 %v63
    %v207 = vpop.f32.mrb[0].mxu0
    %v208 = vadd.f32 %v123, %v207
    %v209 = vpop.f32.mrb[0].mxu0
    %v210 = vadd.f32 %v127, %v209
    %211 = vmatprep.mubr.f32.mxu0 0.0
    %212 = vmatmul.mubr.f32.gmra.mrb[0].mxu0 %v64
    %v213 = vpop.f32.mrb[0].mxu0
    %v214 = vadd.f32 %v123, %v213
    %v215 = vpop.f32.mrb[0].mxu0
    %v216 = vadd.f32 %v127, %v215
    %217 = vmatprep.mubr.f32.mxu0 0.0
    %218 = vmatmul.mubr.f32.gmra.mrb[0].mxu0 %v65
    %v219 = vpop.f32.mrb[0].mxu0
    %v220 = vadd.f32 %v123, %v219
    %v221 = vpop.f32.mrb[0].mxu0
    %v222 = vadd.f32 %v127, %v221
    %223 = vmatprep.mubr.f32.mxu0 0.0
    %224 = vmatmul.mubr.f32.gmra.mrb[0].mxu0 %v66
    %v225 = vpop.f32.mrb[0].mxu0
    %v226 = vadd.f32 %v123, %v225
    %v227 = vpop.f32.mrb[0].mxu0
    %v228 = vadd.f32 %v127, %v227
    %229 = vmatprep.mubr.f32.mxu0 0.0
    %230 = vmatmul.mubr.f32.gmra.mrb[0].mxu0 %v67
    %v231 = vpop.f32.mrb[0].mxu0
    %v232 = vadd.f32 %v123, %v231
    %v233 = vpop.f32.mrb[0].mxu0
    %v234 = vadd.f32 %v127, %v233
    %235 = vmatprep.mubr.f32.mxu0 0.0
    %236 = vmatmul.mubr.f32.gmra.mrb[0].mxu0 %v68
    %v237 = vpop.f32.mrb[0].mxu0
    %v238 = vadd.f32 %v123, %v237
    %v239 = vpop.f32.mrb[0].mxu0
    %v240 = vadd.f32 %v127, %v239
    %241 = vmatprep.mubr.f32.mxu0 0.0
    %242 = vmatmul.mubr.f32.gmra.mrb[0].mxu0 %v69
    %v243 = vpop.f32.mrb[0].mxu0
    %v244 = vadd.f32 %v123, %v243
    %v245 = vpop.f32.mrb[0].mxu0
    %v246 = vadd.f32 %v127, %v245
    %247 = vdwg.mxu0
    %248 = vmatprep.subr.mxu0 0.0
    %249 = vmatpush1.msra.mxu0 %v72
    %250 = vmatprep.subr.mxu0 0.0
    %251 = vmatpush1.msra.mxu0 %v75
    %252 = vmatprep.subr.mxu0 0.0
    %253 = vmatpush1.msra.mxu0 %v78
    %254 = vmatprep.subr.mxu0 0.0
    %255 = vmatpush1.msra.mxu0 %v81
    %256 = vmatprep.subr.mxu0 0.0
    %257 = vmatpush1.msra.mxu0 %v84
    %258 = vmatprep.subr.mxu0 0.0
    %259 = vmatpush1.msra.mxu0 %v87
    %260 = vmatprep.subr.mxu0 0.0
    %261 = vmatpush1.msra.mxu0 %v90
    %262 = vmatprep.subr.mxu0 0.0
    %263 = vmatpush1.msra.mxu0 %v93
    %264 = vmatprep.subr.mxu0 0.0
    %265 = vmatpush1.msra.mxu0 %v96
    %266 = vmatprep.subr.mxu0 0.0
    %267 = vmatpush1.msra.mxu0 %v99
    %268 = vmatprep.subr.mxu0 0.0
    %269 = vmatpush1.msra.mxu0 %v102
    %270 = vmatprep.subr.mxu0 0.0
    %271 = vmatpush1.msra.mxu0 %v105
    %272 = vmatprep.subr.mxu0 0.0
    %273 = vmatpush1.msra.mxu0 %v108
    %274 = vmatprep.subr.mxu0 0.0
    %275 = vmatpush1.msra.mxu0 %v111
    %276 = vmatprep.subr.mxu0 0.0
    %277 = vmatpush1.msra.mxu0 %v114
    %278 = vmatprep.subr.mxu0 0.0
    %279 = vmatpush1.msra.mxu0 %v117
    %280 = vmatprep.subr.mxu0 0.0
    %281 = vmatpush1.msra.mxu0 0.0
    %282 = vmatprep.subr.mxu0 0.0
    %283 = vmatpush1.msra.mxu0 0.0
    %284 = vmatprep.subr.mxu0 0.0
    %285 = vmatpush1.msra.mxu0 0.0
    %286 = vmatprep.subr.mxu0 0.0
    %287 = vmatpush1.msra.mxu0 0.0
    %288 = vmatprep.subr.mxu0 0.0
    %289 = vmatpush1.msra.mxu0 0.0
    %290 = vmatprep.subr.mxu0 0.0
    %291 = vmatpush1.msra.mxu0 0.0
    %292 = vmatprep.subr.mxu0 0.0
    %293 = vmatpush1.msra.mxu0 0.0
    %294 = vmatprep.subr.mxu0 0.0
    %295 = vmatpush1.msra.mxu0 0.0
    %296 = vmatprep.subr.mxu0 0.0
    %297 = vmatpush1.msra.mxu0 0.0
    %298 = vmatprep.subr.mxu0 0.0
    %299 = vmatpush1.msra.mxu0 0.0
    %300 = vmatprep.subr.mxu0 0.0
    %301 = vmatpush1.msra.mxu0 0.0
    %302 = vmatprep.subr.mxu0 0.0
    %303 = vmatpush1.msra.mxu0 0.0
    %304 = vmatprep.subr.mxu0 0.0
    %305 = vmatpush1.msra.mxu0 0.0
    %306 = vmatprep.subr.mxu0 0.0
    %307 = vmatpush1.msra.mxu0 0.0
    %308 = vmatprep.subr.mxu0 0.0
    %309 = vmatpush1.msra.mxu0 0.0
    %310 = vmatprep.subr.mxu0 0.0
    %311 = vmatpush1.msra.mxu0 0.0
    %312 = vmatprep.mubr.f32.mxu0 0.0
    %313 = vmatmul.mubr.f32.gmra.mrb[0].mxu0 %v62
    %v314 = vpop.f32.mrb[0].mxu0
    %v315 = vadd.f32 %v131, %v314
    %v316 = vpop.f32.mrb[0].mxu0
    %317 = vmatprep.mubr.f32.mxu0 0.0
    %318 = vmatmul.mubr.f32.gmra.mrb[0].mxu0 %v63
    %v319 = vpop.f32.mrb[0].mxu0
    %v320 = vadd.f32 %v131, %v319
    %v321 = vpop.f32.mrb[0].mxu0
    %322 = vmatprep.mubr.f32.mxu0 0.0
    %323 = vmatmul.mubr.f32.gmra.mrb[0].mxu0 %v64
    %v324 = vpop.f32.mrb[0].mxu0
    %v325 = vadd.f32 %v131, %v324
    %v326 = vpop.f32.mrb[0].mxu0
    %327 = vmatprep.mubr.f32.mxu0 0.0
    %328 = vmatmul.mubr.f32.gmra.mrb[0].mxu0 %v65
    %v329 = vpop.f32.mrb[0].mxu0
    %v330 = vadd.f32 %v131, %v329
    %v331 = vpop.f32.mrb[0].mxu0
    %332 = vmatprep.mubr.f32.mxu0 0.0
    %333 = vmatmul.mubr.f32.gmra.mrb[0].mxu0 %v66
    %v334 = vpop.f32.mrb[0].mxu0
    %v335 = vadd.f32 %v131, %v334
    %v336 = vpop.f32.mrb[0].mxu0
    %337 = vmatprep.mubr.f32.mxu0 0.0
    %338 = vmatmul.mubr.f32.gmra.mrb[0].mxu0 %v67
    %v339 = vpop.f32.mrb[0].mxu0
    %v340 = vadd.f32 %v131, %v339
    %v341 = vpop.f32.mrb[0].mxu0
    %342 = vmatprep.mubr.f32.mxu0 0.0
    %343 = vmatmul.mubr.f32.gmra.mrb[0].mxu0 %v68
    %v344 = vpop.f32.mrb[0].mxu0
    %v345 = vadd.f32 %v131, %v344
    %v346 = vpop.f32.mrb[0].mxu0
    %347 = vmatprep.mubr.f32.mxu0 0.0
    %348 = vmatmul.mubr.f32.gmra.mrb[0].mxu0 %v69
    %v349 = vpop.f32.mrb[0].mxu0
    %v350 = vadd.f32 %v131, %v349
    %v351 = vpop.f32.mrb[0].mxu0
    %352 = vdwg.mxu0
    %v353 = vld [vmem:[#allocation7] sm:$0xff]
    %v354 = vld [vmem:[#allocation7 + $0x8] sm:$0xff]
    %v355 = vld [vmem:[#allocation7 + $0x10] sm:$0xff]
    %v356 = vld [vmem:[#allocation7 + $0x18] sm:$0xff]
    %v357 = vld [vmem:[#allocation7 + $0x20] sm:$0xff]
    %v358 = vld [vmem:[#allocation7 + $0x28] sm:$0xff]
    %v359 = vld [vmem:[#allocation7 + $0x30] sm:$0xff]
    %v360 = vld [vmem:[#allocation7 + $0x38] sm:$0xff]
    %v361 = vld [vmem:[#allocation7 + $0x40] sm:$0xff]
    %v362 = vld [vmem:[#allocation7 + $0x48] sm:$0xff]
    %v363 = vld [vmem:[#allocation7 + $0x50] sm:$0xff]
    %v364 = vld [vmem:[#allocation7 + $0x58] sm:$0xff]
    %v365 = vld [vmem:[#allocation7 + $0x60] sm:$0xff]
    %v366 = vld [vmem:[#allocation7 + $0x68] sm:$0xff]
    %v367 = vld [vmem:[#allocation7 + $0x70] sm:$0xff]
    %v368 = vld [vmem:[#allocation7 + $0x78] sm:$0xff]
    %v369 = vld [vmem:[#allocation7 + $0x80] sm:$0xff]
    %v370 = vld [vmem:[#allocation7 + $0x88] sm:$0xff]
    %v371 = vld [vmem:[#allocation7 + $0x90] sm:$0xff]
    %v372 = vld [vmem:[#allocation7 + $0x98] sm:$0xff]
    %v373 = vld [vmem:[#allocation7 + $0xa0] sm:$0xff]
    %v374 = vld [vmem:[#allocation7 + $0xa8] sm:$0xff]
    %v375 = vld [vmem:[#allocation7 + $0xb0] sm:$0xff]
    %v376 = vld [vmem:[#allocation7 + $0xb8] sm:$0xff]
    %v377 = vld [vmem:[#allocation7 + $0xc0] sm:$0xff]
    %v378 = vld [vmem:[#allocation7 + $0xc8] sm:$0xff]
    %v379 = vld [vmem:[#allocation7 + $0xd0] sm:$0xff]
    %v380 = vld [vmem:[#allocation7 + $0xd8] sm:$0xff]
    %v381 = vld [vmem:[#allocation7 + $0xe0] sm:$0xff]
    %v382 = vld [vmem:[#allocation7 + $0xe8] sm:$0xff]
    %v383 = vld [vmem:[#allocation7 + $0xf0] sm:$0xff]
    %v384 = vld [vmem:[#allocation7 + $0xf8] sm:$0xff]
    %v385 = vld [vmem:[#allocation7 + $0x100] sm:$0xff]
    %v386 = vld [vmem:[#allocation7 + $0x108] sm:$0xff]
    %v387 = vld [vmem:[#allocation7 + $0x110] sm:$0xff]
    %v388 = vld [vmem:[#allocation7 + $0x118] sm:$0xff]
    %v389 = vld [vmem:[#allocation7 + $0x120] sm:$0xff]
    %v390 = vld [vmem:[#allocation7 + $0x128] sm:$0xff]
    %v391 = vld [vmem:[#allocation7 + $0x130] sm:$0xff]
    %v392 = vld [vmem:[#allocation7 + $0x138] sm:$0xff]
    %v393 = vld [vmem:[#allocation7 + $0x140] sm:$0xff]
    %v394 = vld [vmem:[#allocation7 + $0x148] sm:$0xff]
    %v395 = vld [vmem:[#allocation7 + $0x150] sm:$0xff]
    %v396 = vld [vmem:[#allocation7 + $0x158] sm:$0xff]
    %v397 = vld [vmem:[#allocation7 + $0x160] sm:$0xff]
    %v398 = vld [vmem:[#allocation7 + $0x168] sm:$0xff]
    %v399 = vld [vmem:[#allocation7 + $0x170] sm:$0xff]
    %v400 = vld [vmem:[#allocation7 + $0x178] sm:$0xff]
    %v401 = vld [vmem:[%s4] sm:$0x7]
    %v403 = vlaneseq
    %v404 = vshrl.u32 %v403, 7
    %v405 = vsub.s32 0, %v404
    %v406 = vrot.slane %v401, %v405
    %v407 = vlaneseq
    %v408 = vshrl.u32 %v407, 7
    %v409 = vsub.s32 1, %v408
    %v410 = vrot.slane %v401, %v409
    %v411 = vlaneseq
    %v412 = vshrl.u32 %v411, 7
    %v413 = vsub.s32 2, %v412
    %v414 = vrot.slane %v401, %v413
    %418 = vmatprep.subr.mxu0 %v354
    %419 = vmatpush1.msra.mxu0 %v353
    %420 = vmatprep.subr.mxu0 %v357
    %421 = vmatpush1.msra.mxu0 %v356
    %422 = vmatprep.subr.mxu0 %v360
    %423 = vmatpush1.msra.mxu0 %v359
    %424 = vmatprep.subr.mxu0 %v363
    %425 = vmatpush1.msra.mxu0 %v362
    %426 = vmatprep.subr.mxu0 %v366
    %427 = vmatpush1.msra.mxu0 %v365
    %428 = vmatprep.subr.mxu0 %v369
    %429 = vmatpush1.msra.mxu0 %v368
    %430 = vmatprep.subr.mxu0 %v372
    %431 = vmatpush1.msra.mxu0 %v371
    %432 = vmatprep.subr.mxu0 %v375
    %433 = vmatpush1.msra.mxu0 %v374
    %434 = vmatprep.subr.mxu0 %v378
    %435 = vmatpush1.msra.mxu0 %v377
    %436 = vmatprep.subr.mxu0 %v381
    %437 = vmatpush1.msra.mxu0 %v380
    %438 = vmatprep.subr.mxu0 %v384
    %439 = vmatpush1.msra.mxu0 %v383
    %440 = vmatprep.subr.mxu0 %v387
    %441 = vmatpush1.msra.mxu0 %v386
    %442 = vmatprep.subr.mxu0 %v390
    %443 = vmatpush1.msra.mxu0 %v389
    %444 = vmatprep.subr.mxu0 %v393
    %445 = vmatpush1.msra.mxu0 %v392
    %446 = vmatprep.subr.mxu0 %v396
    %447 = vmatpush1.msra.mxu0 %v395
    %448 = vmatprep.subr.mxu0 %v399
    %449 = vmatpush1.msra.mxu0 %v398
    %450 = vmatprep.subr.mxu0 0.0
    %451 = vmatpush1.msra.mxu0 0.0
    %452 = vmatprep.subr.mxu0 0.0
    %453 = vmatpush1.msra.mxu0 0.0
    %454 = vmatprep.subr.mxu0 0.0
    %455 = vmatpush1.msra.mxu0 0.0
    %456 = vmatprep.subr.mxu0 0.0
    %457 = vmatpush1.msra.mxu0 0.0
    %458 = vmatprep.subr.mxu0 0.0
    %459 = vmatpush1.msra.mxu0 0.0
    %460 = vmatprep.subr.mxu0 0.0
    %461 = vmatpush1.msra.mxu0 0.0
    %462 = vmatprep.subr.mxu0 0.0
    %463 = vmatpush1.msra.mxu0 0.0
    %464 = vmatprep.subr.mxu0 0.0
    %465 = vmatpush1.msra.mxu0 0.0
    %466 = vmatprep.subr.mxu0 0.0
    %467 = vmatpush1.msra.mxu0 0.0
    %468 = vmatprep.subr.mxu0 0.0
    %469 = vmatpush1.msra.mxu0 0.0
    %470 = vmatprep.subr.mxu0 0.0
    %471 = vmatpush1.msra.mxu0 0.0
    %472 = vmatprep.subr.mxu0 0.0
    %473 = vmatpush1.msra.mxu0 0.0
    %474 = vmatprep.subr.mxu0 0.0
    %475 = vmatpush1.msra.mxu0 0.0
    %476 = vmatprep.subr.mxu0 0.0
    %477 = vmatpush1.msra.mxu0 0.0
    %478 = vmatprep.subr.mxu0 0.0
    %479 = vmatpush1.msra.mxu0 0.0
    %480 = vmatprep.subr.mxu0 0.0
    %481 = vmatpush1.msra.mxu0 0.0
    %482 = vmatprep.mubr.f32.mxu0 0.0
    %483 = vmatmul.mubr.f32.gmra.mrb[0].mxu0 0.0
    %v484 = vpop.f32.mrb[0].mxu0
    %v485 = vadd.f32 %v406, %v484
    %v486 = vpop.f32.mrb[0].mxu0
    %v487 = vadd.f32 %v410, %v486
    %488 = vdwg.mxu0
    %489 = vmatprep.subr.mxu0 0.0
    %490 = vmatpush1.msra.mxu0 %v355
    %491 = vmatprep.subr.mxu0 0.0
    %492 = vmatpush1.msra.mxu0 %v358
    %493 = vmatprep.subr.mxu0 0.0
    %494 = vmatpush1.msra.mxu0 %v361
    %495 = vmatprep.subr.mxu0 0.0
    %496 = vmatpush1.msra.mxu0 %v364
    %497 = vmatprep.subr.mxu0 0.0
    %498 = vmatpush1.msra.mxu0 %v367
    %499 = vmatprep.subr.mxu0 0.0
    %500 = vmatpush1.msra.mxu0 %v370
    %501 = vmatprep.subr.mxu0 0.0
    %502 = vmatpush1.msra.mxu0 %v373
    %503 = vmatprep.subr.mxu0 0.0
    %504 = vmatpush1.msra.mxu0 %v376
    %505 = vmatprep.subr.mxu0 0.0
    %506 = vmatpush1.msra.mxu0 %v379
    %507 = vmatprep.subr.mxu0 0.0
    %508 = vmatpush1.msra.mxu0 %v382
    %509 = vmatprep.subr.mxu0 0.0
    %510 = vmatpush1.msra.mxu0 %v385
    %511 = vmatprep.subr.mxu0 0.0
    %512 = vmatpush1.msra.mxu0 %v388
    %513 = vmatprep.subr.mxu0 0.0
    %514 = vmatpush1.msra.mxu0 %v391
    %515 = vmatprep.subr.mxu0 0.0
    %516 = vmatpush1.msra.mxu0 %v394
    %517 = vmatprep.subr.mxu0 0.0
    %518 = vmatpush1.msra.mxu0 %v397
    %519 = vmatprep.subr.mxu0 0.0
    %520 = vmatpush1.msra.mxu0 %v400
    %521 = vmatprep.subr.mxu0 0.0
    %522 = vmatpush1.msra.mxu0 0.0
    %523 = vmatprep.subr.mxu0 0.0
    %524 = vmatpush1.msra.mxu0 0.0
    %525 = vmatprep.subr.mxu0 0.0
    %526 = vmatpush1.msra.mxu0 0.0
    %527 = vmatprep.subr.mxu0 0.0
    %528 = vmatpush1.msra.mxu0 0.0
    %529 = vmatprep.subr.mxu0 0.0
    %530 = vmatpush1.msra.mxu0 0.0
    %531 = vmatprep.subr.mxu0 0.0
    %532 = vmatpush1.msra.mxu0 0.0
    %533 = vmatprep.subr.mxu0 0.0
    %534 = vmatpush1.msra.mxu0 0.0
    %535 = vmatprep.subr.mxu0 0.0
    %536 = vmatpush1.msra.mxu0 0.0
    %537 = vmatprep.subr.mxu0 0.0
    %538 = vmatpush1.msra.mxu0 0.0
    %539 = vmatprep.subr.mxu0 0.0
    %540 = vmatpush1.msra.mxu0 0.0
    %541 = vmatprep.subr.mxu0 0.0
    %542 = vmatpush1.msra.mxu0 0.0
    %543 = vmatprep.subr.mxu0 0.0
    %544 = vmatpush1.msra.mxu0 0.0
    %545 = vmatprep.subr.mxu0 0.0
    %546 = vmatpush1.msra.mxu0 0.0
    %547 = vmatprep.subr.mxu0 0.0
    %548 = vmatpush1.msra.mxu0 0.0
    %549 = vmatprep.subr.mxu0 0.0
    %550 = vmatpush1.msra.mxu0 0.0
    %551 = vmatprep.subr.mxu0 0.0
    %552 = vmatpush1.msra.mxu0 0.0
    %553 = vmatprep.mubr.f32.mxu0 0.0
    %554 = vmatmul.mubr.f32.gmra.mrb[0].mxu0 0.0
    %v555 = vpop.f32.mrb[0].mxu0
    %v556 = vadd.f32 %v414, %v555
    %v557 = vpop.f32.mrb[0].mxu0
    %558 = vdwg.mxu0
    %v560 = vrot.slane %v485, 1
    %v561 = vrot.slane %v485, 2
    %v562 = vrot.slane %v485, 3
    %v563 = vrot.slane %v485, 4
    %v564 = vrot.slane %v485, 5
    %v565 = vrot.slane %v485, 6
    %v566 = vrot.slane %v485, 7
    %v575 = vadd.f32 %v202, %v485
    %v576 = vadd.f32 %v208, %v560
    %v577 = vadd.f32 %v214, %v561
    %v578 = vadd.f32 %v220, %v562
    %v579 = vadd.f32 %v226, %v563
    %v580 = vadd.f32 %v232, %v564
    %v581 = vadd.f32 %v238, %v565
    %v582 = vadd.f32 %v244, %v566
    %v583 = vxor.u32 %v575, 2147483648
    %v584 = vxor.u32 %v576, 2147483648
    %v585 = vxor.u32 %v577, 2147483648
    %v586 = vxor.u32 %v578, 2147483648
    %v587 = vxor.u32 %v579, 2147483648
    %v588 = vxor.u32 %v580, 2147483648
    %v589 = vxor.u32 %v581, 2147483648
    %v590 = vxor.u32 %v582, 2147483648
    %v591 = vmul.f32 %v583, 1.442695
    %v592 = vpow.pop %v591
    %v593 = vmul.f32 %v584, 1.442695
    %v594 = vpow.pop %v593
    %v595 = vmul.f32 %v585, 1.442695
    %v596 = vpow.pop %v595
    %v597 = vmul.f32 %v586, 1.442695
    %v598 = vpow.pop %v597
    %v599 = vmul.f32 %v587, 1.442695
    %v600 = vpow.pop %v599
    %v601 = vmul.f32 %v588, 1.442695
    %v602 = vpow.pop %v601
    %v603 = vmul.f32 %v589, 1.442695
    %v604 = vpow.pop %v603
    %v605 = vmul.f32 %v590, 1.442695
    %v606 = vpow.pop %v605
    %v607 = vadd.f32 %v592, 1.0
    %v608 = vadd.f32 %v594, 1.0
    %v609 = vadd.f32 %v596, 1.0
    %v610 = vadd.f32 %v598, 1.0
    %v611 = vadd.f32 %v600, 1.0
    %v612 = vadd.f32 %v602, 1.0
    %v613 = vadd.f32 %v604, 1.0
    %v614 = vadd.f32 %v606, 1.0
    %v615 = vrcp.pop %v607
    %v616 = vmul.f32 1.0, %v615
    %v617 = vrcp.pop %v608
    %v618 = vmul.f32 1.0, %v617
    %v619 = vrcp.pop %v609
    %v620 = vmul.f32 1.0, %v619
    %v621 = vrcp.pop %v610
    %v622 = vmul.f32 1.0, %v621
    %v623 = vrcp.pop %v611
    %v624 = vmul.f32 1.0, %v623
    %v625 = vrcp.pop %v612
    %v626 = vmul.f32 1.0, %v625
    %v627 = vrcp.pop %v613
    %v628 = vmul.f32 1.0, %v627
    %v629 = vrcp.pop %v614
    %v630 = vmul.f32 1.0, %v629
    %v632 = vrot.slane %v487, 1
    %v633 = vrot.slane %v487, 2
    %v634 = vrot.slane %v487, 3
    %v635 = vrot.slane %v487, 4
    %v636 = vrot.slane %v487, 5
    %v637 = vrot.slane %v487, 6
    %v638 = vrot.slane %v487, 7
    %v647 = vadd.f32 %v204, %v487
    %v648 = vadd.f32 %v210, %v632
    %v649 = vadd.f32 %v216, %v633
    %v650 = vadd.f32 %v222, %v634
    %v651 = vadd.f32 %v228, %v635
    %v652 = vadd.f32 %v234, %v636
    %v653 = vadd.f32 %v240, %v637
    %v654 = vadd.f32 %v246, %v638
    %v655 = vxor.u32 %v647, 2147483648
    %v656 = vxor.u32 %v648, 2147483648
    %v657 = vxor.u32 %v649, 2147483648
    %v658 = vxor.u32 %v650, 2147483648
    %v659 = vxor.u32 %v651, 2147483648
    %v660 = vxor.u32 %v652, 2147483648
    %v661 = vxor.u32 %v653, 2147483648
    %v662 = vxor.u32 %v654, 2147483648
    %v663 = vmul.f32 %v655, 1.442695
    %v664 = vpow.pop %v663
    %v665 = vmul.f32 %v656, 1.442695
    %v666 = vpow.pop %v665
    %v667 = vmul.f32 %v657, 1.442695
    %v668 = vpow.pop %v667
    %v669 = vmul.f32 %v658, 1.442695
    %v670 = vpow.pop %v669
    %v671 = vmul.f32 %v659, 1.442695
    %v672 = vpow.pop %v671
    %v673 = vmul.f32 %v660, 1.442695
    %v674 = vpow.pop %v673
    %v675 = vmul.f32 %v661, 1.442695
    %v676 = vpow.pop %v675
    %v677 = vmul.f32 %v662, 1.442695
    %v678 = vpow.pop %v677
    %v679 = vadd.f32 %v664, 1.0
    %v680 = vadd.f32 %v666, 1.0
    %v681 = vadd.f32 %v668, 1.0
    %v682 = vadd.f32 %v670, 1.0
    %v683 = vadd.f32 %v672, 1.0
    %v684 = vadd.f32 %v674, 1.0
    %v685 = vadd.f32 %v676, 1.0
    %v686 = vadd.f32 %v678, 1.0
    %v687 = vrcp.pop %v679
    %v688 = vmul.f32 1.0, %v687
    %v689 = vrcp.pop %v680
    %v690 = vmul.f32 1.0, %v689
    %v691 = vrcp.pop %v681
    %v692 = vmul.f32 1.0, %v691
    %v693 = vrcp.pop %v682
    %v694 = vmul.f32 1.0, %v693
    %v695 = vrcp.pop %v683
    %v696 = vmul.f32 1.0, %v695
    %v697 = vrcp.pop %v684
    %v698 = vmul.f32 1.0, %v697
    %v699 = vrcp.pop %v685
    %v700 = vmul.f32 1.0, %v699
    %v701 = vrcp.pop %v686
    %v702 = vmul.f32 1.0, %v701
    %v704 = vrot.slane %v556, 1
    %v705 = vrot.slane %v556, 2
    %v706 = vrot.slane %v556, 3
    %v707 = vrot.slane %v556, 4
    %v708 = vrot.slane %v556, 5
    %v709 = vrot.slane %v556, 6
    %v710 = vrot.slane %v556, 7
    %v719 = vmul.f32 %v616, %v556
    %v720 = vmul.f32 %v618, %v704
    %v721 = vmul.f32 %v620, %v705
    %v722 = vmul.f32 %v622, %v706
    %v723 = vmul.f32 %v624, %v707
    %v724 = vmul.f32 %v626, %v708
    %v725 = vmul.f32 %v628, %v709
    %v726 = vmul.f32 %v630, %v710
    %v727 = vadd.f32 %v315, %v719
    %v728 = vadd.f32 %v320, %v720
    %v729 = vadd.f32 %v325, %v721
    %v730 = vadd.f32 %v330, %v722
    %v731 = vadd.f32 %v335, %v723
    %v732 = vadd.f32 %v340, %v724
    %v733 = vadd.f32 %v345, %v725
    %v734 = vadd.f32 %v350, %v726
    %v735 = vtanh.pop %v727
    %v736 = vtanh.pop %v728
    %v737 = vtanh.pop %v729
    %v738 = vtanh.pop %v730
    %v739 = vtanh.pop %v731
    %v740 = vtanh.pop %v732
    %v741 = vtanh.pop %v733
    %v742 = vtanh.pop %v734
    %v743 = vsub.f32 1.0, %v688
    %v744 = vsub.f32 1.0, %v690
    %v745 = vsub.f32 1.0, %v692
    %v746 = vsub.f32 1.0, %v694
    %v747 = vsub.f32 1.0, %v696
    %v748 = vsub.f32 1.0, %v698
    %v749 = vsub.f32 1.0, %v700
    %v750 = vsub.f32 1.0, %v702
    %v751 = vmul.f32 %v743, %v735
    %v752 = vmul.f32 %v744, %v736
    %v753 = vmul.f32 %v745, %v737
    %v754 = vmul.f32 %v746, %v738
    %v755 = vmul.f32 %v747, %v739
    %v756 = vmul.f32 %v748, %v740
    %v757 = vmul.f32 %v749, %v741
    %v758 = vmul.f32 %v750, %v742
    %v759 = vmul.f32 %v688, 0.0
    %v760 = vmul.f32 %v690, 0.0
    %v761 = vmul.f32 %v692, 0.0
    %v762 = vmul.f32 %v694, 0.0
    %v763 = vmul.f32 %v696, 0.0
    %v764 = vmul.f32 %v698, 0.0
    %v765 = vmul.f32 %v700, 0.0
    %v766 = vmul.f32 %v702, 0.0
    %v767 = vadd.f32 %v751, %v759
    %v768 = vadd.f32 %v752, %v760
    %v769 = vadd.f32 %v753, %v761
    %v770 = vadd.f32 %v754, %v762
    %v771 = vadd.f32 %v755, %v763
    %v772 = vadd.f32 %v756, %v764
    %v773 = vadd.f32 %v757, %v765
    %v774 = vadd.f32 %v758, %v766
    %v783 = vrot.slane %v768, 7
    %vm784 = vcmask 1041409
    %v785 = vsel %vm784, %v783, %v767
    %v786 = vrot.slane %v769, 6
    %vm787 = vcmask 1042434
    %v788 = vsel %vm787, %v786, %v785
    %v789 = vrot.slane %v770, 5
    %vm790 = vcmask 1043459
    %v791 = vsel %vm790, %v789, %v788
    %v792 = vrot.slane %v771, 4
    %vm793 = vcmask 1044484
    %v794 = vsel %vm793, %v792, %v791
    %v795 = vrot.slane %v772, 3
    %vm796 = vcmask 1045509
    %v797 = vsel %vm796, %v795, %v794
    %v798 = vrot.slane %v773, 2
    %vm799 = vcmask 1046534
    %v800 = vsel %vm799, %v798, %v797
    %v801 = vrot.slane %v774, 1
    %vm802 = vcmask 1047559
    %v803 = vsel %vm802, %v801, %v800
    %805 = vmatprep.subr.mxu0 %v354
    %806 = vmatpush1.msra.mxu0 %v353
    %807 = vmatprep.subr.mxu0 %v357
    %808 = vmatpush1.msra.mxu0 %v356
    %809 = vmatprep.subr.mxu0 %v360
    %810 = vmatpush1.msra.mxu0 %v359
    %811 = vmatprep.subr.mxu0 %v363
    %812 = vmatpush1.msra.mxu0 %v362
    %813 = vmatprep.subr.mxu0 %v366
    %814 = vmatpush1.msra.mxu0 %v365
    %815 = vmatprep.subr.mxu0 %v369
    %816 = vmatpush1.msra.mxu0 %v368
    %817 = vmatprep.subr.mxu0 %v372
    %818 = vmatpush1.msra.mxu0 %v371
    %819 = vmatprep.subr.mxu0 %v375
    %820 = vmatpush1.msra.mxu0 %v374
    %821 = vmatprep.subr.mxu0 %v378
    %822 = vmatpush1.msra.mxu0 %v377
    %823 = vmatprep.subr.mxu0 %v381
    %824 = vmatpush1.msra.mxu0 %v380
    %825 = vmatprep.subr.mxu0 %v384
    %826 = vmatpush1.msra.mxu0 %v383
    %827 = vmatprep.subr.mxu0 %v387
    %828 = vmatpush1.msra.mxu0 %v386
    %829 = vmatprep.subr.mxu0 %v390
    %830 = vmatpush1.msra.mxu0 %v389
    %831 = vmatprep.subr.mxu0 %v393
    %832 = vmatpush1.msra.mxu0 %v392
    %833 = vmatprep.subr.mxu0 %v396
    %834 = vmatpush1.msra.mxu0 %v395
    %835 = vmatprep.subr.mxu0 %v399
    %836 = vmatpush1.msra.mxu0 %v398
    %837 = vmatprep.subr.mxu0 0.0
    %838 = vmatpush1.msra.mxu0 0.0
    %839 = vmatprep.subr.mxu0 0.0
    %840 = vmatpush1.msra.mxu0 0.0
    %841 = vmatprep.subr.mxu0 0.0
    %842 = vmatpush1.msra.mxu0 0.0
    %843 = vmatprep.subr.mxu0 0.0
    %844 = vmatpush1.msra.mxu0 0.0
    %845 = vmatprep.subr.mxu0 0.0
    %846 = vmatpush1.msra.mxu0 0.0
    %847 = vmatprep.subr.mxu0 0.0
    %848 = vmatpush1.msra.mxu0 0.0
    %849 = vmatprep.subr.mxu0 0.0
    %850 = vmatpush1.msra.mxu0 0.0
    %851 = vmatprep.subr.mxu0 0.0
    %852 = vmatpush1.msra.mxu0 0.0
    %853 = vmatprep.subr.mxu0 0.0
    %854 = vmatpush1.msra.mxu0 0.0
    %855 = vmatprep.subr.mxu0 0.0
    %856 = vmatpush1.msra.mxu0 0.0
    %857 = vmatprep.subr.mxu0 0.0
    %858 = vmatpush1.msra.mxu0 0.0
    %859 = vmatprep.subr.mxu0 0.0
    %860 = vmatpush1.msra.mxu0 0.0
    %861 = vmatprep.subr.mxu0 0.0
    %862 = vmatpush1.msra.mxu0 0.0
    %863 = vmatprep.subr.mxu0 0.0
    %864 = vmatpush1.msra.mxu0 0.0
    %865 = vmatprep.subr.mxu0 0.0
    %866 = vmatpush1.msra.mxu0 0.0
    %867 = vmatprep.subr.mxu0 0.0
    %868 = vmatpush1.msra.mxu0 0.0
    %869 = vmatprep.mubr.f32.mxu0 0.0
    %870 = vmatmul.mubr.f32.gmra.mrb[0].mxu0 %v803
    %v871 = vpop.f32.mrb[0].mxu0
    %v872 = vadd.f32 %v406, %v871
    %v873 = vpop.f32.mrb[0].mxu0
    %v874 = vadd.f32 %v410, %v873
    %875 = vdwg.mxu0
    %876 = vmatprep.subr.mxu0 0.0
    %877 = vmatpush1.msra.mxu0 %v355
    %878 = vmatprep.subr.mxu0 0.0
    %879 = vmatpush1.msra.mxu0 %v358
    %880 = vmatprep.subr.mxu0 0.0
    %881 = vmatpush1.msra.mxu0 %v361
    %882 = vmatprep.subr.mxu0 0.0
    %883 = vmatpush1.msra.mxu0 %v364
    %884 = vmatprep.subr.mxu0 0.0
    %885 = vmatpush1.msra.mxu0 %v367
    %886 = vmatprep.subr.mxu0 0.0
    %887 = vmatpush1.msra.mxu0 %v370
    %888 = vmatprep.subr.mxu0 0.0
    %889 = vmatpush1.msra.mxu0 %v373
    %890 = vmatprep.subr.mxu0 0.0
    %891 = vmatpush1.msra.mxu0 %v376
    %892 = vmatprep.subr.mxu0 0.0
    %893 = vmatpush1.msra.mxu0 %v379
    %894 = vmatprep.subr.mxu0 0.0
    %895 = vmatpush1.msra.mxu0 %v382
    %896 = vmatprep.subr.mxu0 0.0
    %897 = vmatpush1.msra.mxu0 %v385
    %898 = vmatprep.subr.mxu0 0.0
    %899 = vmatpush1.msra.mxu0 %v388
    %900 = vmatprep.subr.mxu0 0.0
    %901 = vmatpush1.msra.mxu0 %v391
    %902 = vmatprep.subr.mxu0 0.0
    %903 = vmatpush1.msra.mxu0 %v394
    %904 = vmatprep.subr.mxu0 0.0
    %905 = vmatpush1.msra.mxu0 %v397
    %906 = vmatprep.subr.mxu0 0.0
    %907 = vmatpush1.msra.mxu0 %v400
    %908 = vmatprep.subr.mxu0 0.0
    %909 = vmatpush1.msra.mxu0 0.0
    %910 = vmatprep.subr.mxu0 0.0
    %911 = vmatpush1.msra.mxu0 0.0
    %912 = vmatprep.subr.mxu0 0.0
    %913 = vmatpush1.msra.mxu0 0.0
    %914 = vmatprep.subr.mxu0 0.0
    %915 = vmatpush1.msra.mxu0 0.0
    %916 = vmatprep.subr.mxu0 0.0
    %917 = vmatpush1.msra.mxu0 0.0
    %918 = vmatprep.subr.mxu0 0.0
    %919 = vmatpush1.msra.mxu0 0.0
    %920 = vmatprep.subr.mxu0 0.0
    %921 = vmatpush1.msra.mxu0 0.0
    %922 = vmatprep.subr.mxu0 0.0
    %923 = vmatpush1.msra.mxu0 0.0
    %924 = vmatprep.subr.mxu0 0.0
    %925 = vmatpush1.msra.mxu0 0.0
    %926 = vmatprep.subr.mxu0 0.0
    %927 = vmatpush1.msra.mxu0 0.0
    %928 = vmatprep.subr.mxu0 0.0
    %929 = vmatpush1.msra.mxu0 0.0
    %930 = vmatprep.subr.mxu0 0.0
    %931 = vmatpush1.msra.mxu0 0.0
    %932 = vmatprep.subr.mxu0 0.0
    %933 = vmatpush1.msra.mxu0 0.0
    %934 = vmatprep.subr.mxu0 0.0
    %935 = vmatpush1.msra.mxu0 0.0
    %936 = vmatprep.subr.mxu0 0.0
    %937 = vmatpush1.msra.mxu0 0.0
    %938 = vmatprep.subr.mxu0 0.0
    %939 = vmatpush1.msra.mxu0 0.0
    %940 = vmatprep.mubr.f32.mxu0 0.0
    %941 = vmatmul.mubr.f32.gmra.mrb[0].mxu0 %v803
    %v942 = vpop.f32.mrb[0].mxu0
    %v943 = vadd.f32 %v414, %v942
    %v944 = vpop.f32.mrb[0].mxu0
    %945 = vdwg.mxu0
    %v947 = vrot.slane %v872, 7
    %v948 = vrot.slane %v872, 1
    %v949 = vrot.slane %v872, 2
    %v950 = vrot.slane %v872, 3
    %v951 = vrot.slane %v872, 4
    %v952 = vrot.slane %v872, 5
    %v953 = vrot.slane %v872, 6
    %v962 = vadd.f32 %v202, %v947
    %v963 = vadd.f32 %v208, %v872
    %v964 = vadd.f32 %v214, %v948
    %v965 = vadd.f32 %v220, %v949
    %v966 = vadd.f32 %v226, %v950
    %v967 = vadd.f32 %v232, %v951
    %v968 = vadd.f32 %v238, %v952
    %v969 = vadd.f32 %v244, %v953
    %v970 = vxor.u32 %v962, 2147483648
    %v971 = vxor.u32 %v963, 2147483648
    %v972 = vxor.u32 %v964, 2147483648
    %v973 = vxor.u32 %v965, 2147483648
    %v974 = vxor.u32 %v966, 2147483648
    %v975 = vxor.u32 %v967, 2147483648
    %v976 = vxor.u32 %v968, 2147483648
    %v977 = vxor.u32 %v969, 2147483648
    %v978 = vmul.f32 %v970, 1.442695
    %v979 = vpow.pop %v978
    %v980 = vmul.f32 %v971, 1.442695
    %v981 = vpow.pop %v980
    %v982 = vmul.f32 %v972, 1.442695
    %v983 = vpow.pop %v982
    %v984 = vmul.f32 %v973, 1.442695
    %v985 = vpow.pop %v984
    %v986 = vmul.f32 %v974, 1.442695
    %v987 = vpow.pop %v986
    %v988 = vmul.f32 %v975, 1.442695
    %v989 = vpow.pop %v988
    %v990 = vmul.f32 %v976, 1.442695
    %v991 = vpow.pop %v990
    %v992 = vmul.f32 %v977, 1.442695
    %v993 = vpow.pop %v992
    %v994 = vadd.f32 %v979, 1.0
    %v995 = vadd.f32 %v981, 1.0
    %v996 = vadd.f32 %v983, 1.0
    %v997 = vadd.f32 %v985, 1.0
    %v998 = vadd.f32 %v987, 1.0
    %v999 = vadd.f32 %v989, 1.0
    %v1000 = vadd.f32 %v991, 1.0
    %v1001 = vadd.f32 %v993, 1.0
    %v1002 = vrcp.pop %v994
    %v1003 = vmul.f32 1.0, %v1002
    %v1004 = vrcp.pop %v995
    %v1005 = vmul.f32 1.0, %v1004
    %v1006 = vrcp.pop %v996
    %v1007 = vmul.f32 1.0, %v1006
    %v1008 = vrcp.pop %v997
    %v1009 = vmul.f32 1.0, %v1008
    %v1010 = vrcp.pop %v998
    %v1011 = vmul.f32 1.0, %v1010
    %v1012 = vrcp.pop %v999
    %v1013 = vmul.f32 1.0, %v1012
    %v1014 = vrcp.pop %v1000
    %v1015 = vmul.f32 1.0, %v1014
    %v1016 = vrcp.pop %v1001
    %v1017 = vmul.f32 1.0, %v1016
    %v1019 = vrot.slane %v874, 7
    %v1020 = vrot.slane %v874, 1
    %v1021 = vrot.slane %v874, 2
    %v1022 = vrot.slane %v874, 3
    %v1023 = vrot.slane %v874, 4
    %v1024 = vrot.slane %v874, 5
    %v1025 = vrot.slane %v874, 6
    %v1034 = vadd.f32 %v204, %v1019
    %v1035 = vadd.f32 %v210, %v874
    %v1036 = vadd.f32 %v216, %v1020
    %v1037 = vadd.f32 %v222, %v1021
    %v1038 = vadd.f32 %v228, %v1022
    %v1039 = vadd.f32 %v234, %v1023
    %v1040 = vadd.f32 %v240, %v1024
    %v1041 = vadd.f32 %v246, %v1025
    %v1042 = vxor.u32 %v1034, 2147483648
    %v1043 = vxor.u32 %v1035, 2147483648
    %v1044 = vxor.u32 %v1036, 2147483648
    %v1045 = vxor.u32 %v1037, 2147483648
    %v1046 = vxor.u32 %v1038, 2147483648
    %v1047 = vxor.u32 %v1039, 2147483648
    %v1048 = vxor.u32 %v1040, 2147483648
    %v1049 = vxor.u32 %v1041, 2147483648
    %v1050 = vmul.f32 %v1042, 1.442695
    %v1051 = vpow.pop %v1050
    %v1052 = vmul.f32 %v1043, 1.442695
    %v1053 = vpow.pop %v1052
    %v1054 = vmul.f32 %v1044, 1.442695
    %v1055 = vpow.pop %v1054
    %v1056 = vmul.f32 %v1045, 1.442695
    %v1057 = vpow.pop %v1056
    %v1058 = vmul.f32 %v1046, 1.442695
    %v1059 = vpow.pop %v1058
    %v1060 = vmul.f32 %v1047, 1.442695
    %v1061 = vpow.pop %v1060
    %v1062 = vmul.f32 %v1048, 1.442695
    %v1063 = vpow.pop %v1062
    %v1064 = vmul.f32 %v1049, 1.442695
    %v1065 = vpow.pop %v1064
    %v1066 = vadd.f32 %v1051, 1.0
    %v1067 = vadd.f32 %v1053, 1.0
    %v1068 = vadd.f32 %v1055, 1.0
    %v1069 = vadd.f32 %v1057, 1.0
    %v1070 = vadd.f32 %v1059, 1.0
    %v1071 = vadd.f32 %v1061, 1.0
    %v1072 = vadd.f32 %v1063, 1.0
    %v1073 = vadd.f32 %v1065, 1.0
    %v1074 = vrcp.pop %v1066
    %v1075 = vmul.f32 1.0, %v1074
    %v1076 = vrcp.pop %v1067
    %v1077 = vmul.f32 1.0, %v1076
    %v1078 = vrcp.pop %v1068
    %v1079 = vmul.f32 1.0, %v1078
    %v1080 = vrcp.pop %v1069
    %v1081 = vmul.f32 1.0, %v1080
    %v1082 = vrcp.pop %v1070
    %v1083 = vmul.f32 1.0, %v1082
    %v1084 = vrcp.pop %v1071
    %v1085 = vmul.f32 1.0, %v1084
    %v1086 = vrcp.pop %v1072
    %v1087 = vmul.f32 1.0, %v1086
    %v1088 = vrcp.pop %v1073
    %v1089 = vmul.f32 1.0, %v1088
    %v1091 = vrot.slane %v943, 7
    %v1092 = vrot.slane %v943, 1
    %v1093 = vrot.slane %v943, 2
    %v1094 = vrot.slane %v943, 3
    %v1095 = vrot.slane %v943, 4
    %v1096 = vrot.slane %v943, 5
    %v1097 = vrot.slane %v943, 6
    %v1106 = vmul.f32 %v1003, %v1091
    %v1107 = vmul.f32 %v1005, %v943
    %v1108 = vmul.f32 %v1007, %v1092
    %v1109 = vmul.f32 %v1009, %v1093
    %v1110 = vmul.f32 %v1011, %v1094
    %v1111 = vmul.f32 %v1013, %v1095
    %v1112 = vmul.f32 %v1015, %v1096
    %v1113 = vmul.f32 %v1017, %v1097
    %v1114 = vadd.f32 %v315, %v1106
    %v1115 = vadd.f32 %v320, %v1107
    %v1116 = vadd.f32 %v325, %v1108
    %v1117 = vadd.f32 %v330, %v1109
    %v1118 = vadd.f32 %v335, %v1110
    %v1119 = vadd.f32 %v340, %v1111
    %v1120 = vadd.f32 %v345, %v1112
    %v1121 = vadd.f32 %v350, %v1113
    %v1122 = vtanh.pop %v1114
    %v1123 = vtanh.pop %v1115
    %v1124 = vtanh.pop %v1116
    %v1125 = vtanh.pop %v1117
    %v1126 = vtanh.pop %v1118
    %v1127 = vtanh.pop %v1119
    %v1128 = vtanh.pop %v1120
    %v1129 = vtanh.pop %v1121
    %v1130 = vsub.f32 1.0, %v1075
    %v1131 = vsub.f32 1.0, %v1077
    %v1132 = vsub.f32 1.0, %v1079
    %v1133 = vsub.f32 1.0, %v1081
    %v1134 = vsub.f32 1.0, %v1083
    %v1135 = vsub.f32 1.0, %v1085
    %v1136 = vsub.f32 1.0, %v1087
    %v1137 = vsub.f32 1.0, %v1089
    %v1138 = vmul.f32 %v1130, %v1122
    %v1139 = vmul.f32 %v1131, %v1123
    %v1140 = vmul.f32 %v1132, %v1124
    %v1141 = vmul.f32 %v1133, %v1125
    %v1142 = vmul.f32 %v1134, %v1126
    %v1143 = vmul.f32 %v1135, %v1127
    %v1144 = vmul.f32 %v1136, %v1128
    %v1145 = vmul.f32 %v1137, %v1129
    %v1146 = vrot.slane %v767, 7
    %v1147 = vrot.slane %v769, 7
    %v1148 = vrot.slane %v770, 7
    %v1149 = vrot.slane %v771, 7
    %v1150 = vrot.slane %v772, 7
    %v1151 = vrot.slane %v773, 7
    %v1152 = vrot.slane %v774, 7
    %v1161 = vmul.f32 %v1075, %v1146
    %v1162 = vmul.f32 %v1077, %v783
    %v1163 = vmul.f32 %v1079, %v1147
    %v1164 = vmul.f32 %v1081, %v1148
    %v1165 = vmul.f32 %v1083, %v1149
    %v1166 = vmul.f32 %v1085, %v1150
    %v1167 = vmul.f32 %v1087, %v1151
    %v1168 = vmul.f32 %v1089, %v1152
    %v1169 = vadd.f32 %v1138, %v1161
    %v1170 = vadd.f32 %v1139, %v1162
    %v1171 = vadd.f32 %v1140, %v1163
    %v1172 = vadd.f32 %v1141, %v1164
    %v1173 = vadd.f32 %v1142, %v1165
    %v1174 = vadd.f32 %v1143, %v1166
    %v1175 = vadd.f32 %v1144, %v1167
    %v1176 = vadd.f32 %v1145, %v1168
    %v1185 = vrot.slane %v1169, 1
    %v1186 = vsel %vm784, %v1170, %v1185
    %v1187 = vrot.slane %v1171, 7
    %v1188 = vsel %vm787, %v1187, %v1186
    %v1189 = vrot.slane %v1172, 6
    %v1190 = vsel %vm790, %v1189, %v1188
    %v1191 = vrot.slane %v1173, 5
    %v1192 = vsel %vm793, %v1191, %v1190
    %v1193 = vrot.slane %v1174, 4
    %v1194 = vsel %vm796, %v1193, %v1192
    %v1195 = vrot.slane %v1175, 3
    %v1196 = vsel %vm799, %v1195, %v1194
    %v1197 = vrot.slane %v1176, 2
    %v1198 = vsel %vm802, %v1197, %v1196
    %1200 = vmatprep.subr.mxu0 %v354
    %1201 = vmatpush1.msra.mxu0 %v353
    %1202 = vmatprep.subr.mxu0 %v357
    %1203 = vmatpush1.msra.mxu0 %v356
    %1204 = vmatprep.subr.mxu0 %v360
    %1205 = vmatpush1.msra.mxu0 %v359
    %1206 = vmatprep.subr.mxu0 %v363
    %1207 = vmatpush1.msra.mxu0 %v362
    %1208 = vmatprep.subr.mxu0 %v366
    %1209 = vmatpush1.msra.mxu0 %v365
    %1210 = vmatprep.subr.mxu0 %v369
    %1211 = vmatpush1.msra.mxu0 %v368
    %1212 = vmatprep.subr.mxu0 %v372
    %1213 = vmatpush1.msra.mxu0 %v371
    %1214 = vmatprep.subr.mxu0 %v375
    %1215 = vmatpush1.msra.mxu0 %v374
    %1216 = vmatprep.subr.mxu0 %v378
    %1217 = vmatpush1.msra.mxu0 %v377
    %1218 = vmatprep.subr.mxu0 %v381
    %1219 = vmatpush1.msra.mxu0 %v380
    %1220 = vmatprep.subr.mxu0 %v384
    %1221 = vmatpush1.msra.mxu0 %v383
    %1222 = vmatprep.subr.mxu0 %v387
    %1223 = vmatpush1.msra.mxu0 %v386
    %1224 = vmatprep.subr.mxu0 %v390
    %1225 = vmatpush1.msra.mxu0 %v389
    %1226 = vmatprep.subr.mxu0 %v393
    %1227 = vmatpush1.msra.mxu0 %v392
    %1228 = vmatprep.subr.mxu0 %v396
    %1229 = vmatpush1.msra.mxu0 %v395
    %1230 = vmatprep.subr.mxu0 %v399
    %1231 = vmatpush1.msra.mxu0 %v398
    %1232 = vmatprep.subr.mxu0 0.0
    %1233 = vmatpush1.msra.mxu0 0.0
    %1234 = vmatprep.subr.mxu0 0.0
    %1235 = vmatpush1.msra.mxu0 0.0
    %1236 = vmatprep.subr.mxu0 0.0
    %1237 = vmatpush1.msra.mxu0 0.0
    %1238 = vmatprep.subr.mxu0 0.0
    %1239 = vmatpush1.msra.mxu0 0.0
    %1240 = vmatprep.subr.mxu0 0.0
    %1241 = vmatpush1.msra.mxu0 0.0
    %1242 = vmatprep.subr.mxu0 0.0
    %1243 = vmatpush1.msra.mxu0 0.0
    %1244 = vmatprep.subr.mxu0 0.0
    %1245 = vmatpush1.msra.mxu0 0.0
    %1246 = vmatprep.subr.mxu0 0.0
    %1247 = vmatpush1.msra.mxu0 0.0
    %1248 = vmatprep.subr.mxu0 0.0
    %1249 = vmatpush1.msra.mxu0 0.0
    %1250 = vmatprep.subr.mxu0 0.0
    %1251 = vmatpush1.msra.mxu0 0.0
    %1252 = vmatprep.subr.mxu0 0.0
    %1253 = vmatpush1.msra.mxu0 0.0
    %1254 = vmatprep.subr.mxu0 0.0
    %1255 = vmatpush1.msra.mxu0 0.0
    %1256 = vmatprep.subr.mxu0 0.0
    %1257 = vmatpush1.msra.mxu0 0.0
    %1258 = vmatprep.subr.mxu0 0.0
    %1259 = vmatpush1.msra.mxu0 0.0
    %1260 = vmatprep.subr.mxu0 0.0
    %1261 = vmatpush1.msra.mxu0 0.0
    %1262 = vmatprep.subr.mxu0 0.0
    %1263 = vmatpush1.msra.mxu0 0.0
    %1264 = vmatprep.mubr.f32.mxu0 0.0
    %1265 = vmatmul.mubr.f32.gmra.mrb[0].mxu0 %v1198
    %v1266 = vpop.f32.mrb[0].mxu0
    %v1267 = vadd.f32 %v406, %v1266
    %v1268 = vpop.f32.mrb[0].mxu0
    %v1269 = vadd.f32 %v410, %v1268
    %1270 = vdwg.mxu0
    %1271 = vmatprep.subr.mxu0 0.0
    %1272 = vmatpush1.msra.mxu0 %v355
    %1273 = vmatprep.subr.mxu0 0.0
    %1274 = vmatpush1.msra.mxu0 %v358
    %1275 = vmatprep.subr.mxu0 0.0
    %1276 = vmatpush1.msra.mxu0 %v361
    %1277 = vmatprep.subr.mxu0 0.0
    %1278 = vmatpush1.msra.mxu0 %v364
    %1279 = vmatprep.subr.mxu0 0.0
    %1280 = vmatpush1.msra.mxu0 %v367
    %1281 = vmatprep.subr.mxu0 0.0
    %1282 = vmatpush1.msra.mxu0 %v370
    %1283 = vmatprep.subr.mxu0 0.0
    %1284 = vmatpush1.msra.mxu0 %v373
    %1285 = vmatprep.subr.mxu0 0.0
    %1286 = vmatpush1.msra.mxu0 %v376
    %1287 = vmatprep.subr.mxu0 0.0
    %1288 = vmatpush1.msra.mxu0 %v379
    %1289 = vmatprep.subr.mxu0 0.0
    %1290 = vmatpush1.msra.mxu0 %v382
    %1291 = vmatprep.subr.mxu0 0.0
    %1292 = vmatpush1.msra.mxu0 %v385
    %1293 = vmatprep.subr.mxu0 0.0
    %1294 = vmatpush1.msra.mxu0 %v388
    %1295 = vmatprep.subr.mxu0 0.0
    %1296 = vmatpush1.msra.mxu0 %v391
    %1297 = vmatprep.subr.mxu0 0.0
    %1298 = vmatpush1.msra.mxu0 %v394
    %1299 = vmatprep.subr.mxu0 0.0
    %1300 = vmatpush1.msra.mxu0 %v397
    %1301 = vmatprep.subr.mxu0 0.0
    %1302 = vmatpush1.msra.mxu0 %v400
    %1303 = vmatprep.subr.mxu0 0.0
    %1304 = vmatpush1.msra.mxu0 0.0
    %1305 = vmatprep.subr.mxu0 0.0
    %1306 = vmatpush1.msra.mxu0 0.0
    %1307 = vmatprep.subr.mxu0 0.0
    %1308 = vmatpush1.msra.mxu0 0.0
    %1309 = vmatprep.subr.mxu0 0.0
    %1310 = vmatpush1.msra.mxu0 0.0
    %1311 = vmatprep.subr.mxu0 0.0
    %1312 = vmatpush1.msra.mxu0 0.0
    %1313 = vmatprep.subr.mxu0 0.0
    %1314 = vmatpush1.msra.mxu0 0.0
    %1315 = vmatprep.subr.mxu0 0.0
    %1316 = vmatpush1.msra.mxu0 0.0
    %1317 = vmatprep.subr.mxu0 0.0
    %1318 = vmatpush1.msra.mxu0 0.0
    %1319 = vmatprep.subr.mxu0 0.0
    %1320 = vmatpush1.msra.mxu0 0.0
    %1321 = vmatprep.subr.mxu0 0.0
    %1322 = vmatpush1.msra.mxu0 0.0
    %1323 = vmatprep.subr.mxu0 0.0
    %1324 = vmatpush1.msra.mxu0 0.0
    %1325 = vmatprep.subr.mxu0 0.0
    %1326 = vmatpush1.msra.mxu0 0.0
    %1327 = vmatprep.subr.mxu0 0.0
    %1328 = vmatpush1.msra.mxu0 0.0
    %1329 = vmatprep.subr.mxu0 0.0
    %1330 = vmatpush1.msra.mxu0 0.0
    %1331 = vmatprep.subr.mxu0 0.0
    %1332 = vmatpush1.msra.mxu0 0.0
    %1333 = vmatprep.subr.mxu0 0.0
    %1334 = vmatpush1.msra.mxu0 0.0
    %1335 = vmatprep.mubr.f32.mxu0 0.0
    %1336 = vmatmul.mubr.f32.gmra.mrb[0].mxu0 %v1198
    %v1337 = vpop.f32.mrb[0].mxu0
    %v1338 = vadd.f32 %v414, %v1337
    %v1339 = vpop.f32.mrb[0].mxu0
    %1340 = vdwg.mxu0
    %v1342 = vrot.slane %v1267, 6
    %v1343 = vrot.slane %v1267, 7
    %v1344 = vrot.slane %v1267, 1
    %v1345 = vrot.slane %v1267, 2
    %v1346 = vrot.slane %v1267, 3
    %v1347 = vrot.slane %v1267, 4
    %v1348 = vrot.slane %v1267, 5
    %v1357 = vadd.f32 %v202, %v1342
    %v1358 = vadd.f32 %v208, %v1343
    %v1359 = vadd.f32 %v214, %v1267
    %v1360 = vadd.f32 %v220, %v1344
    %v1361 = vadd.f32 %v226, %v1345
    %v1362 = vadd.f32 %v232, %v1346
    %v1363 = vadd.f32 %v238, %v1347
    %v1364 = vadd.f32 %v244, %v1348
    %v1365 = vxor.u32 %v1357, 2147483648
    %v1366 = vxor.u32 %v1358, 2147483648
    %v1367 = vxor.u32 %v1359, 2147483648
    %v1368 = vxor.u32 %v1360, 2147483648
    %v1369 = vxor.u32 %v1361, 2147483648
    %v1370 = vxor.u32 %v1362, 2147483648
    %v1371 = vxor.u32 %v1363, 2147483648
    %v1372 = vxor.u32 %v1364, 2147483648
    %v1373 = vmul.f32 %v1365, 1.442695
    %v1374 = vpow.pop %v1373
    %v1375 = vmul.f32 %v1366, 1.442695
    %v1376 = vpow.pop %v1375
    %v1377 = vmul.f32 %v1367, 1.442695
    %v1378 = vpow.pop %v1377
    %v1379 = vmul.f32 %v1368, 1.442695
    %v1380 = vpow.pop %v1379
    %v1381 = vmul.f32 %v1369, 1.442695
    %v1382 = vpow.pop %v1381
    %v1383 = vmul.f32 %v1370, 1.442695
    %v1384 = vpow.pop %v1383
    %v1385 = vmul.f32 %v1371, 1.442695
    %v1386 = vpow.pop %v1385
    %v1387 = vmul.f32 %v1372, 1.442695
    %v1388 = vpow.pop %v1387
    %v1389 = vadd.f32 %v1374, 1.0
    %v1390 = vadd.f32 %v1376, 1.0
    %v1391 = vadd.f32 %v1378, 1.0
    %v1392 = vadd.f32 %v1380, 1.0
    %v1393 = vadd.f32 %v1382, 1.0
    %v1394 = vadd.f32 %v1384, 1.0
    %v1395 = vadd.f32 %v1386, 1.0
    %v1396 = vadd.f32 %v1388, 1.0
    %v1397 = vrcp.pop %v1389
    %v1398 = vmul.f32 1.0, %v1397
    %v1399 = vrcp.pop %v1390
    %v1400 = vmul.f32 1.0, %v1399
    %v1401 = vrcp.pop %v1391
    %v1402 = vmul.f32 1.0, %v1401
    %v1403 = vrcp.pop %v1392
    %v1404 = vmul.f32 1.0, %v1403
    %v1405 = vrcp.pop %v1393
    %v1406 = vmul.f32 1.0, %v1405
    %v1407 = vrcp.pop %v1394
    %v1408 = vmul.f32 1.0, %v1407
    %v1409 = vrcp.pop %v1395
    %v1410 = vmul.f32 1.0, %v1409
    %v1411 = vrcp.pop %v1396
    %v1412 = vmul.f32 1.0, %v1411
    %v1414 = vrot.slane %v1269, 6
    %v1415 = vrot.slane %v1269, 7
    %v1416 = vrot.slane %v1269, 1
    %v1417 = vrot.slane %v1269, 2
    %v1418 = vrot.slane %v1269, 3
    %v1419 = vrot.slane %v1269, 4
    %v1420 = vrot.slane %v1269, 5
    %v1429 = vadd.f32 %v204, %v1414
    %v1430 = vadd.f32 %v210, %v1415
    %v1431 = vadd.f32 %v216, %v1269
    %v1432 = vadd.f32 %v222, %v1416
    %v1433 = vadd.f32 %v228, %v1417
    %v1434 = vadd.f32 %v234, %v1418
    %v1435 = vadd.f32 %v240, %v1419
    %v1436 = vadd.f32 %v246, %v1420
    %v1437 = vxor.u32 %v1429, 2147483648
    %v1438 = vxor.u32 %v1430, 2147483648
    %v1439 = vxor.u32 %v1431, 2147483648
    %v1440 = vxor.u32 %v1432, 2147483648
    %v1441 = vxor.u32 %v1433, 2147483648
    %v1442 = vxor.u32 %v1434, 2147483648
    %v1443 = vxor.u32 %v1435, 2147483648
    %v1444 = vxor.u32 %v1436, 2147483648
    %v1445 = vmul.f32 %v1437, 1.442695
    %v1446 = vpow.pop %v1445
    %v1447 = vmul.f32 %v1438, 1.442695
    %v1448 = vpow.pop %v1447
    %v1449 = vmul.f32 %v1439, 1.442695
    %v1450 = vpow.pop %v1449
    %v1451 = vmul.f32 %v1440, 1.442695
    %v1452 = vpow.pop %v1451
    %v1453 = vmul.f32 %v1441, 1.442695
    %v1454 = vpow.pop %v1453
    %v1455 = vmul.f32 %v1442, 1.442695
    %v1456 = vpow.pop %v1455
    %v1457 = vmul.f32 %v1443, 1.442695
    %v1458 = vpow.pop %v1457
    %v1459 = vmul.f32 %v1444, 1.442695
    %v1460 = vpow.pop %v1459
    %v1461 = vadd.f32 %v1446, 1.0
    %v1462 = vadd.f32 %v1448, 1.0
    %v1463 = vadd.f32 %v1450, 1.0
    %v1464 = vadd.f32 %v1452, 1.0
    %v1465 = vadd.f32 %v1454, 1.0
    %v1466 = vadd.f32 %v1456, 1.0
    %v1467 = vadd.f32 %v1458, 1.0
    %v1468 = vadd.f32 %v1460, 1.0
    %v1469 = vrcp.pop %v1461
    %v1470 = vmul.f32 1.0, %v1469
    %v1471 = vrcp.pop %v1462
    %v1472 = vmul.f32 1.0, %v1471
    %v1473 = vrcp.pop %v1463
    %v1474 = vmul.f32 1.0, %v1473
    %v1475 = vrcp.pop %v1464
    %v1476 = vmul.f32 1.0, %v1475
    %v1477 = vrcp.pop %v1465
    %v1478 = vmul.f32 1.0, %v1477
    %v1479 = vrcp.pop %v1466
    %v1480 = vmul.f32 1.0, %v1479
    %v1481 = vrcp.pop %v1467
    %v1482 = vmul.f32 1.0, %v1481
    %v1483 = vrcp.pop %v1468
    %v1484 = vmul.f32 1.0, %v1483
    %v1486 = vrot.slane %v1338, 6
    %v1487 = vrot.slane %v1338, 7
    %v1488 = vrot.slane %v1338, 1
    %v1489 = vrot.slane %v1338, 2
    %v1490 = vrot.slane %v1338, 3
    %v1491 = vrot.slane %v1338, 4
    %v1492 = vrot.slane %v1338, 5
    %v1501 = vmul.f32 %v1398, %v1486
    %v1502 = vmul.f32 %v1400, %v1487
    %v1503 = vmul.f32 %v1402, %v1338
    %v1504 = vmul.f32 %v1404, %v1488
    %v1505 = vmul.f32 %v1406, %v1489
    %v1506 = vmul.f32 %v1408, %v1490
    %v1507 = vmul.f32 %v1410, %v1491
    %v1508 = vmul.f32 %v1412, %v1492
    %v1509 = vadd.f32 %v315, %v1501
    %v1510 = vadd.f32 %v320, %v1502
    %v1511 = vadd.f32 %v325, %v1503
    %v1512 = vadd.f32 %v330, %v1504
    %v1513 = vadd.f32 %v335, %v1505
    %v1514 = vadd.f32 %v340, %v1506
    %v1515 = vadd.f32 %v345, %v1507
    %v1516 = vadd.f32 %v350, %v1508
    %v1517 = vtanh.pop %v1509
    %v1518 = vtanh.pop %v1510
    %v1519 = vtanh.pop %v1511
    %v1520 = vtanh.pop %v1512
    %v1521 = vtanh.pop %v1513
    %v1522 = vtanh.pop %v1514
    %v1523 = vtanh.pop %v1515
    %v1524 = vtanh.pop %v1516
    %v1525 = vsub.f32 1.0, %v1470
    %v1526 = vsub.f32 1.0, %v1472
    %v1527 = vsub.f32 1.0, %v1474
    %v1528 = vsub.f32 1.0, %v1476
    %v1529 = vsub.f32 1.0, %v1478
    %v1530 = vsub.f32 1.0, %v1480
    %v1531 = vsub.f32 1.0, %v1482
    %v1532 = vsub.f32 1.0, %v1484
    %v1533 = vmul.f32 %v1525, %v1517
    %v1534 = vmul.f32 %v1526, %v1518
    %v1535 = vmul.f32 %v1527, %v1519
    %v1536 = vmul.f32 %v1528, %v1520
    %v1537 = vmul.f32 %v1529, %v1521
    %v1538 = vmul.f32 %v1530, %v1522
    %v1539 = vmul.f32 %v1531, %v1523
    %v1540 = vmul.f32 %v1532, %v1524
    %v1541 = vrot.slane %v1169, 7
    %v1542 = vrot.slane %v1170, 7
    %v1543 = vrot.slane %v1172, 7
    %v1544 = vrot.slane %v1173, 7
    %v1545 = vrot.slane %v1174, 7
    %v1546 = vrot.slane %v1175, 7
    %v1547 = vrot.slane %v1176, 7
    %v1556 = vmul.f32 %v1470, %v1541
    %v1557 = vmul.f32 %v1472, %v1542
    %v1558 = vmul.f32 %v1474, %v1187
    %v1559 = vmul.f32 %v1476, %v1543
    %v1560 = vmul.f32 %v1478, %v1544
    %v1561 = vmul.f32 %v1480, %v1545
    %v1562 = vmul.f32 %v1482, %v1546
    %v1563 = vmul.f32 %v1484, %v1547
    %v1564 = vadd.f32 %v1533, %v1556
    %v1565 = vadd.f32 %v1534, %v1557
    %v1566 = vadd.f32 %v1535, %v1558
    %v1567 = vadd.f32 %v1536, %v1559
    %v1568 = vadd.f32 %v1537, %v1560
    %v1569 = vadd.f32 %v1538, %v1561
    %v1570 = vadd.f32 %v1539, %v1562
    %v1571 = vadd.f32 %v1540, %v1563
    %v1580 = vrot.slane %v1564, 2
    %v1581 = vrot.slane %v1565, 1
    %v1582 = vsel %vm784, %v1581, %v1580
    %v1583 = vsel %vm787, %v1566, %v1582
    %v1584 = vrot.slane %v1567, 7
    %v1585 = vsel %vm790, %v1584, %v1583
    %v1586 = vrot.slane %v1568, 6
    %v1587 = vsel %vm793, %v1586, %v1585
    %v1588 = vrot.slane %v1569, 5
    %v1589 = vsel %vm796, %v1588, %v1587
    %v1590 = vrot.slane %v1570, 4
    %v1591 = vsel %vm799, %v1590, %v1589
    %v1592 = vrot.slane %v1571, 3
    %v1593 = vsel %vm802, %v1592, %v1591
    %1595 = vmatprep.subr.mxu0 %v354
    %1596 = vmatpush1.msra.mxu0 %v353
    %1597 = vmatprep.subr.mxu0 %v357
    %1598 = vmatpush1.msra.mxu0 %v356
    %1599 = vmatprep.subr.mxu0 %v360
    %1600 = vmatpush1.msra.mxu0 %v359
    %1601 = vmatprep.subr.mxu0 %v363
    %1602 = vmatpush1.msra.mxu0 %v362
    %1603 = vmatprep.subr.mxu0 %v366
    %1604 = vmatpush1.msra.mxu0 %v365
    %1605 = vmatprep.subr.mxu0 %v369
    %1606 = vmatpush1.msra.mxu0 %v368
    %1607 = vmatprep.subr.mxu0 %v372
    %1608 = vmatpush1.msra.mxu0 %v371
    %1609 = vmatprep.subr.mxu0 %v375
    %1610 = vmatpush1.msra.mxu0 %v374
    %1611 = vmatprep.subr.mxu0 %v378
    %1612 = vmatpush1.msra.mxu0 %v377
    %1613 = vmatprep.subr.mxu0 %v381
    %1614 = vmatpush1.msra.mxu0 %v380
    %1615 = vmatprep.subr.mxu0 %v384
    %1616 = vmatpush1.msra.mxu0 %v383
    %1617 = vmatprep.subr.mxu0 %v387
    %1618 = vmatpush1.msra.mxu0 %v386
    %1619 = vmatprep.subr.mxu0 %v390
    %1620 = vmatpush1.msra.mxu0 %v389
    %1621 = vmatprep.subr.mxu0 %v393
    %1622 = vmatpush1.msra.mxu0 %v392
    %1623 = vmatprep.subr.mxu0 %v396
    %1624 = vmatpush1.msra.mxu0 %v395
    %1625 = vmatprep.subr.mxu0 %v399
    %1626 = vmatpush1.msra.mxu0 %v398
    %1627 = vmatprep.subr.mxu0 0.0
    %1628 = vmatpush1.msra.mxu0 0.0
    %1629 = vmatprep.subr.mxu0 0.0
    %1630 = vmatpush1.msra.mxu0 0.0
    %1631 = vmatprep.subr.mxu0 0.0
    %1632 = vmatpush1.msra.mxu0 0.0
    %1633 = vmatprep.subr.mxu0 0.0
    %1634 = vmatpush1.msra.mxu0 0.0
    %1635 = vmatprep.subr.mxu0 0.0
    %1636 = vmatpush1.msra.mxu0 0.0
    %1637 = vmatprep.subr.mxu0 0.0
    %1638 = vmatpush1.msra.mxu0 0.0
    %1639 = vmatprep.subr.mxu0 0.0
    %1640 = vmatpush1.msra.mxu0 0.0
    %1641 = vmatprep.subr.mxu0 0.0
    %1642 = vmatpush1.msra.mxu0 0.0
    %1643 = vmatprep.subr.mxu0 0.0
    %1644 = vmatpush1.msra.mxu0 0.0
    %1645 = vmatprep.subr.mxu0 0.0
    %1646 = vmatpush1.msra.mxu0 0.0
    %1647 = vmatprep.subr.mxu0 0.0
    %1648 = vmatpush1.msra.mxu0 0.0
    %1649 = vmatprep.subr.mxu0 0.0
    %1650 = vmatpush1.msra.mxu0 0.0
    %1651 = vmatprep.subr.mxu0 0.0
    %1652 = vmatpush1.msra.mxu0 0.0
    %1653 = vmatprep.subr.mxu0 0.0
    %1654 = vmatpush1.msra.mxu0 0.0
    %1655 = vmatprep.subr.mxu0 0.0
    %1656 = vmatpush1.msra.mxu0 0.0
    %1657 = vmatprep.subr.mxu0 0.0
    %1658 = vmatpush1.msra.mxu0 0.0
    %1659 = vmatprep.mubr.f32.mxu0 0.0
    %1660 = vmatmul.mubr.f32.gmra.mrb[0].mxu0 %v1593
    %v1661 = vpop.f32.mrb[0].mxu0
    %v1662 = vadd.f32 %v406, %v1661
    %v1663 = vpop.f32.mrb[0].mxu0
    %v1664 = vadd.f32 %v410, %v1663
    %1665 = vdwg.mxu0
    %1666 = vmatprep.subr.mxu0 0.0
    %1667 = vmatpush1.msra.mxu0 %v355
    %1668 = vmatprep.subr.mxu0 0.0
    %1669 = vmatpush1.msra.mxu0 %v358
    %1670 = vmatprep.subr.mxu0 0.0
    %1671 = vmatpush1.msra.mxu0 %v361
    %1672 = vmatprep.subr.mxu0 0.0
    %1673 = vmatpush1.msra.mxu0 %v364
    %1674 = vmatprep.subr.mxu0 0.0
    %1675 = vmatpush1.msra.mxu0 %v367
    %1676 = vmatprep.subr.mxu0 0.0
    %1677 = vmatpush1.msra.mxu0 %v370
    %1678 = vmatprep.subr.mxu0 0.0
    %1679 = vmatpush1.msra.mxu0 %v373
    %1680 = vmatprep.subr.mxu0 0.0
    %1681 = vmatpush1.msra.mxu0 %v376
    %1682 = vmatprep.subr.mxu0 0.0
    %1683 = vmatpush1.msra.mxu0 %v379
    %1684 = vmatprep.subr.mxu0 0.0
    %1685 = vmatpush1.msra.mxu0 %v382
    %1686 = vmatprep.subr.mxu0 0.0
    %1687 = vmatpush1.msra.mxu0 %v385
    %1688 = vmatprep.subr.mxu0 0.0
    %1689 = vmatpush1.msra.mxu0 %v388
    %1690 = vmatprep.subr.mxu0 0.0
    %1691 = vmatpush1.msra.mxu0 %v391
    %1692 = vmatprep.subr.mxu0 0.0
    %1693 = vmatpush1.msra.mxu0 %v394
    %1694 = vmatprep.subr.mxu0 0.0
    %1695 = vmatpush1.msra.mxu0 %v397
    %1696 = vmatprep.subr.mxu0 0.0
    %1697 = vmatpush1.msra.mxu0 %v400
    %1698 = vmatprep.subr.mxu0 0.0
    %1699 = vmatpush1.msra.mxu0 0.0
    %1700 = vmatprep.subr.mxu0 0.0
    %1701 = vmatpush1.msra.mxu0 0.0
    %1702 = vmatprep.subr.mxu0 0.0
    %1703 = vmatpush1.msra.mxu0 0.0
    %1704 = vmatprep.subr.mxu0 0.0
    %1705 = vmatpush1.msra.mxu0 0.0
    %1706 = vmatprep.subr.mxu0 0.0
    %1707 = vmatpush1.msra.mxu0 0.0
    %1708 = vmatprep.subr.mxu0 0.0
    %1709 = vmatpush1.msra.mxu0 0.0
    %1710 = vmatprep.subr.mxu0 0.0
    %1711 = vmatpush1.msra.mxu0 0.0
    %1712 = vmatprep.subr.mxu0 0.0
    %1713 = vmatpush1.msra.mxu0 0.0
    %1714 = vmatprep.subr.mxu0 0.0
    %1715 = vmatpush1.msra.mxu0 0.0
    %1716 = vmatprep.subr.mxu0 0.0
    %1717 = vmatpush1.msra.mxu0 0.0
    %1718 = vmatprep.subr.mxu0 0.0
    %1719 = vmatpush1.msra.mxu0 0.0
    %1720 = vmatprep.subr.mxu0 0.0
    %1721 = vmatpush1.msra.mxu0 0.0
    %1722 = vmatprep.subr.mxu0 0.0
    %1723 = vmatpush1.msra.mxu0 0.0
    %1724 = vmatprep.subr.mxu0 0.0
    %1725 = vmatpush1.msra.mxu0 0.0
    %1726 = vmatprep.subr.mxu0 0.0
    %1727 = vmatpush1.msra.mxu0 0.0
    %1728 = vmatprep.subr.mxu0 0.0
    %1729 = vmatpush1.msra.mxu0 0.0
    %1730 = vmatprep.mubr.f32.mxu0 0.0
    %1731 = vmatmul.mubr.f32.gmra.mrb[0].mxu0 %v1593
    %v1732 = vpop.f32.mrb[0].mxu0
    %v1733 = vadd.f32 %v414, %v1732
    %v1734 = vpop.f32.mrb[0].mxu0
    %1735 = vdwg.mxu0
    %v1737 = vrot.slane %v1662, 5
    %v1738 = vrot.slane %v1662, 6
    %v1739 = vrot.slane %v1662, 7
    %v1740 = vrot.slane %v1662, 1
    %v1741 = vrot.slane %v1662, 2
    %v1742 = vrot.slane %v1662, 3
    %v1743 = vrot.slane %v1662, 4
    %v1752 = vadd.f32 %v202, %v1737
    %v1753 = vadd.f32 %v208, %v1738
    %v1754 = vadd.f32 %v214, %v1739
    %v1755 = vadd.f32 %v220, %v1662
    %v1756 = vadd.f32 %v226, %v1740
    %v1757 = vadd.f32 %v232, %v1741
    %v1758 = vadd.f32 %v238, %v1742
    %v1759 = vadd.f32 %v244, %v1743
    %v1760 = vxor.u32 %v1752, 2147483648
    %v1761 = vxor.u32 %v1753, 2147483648
    %v1762 = vxor.u32 %v1754, 2147483648
    %v1763 = vxor.u32 %v1755, 2147483648
    %v1764 = vxor.u32 %v1756, 2147483648
    %v1765 = vxor.u32 %v1757, 2147483648
    %v1766 = vxor.u32 %v1758, 2147483648
    %v1767 = vxor.u32 %v1759, 2147483648
    %v1768 = vmul.f32 %v1760, 1.442695
    %v1769 = vpow.pop %v1768
    %v1770 = vmul.f32 %v1761, 1.442695
    %v1771 = vpow.pop %v1770
    %v1772 = vmul.f32 %v1762, 1.442695
    %v1773 = vpow.pop %v1772
    %v1774 = vmul.f32 %v1763, 1.442695
    %v1775 = vpow.pop %v1774
    %v1776 = vmul.f32 %v1764, 1.442695
    %v1777 = vpow.pop %v1776
    %v1778 = vmul.f32 %v1765, 1.442695
    %v1779 = vpow.pop %v1778
    %v1780 = vmul.f32 %v1766, 1.442695
    %v1781 = vpow.pop %v1780
    %v1782 = vmul.f32 %v1767, 1.442695
    %v1783 = vpow.pop %v1782
    %v1784 = vadd.f32 %v1769, 1.0
    %v1785 = vadd.f32 %v1771, 1.0
    %v1786 = vadd.f32 %v1773, 1.0
    %v1787 = vadd.f32 %v1775, 1.0
    %v1788 = vadd.f32 %v1777, 1.0
    %v1789 = vadd.f32 %v1779, 1.0
    %v1790 = vadd.f32 %v1781, 1.0
    %v1791 = vadd.f32 %v1783, 1.0
    %v1792 = vrcp.pop %v1784
    %v1793 = vmul.f32 1.0, %v1792
    %v1794 = vrcp.pop %v1785
    %v1795 = vmul.f32 1.0, %v1794
    %v1796 = vrcp.pop %v1786
    %v1797 = vmul.f32 1.0, %v1796
    %v1798 = vrcp.pop %v1787
    %v1799 = vmul.f32 1.0, %v1798
    %v1800 = vrcp.pop %v1788
    %v1801 = vmul.f32 1.0, %v1800
    %v1802 = vrcp.pop %v1789
    %v1803 = vmul.f32 1.0, %v1802
    %v1804 = vrcp.pop %v1790
    %v1805 = vmul.f32 1.0, %v1804
    %v1806 = vrcp.pop %v1791
    %v1807 = vmul.f32 1.0, %v1806
    %v1809 = vrot.slane %v1664, 5
    %v1810 = vrot.slane %v1664, 6
    %v1811 = vrot.slane %v1664, 7
    %v1812 = vrot.slane %v1664, 1
    %v1813 = vrot.slane %v1664, 2
    %v1814 = vrot.slane %v1664, 3
    %v1815 = vrot.slane %v1664, 4
    %v1824 = vadd.f32 %v204, %v1809
    %v1825 = vadd.f32 %v210, %v1810
    %v1826 = vadd.f32 %v216, %v1811
    %v1827 = vadd.f32 %v222, %v1664
    %v1828 = vadd.f32 %v228, %v1812
    %v1829 = vadd.f32 %v234, %v1813
    %v1830 = vadd.f32 %v240, %v1814
    %v1831 = vadd.f32 %v246, %v1815
    %v1832 = vxor.u32 %v1824, 2147483648
    %v1833 = vxor.u32 %v1825, 2147483648
    %v1834 = vxor.u32 %v1826, 2147483648
    %v1835 = vxor.u32 %v1827, 2147483648
    %v1836 = vxor.u32 %v1828, 2147483648
    %v1837 = vxor.u32 %v1829, 2147483648
    %v1838 = vxor.u32 %v1830, 2147483648
    %v1839 = vxor.u32 %v1831, 2147483648
    %v1840 = vmul.f32 %v1832, 1.442695
    %v1841 = vpow.pop %v1840
    %v1842 = vmul.f32 %v1833, 1.442695
    %v1843 = vpow.pop %v1842
    %v1844 = vmul.f32 %v1834, 1.442695
    %v1845 = vpow.pop %v1844
    %v1846 = vmul.f32 %v1835, 1.442695
    %v1847 = vpow.pop %v1846
    %v1848 = vmul.f32 %v1836, 1.442695
    %v1849 = vpow.pop %v1848
    %v1850 = vmul.f32 %v1837, 1.442695
    %v1851 = vpow.pop %v1850
    %v1852 = vmul.f32 %v1838, 1.442695
    %v1853 = vpow.pop %v1852
    %v1854 = vmul.f32 %v1839, 1.442695
    %v1855 = vpow.pop %v1854
    %v1856 = vadd.f32 %v1841, 1.0
    %v1857 = vadd.f32 %v1843, 1.0
    %v1858 = vadd.f32 %v1845, 1.0
    %v1859 = vadd.f32 %v1847, 1.0
    %v1860 = vadd.f32 %v1849, 1.0
    %v1861 = vadd.f32 %v1851, 1.0
    %v1862 = vadd.f32 %v1853, 1.0
    %v1863 = vadd.f32 %v1855, 1.0
    %v1864 = vrcp.pop %v1856
    %v1865 = vmul.f32 1.0, %v1864
    %v1866 = vrcp.pop %v1857
    %v1867 = vmul.f32 1.0, %v1866
    %v1868 = vrcp.pop %v1858
    %v1869 = vmul.f32 1.0, %v1868
    %v1870 = vrcp.pop %v1859
    %v1871 = vmul.f32 1.0, %v1870
    %v1872 = vrcp.pop %v1860
    %v1873 = vmul.f32 1.0, %v1872
    %v1874 = vrcp.pop %v1861
    %v1875 = vmul.f32 1.0, %v1874
    %v1876 = vrcp.pop %v1862
    %v1877 = vmul.f32 1.0, %v1876
    %v1878 = vrcp.pop %v1863
    %v1879 = vmul.f32 1.0, %v1878
    %v1881 = vrot.slane %v1733, 5
    %v1882 = vrot.slane %v1733, 6
    %v1883 = vrot.slane %v1733, 7
    %v1884 = vrot.slane %v1733, 1
    %v1885 = vrot.slane %v1733, 2
    %v1886 = vrot.slane %v1733, 3
    %v1887 = vrot.slane %v1733, 4
    %v1896 = vmul.f32 %v1793, %v1881
    %v1897 = vmul.f32 %v1795, %v1882
    %v1898 = vmul.f32 %v1797, %v1883
    %v1899 = vmul.f32 %v1799, %v1733
    %v1900 = vmul.f32 %v1801, %v1884
    %v1901 = vmul.f32 %v1803, %v1885
    %v1902 = vmul.f32 %v1805, %v1886
    %v1903 = vmul.f32 %v1807, %v1887
    %v1904 = vadd.f32 %v315, %v1896
    %v1905 = vadd.f32 %v320, %v1897
    %v1906 = vadd.f32 %v325, %v1898
    %v1907 = vadd.f32 %v330, %v1899
    %v1908 = vadd.f32 %v335, %v1900
    %v1909 = vadd.f32 %v340, %v1901
    %v1910 = vadd.f32 %v345, %v1902
    %v1911 = vadd.f32 %v350, %v1903
    %v1912 = vtanh.pop %v1904
    %v1913 = vtanh.pop %v1905
    %v1914 = vtanh.pop %v1906
    %v1915 = vtanh.pop %v1907
    %v1916 = vtanh.pop %v1908
    %v1917 = vtanh.pop %v1909
    %v1918 = vtanh.pop %v1910
    %v1919 = vtanh.pop %v1911
    %v1920 = vsub.f32 1.0, %v1865
    %v1921 = vsub.f32 1.0, %v1867
    %v1922 = vsub.f32 1.0, %v1869
    %v1923 = vsub.f32 1.0, %v1871
    %v1924 = vsub.f32 1.0, %v1873
    %v1925 = vsub.f32 1.0, %v1875
    %v1926 = vsub.f32 1.0, %v1877
    %v1927 = vsub.f32 1.0, %v1879
    %v1928 = vmul.f32 %v1920, %v1912
    %v1929 = vmul.f32 %v1921, %v1913
    %v1930 = vmul.f32 %v1922, %v1914
    %v1931 = vmul.f32 %v1923, %v1915
    %v1932 = vmul.f32 %v1924, %v1916
    %v1933 = vmul.f32 %v1925, %v1917
    %v1934 = vmul.f32 %v1926, %v1918
    %v1935 = vmul.f32 %v1927, %v1919
    %v1936 = vrot.slane %v1564, 7
    %v1937 = vrot.slane %v1565, 7
    %v1938 = vrot.slane %v1566, 7
    %v1939 = vrot.slane %v1568, 7
    %v1940 = vrot.slane %v1569, 7
    %v1941 = vrot.slane %v1570, 7
    %v1942 = vrot.slane %v1571, 7
    %v1951 = vmul.f32 %v1865, %v1936
    %v1952 = vmul.f32 %v1867, %v1937
    %v1953 = vmul.f32 %v1869, %v1938
    %v1954 = vmul.f32 %v1871, %v1584
    %v1955 = vmul.f32 %v1873, %v1939
    %v1956 = vmul.f32 %v1875, %v1940
    %v1957 = vmul.f32 %v1877, %v1941
    %v1958 = vmul.f32 %v1879, %v1942
    %v1959 = vadd.f32 %v1928, %v1951
    %v1960 = vadd.f32 %v1929, %v1952
    %v1961 = vadd.f32 %v1930, %v1953
    %v1962 = vadd.f32 %v1931, %v1954
    %v1963 = vadd.f32 %v1932, %v1955
    %v1964 = vadd.f32 %v1933, %v1956
    %v1965 = vadd.f32 %v1934, %v1957
    %v1966 = vadd.f32 %v1935, %v1958
    %v1975 = vrot.slane %v1959, 3
    %v1976 = vrot.slane %v1960, 2
    %v1977 = vsel %vm784, %v1976, %v1975
    %v1978 = vrot.slane %v1961, 1
    %v1979 = vsel %vm787, %v1978, %v1977
    %v1980 = vsel %vm790, %v1962, %v1979
    %v1981 = vrot.slane %v1963, 7
    %v1982 = vsel %vm793, %v1981, %v1980
    %v1983 = vrot.slane %v1964, 6
    %v1984 = vsel %vm796, %v1983, %v1982
    %v1985 = vrot.slane %v1965, 5
    %v1986 = vsel %vm799, %v1985, %v1984
    %v1987 = vrot.slane %v1966, 4
    %v1988 = vsel %vm802, %v1987, %v1986
    %1990 = vmatprep.subr.mxu0 %v354
    %1991 = vmatpush1.msra.mxu0 %v353
    %1992 = vmatprep.subr.mxu0 %v357
    %1993 = vmatpush1.msra.mxu0 %v356
    %1994 = vmatprep.subr.mxu0 %v360
    %1995 = vmatpush1.msra.mxu0 %v359
    %1996 = vmatprep.subr.mxu0 %v363
    %1997 = vmatpush1.msra.mxu0 %v362
    %1998 = vmatprep.subr.mxu0 %v366
    %1999 = vmatpush1.msra.mxu0 %v365
    %2000 = vmatprep.subr.mxu0 %v369
    %2001 = vmatpush1.msra.mxu0 %v368
    %2002 = vmatprep.subr.mxu0 %v372
    %2003 = vmatpush1.msra.mxu0 %v371
    %2004 = vmatprep.subr.mxu0 %v375
    %2005 = vmatpush1.msra.mxu0 %v374
    %2006 = vmatprep.subr.mxu0 %v378
    %2007 = vmatpush1.msra.mxu0 %v377
    %2008 = vmatprep.subr.mxu0 %v381
    %2009 = vmatpush1.msra.mxu0 %v380
    %2010 = vmatprep.subr.mxu0 %v384
    %2011 = vmatpush1.msra.mxu0 %v383
    %2012 = vmatprep.subr.mxu0 %v387
    %2013 = vmatpush1.msra.mxu0 %v386
    %2014 = vmatprep.subr.mxu0 %v390
    %2015 = vmatpush1.msra.mxu0 %v389
    %2016 = vmatprep.subr.mxu0 %v393
    %2017 = vmatpush1.msra.mxu0 %v392
    %2018 = vmatprep.subr.mxu0 %v396
    %2019 = vmatpush1.msra.mxu0 %v395
    %2020 = vmatprep.subr.mxu0 %v399
    %2021 = vmatpush1.msra.mxu0 %v398
    %2022 = vmatprep.subr.mxu0 0.0
    %2023 = vmatpush1.msra.mxu0 0.0
    %2024 = vmatprep.subr.mxu0 0.0
    %2025 = vmatpush1.msra.mxu0 0.0
    %2026 = vmatprep.subr.mxu0 0.0
    %2027 = vmatpush1.msra.mxu0 0.0
    %2028 = vmatprep.subr.mxu0 0.0
    %2029 = vmatpush1.msra.mxu0 0.0
    %2030 = vmatprep.subr.mxu0 0.0
    %2031 = vmatpush1.msra.mxu0 0.0
    %2032 = vmatprep.subr.mxu0 0.0
    %2033 = vmatpush1.msra.mxu0 0.0
    %2034 = vmatprep.subr.mxu0 0.0
    %2035 = vmatpush1.msra.mxu0 0.0
    %2036 = vmatprep.subr.mxu0 0.0
    %2037 = vmatpush1.msra.mxu0 0.0
    %2038 = vmatprep.subr.mxu0 0.0
    %2039 = vmatpush1.msra.mxu0 0.0
    %2040 = vmatprep.subr.mxu0 0.0
    %2041 = vmatpush1.msra.mxu0 0.0
    %2042 = vmatprep.subr.mxu0 0.0
    %2043 = vmatpush1.msra.mxu0 0.0
    %2044 = vmatprep.subr.mxu0 0.0
    %2045 = vmatpush1.msra.mxu0 0.0
    %2046 = vmatprep.subr.mxu0 0.0
    %2047 = vmatpush1.msra.mxu0 0.0
    %2048 = vmatprep.subr.mxu0 0.0
    %2049 = vmatpush1.msra.mxu0 0.0
    %2050 = vmatprep.subr.mxu0 0.0
    %2051 = vmatpush1.msra.mxu0 0.0
    %2052 = vmatprep.subr.mxu0 0.0
    %2053 = vmatpush1.msra.mxu0 0.0
    %2054 = vmatprep.mubr.f32.mxu0 0.0
    %2055 = vmatmul.mubr.f32.gmra.mrb[0].mxu0 %v1988
    %v2056 = vpop.f32.mrb[0].mxu0
    %v2057 = vadd.f32 %v406, %v2056
    %v2058 = vpop.f32.mrb[0].mxu0
    %v2059 = vadd.f32 %v410, %v2058
    %2060 = vdwg.mxu0
    %2061 = vmatprep.subr.mxu0 0.0
    %2062 = vmatpush1.msra.mxu0 %v355
    %2063 = vmatprep.subr.mxu0 0.0
    %2064 = vmatpush1.msra.mxu0 %v358
    %2065 = vmatprep.subr.mxu0 0.0
    %2066 = vmatpush1.msra.mxu0 %v361
    %2067 = vmatprep.subr.mxu0 0.0
    %2068 = vmatpush1.msra.mxu0 %v364
    %2069 = vmatprep.subr.mxu0 0.0
    %2070 = vmatpush1.msra.mxu0 %v367
    %2071 = vmatprep.subr.mxu0 0.0
    %2072 = vmatpush1.msra.mxu0 %v370
    %2073 = vmatprep.subr.mxu0 0.0
    %2074 = vmatpush1.msra.mxu0 %v373
    %2075 = vmatprep.subr.mxu0 0.0
    %2076 = vmatpush1.msra.mxu0 %v376
    %2077 = vmatprep.subr.mxu0 0.0
    %2078 = vmatpush1.msra.mxu0 %v379
    %2079 = vmatprep.subr.mxu0 0.0
    %2080 = vmatpush1.msra.mxu0 %v382
    %2081 = vmatprep.subr.mxu0 0.0
    %2082 = vmatpush1.msra.mxu0 %v385
    %2083 = vmatprep.subr.mxu0 0.0
    %2084 = vmatpush1.msra.mxu0 %v388
    %2085 = vmatprep.subr.mxu0 0.0
    %2086 = vmatpush1.msra.mxu0 %v391
    %2087 = vmatprep.subr.mxu0 0.0
    %2088 = vmatpush1.msra.mxu0 %v394
    %2089 = vmatprep.subr.mxu0 0.0
    %2090 = vmatpush1.msra.mxu0 %v397
    %2091 = vmatprep.subr.mxu0 0.0
    %2092 = vmatpush1.msra.mxu0 %v400
    %2093 = vmatprep.subr.mxu0 0.0
    %2094 = vmatpush1.msra.mxu0 0.0
    %2095 = vmatprep.subr.mxu0 0.0
    %2096 = vmatpush1.msra.mxu0 0.0
    %2097 = vmatprep.subr.mxu0 0.0
    %2098 = vmatpush1.msra.mxu0 0.0
    %2099 = vmatprep.subr.mxu0 0.0
    %2100 = vmatpush1.msra.mxu0 0.0
    %2101 = vmatprep.subr.mxu0 0.0
    %2102 = vmatpush1.msra.mxu0 0.0
    %2103 = vmatprep.subr.mxu0 0.0
    %2104 = vmatpush1.msra.mxu0 0.0
    %2105 = vmatprep.subr.mxu0 0.0
    %2106 = vmatpush1.msra.mxu0 0.0
    %2107 = vmatprep.subr.mxu0 0.0
    %2108 = vmatpush1.msra.mxu0 0.0
    %2109 = vmatprep.subr.mxu0 0.0
    %2110 = vmatpush1.msra.mxu0 0.0
    %2111 = vmatprep.subr.mxu0 0.0
    %2112 = vmatpush1.msra.mxu0 0.0
    %2113 = vmatprep.subr.mxu0 0.0
    %2114 = vmatpush1.msra.mxu0 0.0
    %2115 = vmatprep.subr.mxu0 0.0
    %2116 = vmatpush1.msra.mxu0 0.0
    %2117 = vmatprep.subr.mxu0 0.0
    %2118 = vmatpush1.msra.mxu0 0.0
    %2119 = vmatprep.subr.mxu0 0.0
    %2120 = vmatpush1.msra.mxu0 0.0
    %2121 = vmatprep.subr.mxu0 0.0
    %2122 = vmatpush1.msra.mxu0 0.0
    %2123 = vmatprep.subr.mxu0 0.0
    %2124 = vmatpush1.msra.mxu0 0.0
    %2125 = vmatprep.mubr.f32.mxu0 0.0
    %2126 = vmatmul.mubr.f32.gmra.mrb[0].mxu0 %v1988
    %v2127 = vpop.f32.mrb[0].mxu0
    %v2128 = vadd.f32 %v414, %v2127
    %v2129 = vpop.f32.mrb[0].mxu0
    %2130 = vdwg.mxu0
    %v2132 = vrot.slane %v2057, 4
    %v2133 = vrot.slane %v2057, 5
    %v2134 = vrot.slane %v2057, 6
    %v2135 = vrot.slane %v2057, 7
    %v2136 = vrot.slane %v2057, 1
    %v2137 = vrot.slane %v2057, 2
    %v2138 = vrot.slane %v2057, 3
    %v2147 = vadd.f32 %v202, %v2132
    %v2148 = vadd.f32 %v208, %v2133
    %v2149 = vadd.f32 %v214, %v2134
    %v2150 = vadd.f32 %v220, %v2135
    %v2151 = vadd.f32 %v226, %v2057
    %v2152 = vadd.f32 %v232, %v2136
    %v2153 = vadd.f32 %v238, %v2137
    %v2154 = vadd.f32 %v244, %v2138
    %v2155 = vxor.u32 %v2147, 2147483648
    %v2156 = vxor.u32 %v2148, 2147483648
    %v2157 = vxor.u32 %v2149, 2147483648
    %v2158 = vxor.u32 %v2150, 2147483648
    %v2159 = vxor.u32 %v2151, 2147483648
    %v2160 = vxor.u32 %v2152, 2147483648
    %v2161 = vxor.u32 %v2153, 2147483648
    %v2162 = vxor.u32 %v2154, 2147483648
    %v2163 = vmul.f32 %v2155, 1.442695
    %v2164 = vpow.pop %v2163
    %v2165 = vmul.f32 %v2156, 1.442695
    %v2166 = vpow.pop %v2165
    %v2167 = vmul.f32 %v2157, 1.442695
    %v2168 = vpow.pop %v2167
    %v2169 = vmul.f32 %v2158, 1.442695
    %v2170 = vpow.pop %v2169
    %v2171 = vmul.f32 %v2159, 1.442695
    %v2172 = vpow.pop %v2171
    %v2173 = vmul.f32 %v2160, 1.442695
    %v2174 = vpow.pop %v2173
    %v2175 = vmul.f32 %v2161, 1.442695
    %v2176 = vpow.pop %v2175
    %v2177 = vmul.f32 %v2162, 1.442695
    %v2178 = vpow.pop %v2177
    %v2179 = vadd.f32 %v2164, 1.0
    %v2180 = vadd.f32 %v2166, 1.0
    %v2181 = vadd.f32 %v2168, 1.0
    %v2182 = vadd.f32 %v2170, 1.0
    %v2183 = vadd.f32 %v2172, 1.0
    %v2184 = vadd.f32 %v2174, 1.0
    %v2185 = vadd.f32 %v2176, 1.0
    %v2186 = vadd.f32 %v2178, 1.0
    %v2187 = vrcp.pop %v2179
    %v2188 = vmul.f32 1.0, %v2187
    %v2189 = vrcp.pop %v2180
    %v2190 = vmul.f32 1.0, %v2189
    %v2191 = vrcp.pop %v2181
    %v2192 = vmul.f32 1.0, %v2191
    %v2193 = vrcp.pop %v2182
    %v2194 = vmul.f32 1.0, %v2193
    %v2195 = vrcp.pop %v2183
    %v2196 = vmul.f32 1.0, %v2195
    %v2197 = vrcp.pop %v2184
    %v2198 = vmul.f32 1.0, %v2197
    %v2199 = vrcp.pop %v2185
    %v2200 = vmul.f32 1.0, %v2199
    %v2201 = vrcp.pop %v2186
    %v2202 = vmul.f32 1.0, %v2201
    %v2204 = vrot.slane %v2059, 4
    %v2205 = vrot.slane %v2059, 5
    %v2206 = vrot.slane %v2059, 6
    %v2207 = vrot.slane %v2059, 7
    %v2208 = vrot.slane %v2059, 1
    %v2209 = vrot.slane %v2059, 2
    %v2210 = vrot.slane %v2059, 3
    %v2219 = vadd.f32 %v204, %v2204
    %v2220 = vadd.f32 %v210, %v2205
    %v2221 = vadd.f32 %v216, %v2206
    %v2222 = vadd.f32 %v222, %v2207
    %v2223 = vadd.f32 %v228, %v2059
    %v2224 = vadd.f32 %v234, %v2208
    %v2225 = vadd.f32 %v240, %v2209
    %v2226 = vadd.f32 %v246, %v2210
    %v2227 = vxor.u32 %v2219, 2147483648
    %v2228 = vxor.u32 %v2220, 2147483648
    %v2229 = vxor.u32 %v2221, 2147483648
    %v2230 = vxor.u32 %v2222, 2147483648
    %v2231 = vxor.u32 %v2223, 2147483648
    %v2232 = vxor.u32 %v2224, 2147483648
    %v2233 = vxor.u32 %v2225, 2147483648
    %v2234 = vxor.u32 %v2226, 2147483648
    %v2235 = vmul.f32 %v2227, 1.442695
    %v2236 = vpow.pop %v2235
    %v2237 = vmul.f32 %v2228, 1.442695
    %v2238 = vpow.pop %v2237
    %v2239 = vmul.f32 %v2229, 1.442695
    %v2240 = vpow.pop %v2239
    %v2241 = vmul.f32 %v2230, 1.442695
    %v2242 = vpow.pop %v2241
    %v2243 = vmul.f32 %v2231, 1.442695
    %v2244 = vpow.pop %v2243
    %v2245 = vmul.f32 %v2232, 1.442695
    %v2246 = vpow.pop %v2245
    %v2247 = vmul.f32 %v2233, 1.442695
    %v2248 = vpow.pop %v2247
    %v2249 = vmul.f32 %v2234, 1.442695
    %v2250 = vpow.pop %v2249
    %v2251 = vadd.f32 %v2236, 1.0
    %v2252 = vadd.f32 %v2238, 1.0
    %v2253 = vadd.f32 %v2240, 1.0
    %v2254 = vadd.f32 %v2242, 1.0
    %v2255 = vadd.f32 %v2244, 1.0
    %v2256 = vadd.f32 %v2246, 1.0
    %v2257 = vadd.f32 %v2248, 1.0
    %v2258 = vadd.f32 %v2250, 1.0
    %v2259 = vrcp.pop %v2251
    %v2260 = vmul.f32 1.0, %v2259
    %v2261 = vrcp.pop %v2252
    %v2262 = vmul.f32 1.0, %v2261
    %v2263 = vrcp.pop %v2253
    %v2264 = vmul.f32 1.0, %v2263
    %v2265 = vrcp.pop %v2254
    %v2266 = vmul.f32 1.0, %v2265
    %v2267 = vrcp.pop %v2255
    %v2268 = vmul.f32 1.0, %v2267
    %v2269 = vrcp.pop %v2256
    %v2270 = vmul.f32 1.0, %v2269
    %v2271 = vrcp.pop %v2257
    %v2272 = vmul.f32 1.0, %v2271
    %v2273 = vrcp.pop %v2258
    %v2274 = vmul.f32 1.0, %v2273
    %v2276 = vrot.slane %v2128, 4
    %v2277 = vrot.slane %v2128, 5
    %v2278 = vrot.slane %v2128, 6
    %v2279 = vrot.slane %v2128, 7
    %v2280 = vrot.slane %v2128, 1
    %v2281 = vrot.slane %v2128, 2
    %v2282 = vrot.slane %v2128, 3
    %v2291 = vmul.f32 %v2188, %v2276
    %v2292 = vmul.f32 %v2190, %v2277
    %v2293 = vmul.f32 %v2192, %v2278
    %v2294 = vmul.f32 %v2194, %v2279
    %v2295 = vmul.f32 %v2196, %v2128
    %v2296 = vmul.f32 %v2198, %v2280
    %v2297 = vmul.f32 %v2200, %v2281
    %v2298 = vmul.f32 %v2202, %v2282
    %v2299 = vadd.f32 %v315, %v2291
    %v2300 = vadd.f32 %v320, %v2292
    %v2301 = vadd.f32 %v325, %v2293
    %v2302 = vadd.f32 %v330, %v2294
    %v2303 = vadd.f32 %v335, %v2295
    %v2304 = vadd.f32 %v340, %v2296
    %v2305 = vadd.f32 %v345, %v2297
    %v2306 = vadd.f32 %v350, %v2298
    %v2307 = vtanh.pop %v2299
    %v2308 = vtanh.pop %v2300
    %v2309 = vtanh.pop %v2301
    %v2310 = vtanh.pop %v2302
    %v2311 = vtanh.pop %v2303
    %v2312 = vtanh.pop %v2304
    %v2313 = vtanh.pop %v2305
    %v2314 = vtanh.pop %v2306
    %v2315 = vsub.f32 1.0, %v2260
    %v2316 = vsub.f32 1.0, %v2262
    %v2317 = vsub.f32 1.0, %v2264
    %v2318 = vsub.f32 1.0, %v2266
    %v2319 = vsub.f32 1.0, %v2268
    %v2320 = vsub.f32 1.0, %v2270
    %v2321 = vsub.f32 1.0, %v2272
    %v2322 = vsub.f32 1.0, %v2274
    %v2323 = vmul.f32 %v2315, %v2307
    %v2324 = vmul.f32 %v2316, %v2308
    %v2325 = vmul.f32 %v2317, %v2309
    %v2326 = vmul.f32 %v2318, %v2310
    %v2327 = vmul.f32 %v2319, %v2311
    %v2328 = vmul.f32 %v2320, %v2312
    %v2329 = vmul.f32 %v2321, %v2313
    %v2330 = vmul.f32 %v2322, %v2314
    %v2331 = vrot.slane %v1959, 7
    %v2332 = vrot.slane %v1960, 7
    %v2333 = vrot.slane %v1961, 7
    %v2334 = vrot.slane %v1962, 7
    %v2335 = vrot.slane %v1964, 7
    %v2336 = vrot.slane %v1965, 7
    %v2337 = vrot.slane %v1966, 7
    %v2346 = vmul.f32 %v2260, %v2331
    %v2347 = vmul.f32 %v2262, %v2332
    %v2348 = vmul.f32 %v2264, %v2333
    %v2349 = vmul.f32 %v2266, %v2334
    %v2350 = vmul.f32 %v2268, %v1981
    %v2351 = vmul.f32 %v2270, %v2335
    %v2352 = vmul.f32 %v2272, %v2336
    %v2353 = vmul.f32 %v2274, %v2337
    %v2354 = vadd.f32 %v2323, %v2346
    %v2355 = vadd.f32 %v2324, %v2347
    %v2356 = vadd.f32 %v2325, %v2348
    %v2357 = vadd.f32 %v2326, %v2349
    %v2358 = vadd.f32 %v2327, %v2350
    %v2359 = vadd.f32 %v2328, %v2351
    %v2360 = vadd.f32 %v2329, %v2352
    %v2361 = vadd.f32 %v2330, %v2353
    %v2370 = vrot.slane %v2354, 4
    %v2371 = vrot.slane %v2355, 3
    %v2372 = vsel %vm784, %v2371, %v2370
    %v2373 = vrot.slane %v2356, 2
    %v2374 = vsel %vm787, %v2373, %v2372
    %v2375 = vrot.slane %v2357, 1
    %v2376 = vsel %vm790, %v2375, %v2374
    %v2377 = vsel %vm793, %v2358, %v2376
    %v2378 = vrot.slane %v2359, 7
    %v2379 = vsel %vm796, %v2378, %v2377
    %v2380 = vrot.slane %v2360, 6
    %v2381 = vsel %vm799, %v2380, %v2379
    %v2382 = vrot.slane %v2361, 5
    %v2383 = vsel %vm802, %v2382, %v2381
    %2385 = vmatprep.subr.mxu0 %v354
    %2386 = vmatpush1.msra.mxu0 %v353
    %2387 = vmatprep.subr.mxu0 %v357
    %2388 = vmatpush1.msra.mxu0 %v356
    %2389 = vmatprep.subr.mxu0 %v360
    %2390 = vmatpush1.msra.mxu0 %v359
    %2391 = vmatprep.subr.mxu0 %v363
    %2392 = vmatpush1.msra.mxu0 %v362
    %2393 = vmatprep.subr.mxu0 %v366
    %2394 = vmatpush1.msra.mxu0 %v365
    %2395 = vmatprep.subr.mxu0 %v369
    %2396 = vmatpush1.msra.mxu0 %v368
    %2397 = vmatprep.subr.mxu0 %v372
    %2398 = vmatpush1.msra.mxu0 %v371
    %2399 = vmatprep.subr.mxu0 %v375
    %2400 = vmatpush1.msra.mxu0 %v374
    %2401 = vmatprep.subr.mxu0 %v378
    %2402 = vmatpush1.msra.mxu0 %v377
    %2403 = vmatprep.subr.mxu0 %v381
    %2404 = vmatpush1.msra.mxu0 %v380
    %2405 = vmatprep.subr.mxu0 %v384
    %2406 = vmatpush1.msra.mxu0 %v383
    %2407 = vmatprep.subr.mxu0 %v387
    %2408 = vmatpush1.msra.mxu0 %v386
    %2409 = vmatprep.subr.mxu0 %v390
    %2410 = vmatpush1.msra.mxu0 %v389
    %2411 = vmatprep.subr.mxu0 %v393
    %2412 = vmatpush1.msra.mxu0 %v392
    %2413 = vmatprep.subr.mxu0 %v396
    %2414 = vmatpush1.msra.mxu0 %v395
    %2415 = vmatprep.subr.mxu0 %v399
    %2416 = vmatpush1.msra.mxu0 %v398
    %2417 = vmatprep.subr.mxu0 0.0
    %2418 = vmatpush1.msra.mxu0 0.0
    %2419 = vmatprep.subr.mxu0 0.0
    %2420 = vmatpush1.msra.mxu0 0.0
    %2421 = vmatprep.subr.mxu0 0.0
    %2422 = vmatpush1.msra.mxu0 0.0
    %2423 = vmatprep.subr.mxu0 0.0
    %2424 = vmatpush1.msra.mxu0 0.0
    %2425 = vmatprep.subr.mxu0 0.0
    %2426 = vmatpush1.msra.mxu0 0.0
    %2427 = vmatprep.subr.mxu0 0.0
    %2428 = vmatpush1.msra.mxu0 0.0
    %2429 = vmatprep.subr.mxu0 0.0
    %2430 = vmatpush1.msra.mxu0 0.0
    %2431 = vmatprep.subr.mxu0 0.0
    %2432 = vmatpush1.msra.mxu0 0.0
    %2433 = vmatprep.subr.mxu0 0.0
    %2434 = vmatpush1.msra.mxu0 0.0
    %2435 = vmatprep.subr.mxu0 0.0
    %2436 = vmatpush1.msra.mxu0 0.0
    %2437 = vmatprep.subr.mxu0 0.0
    %2438 = vmatpush1.msra.mxu0 0.0
    %2439 = vmatprep.subr.mxu0 0.0
    %2440 = vmatpush1.msra.mxu0 0.0
    %2441 = vmatprep.subr.mxu0 0.0
    %2442 = vmatpush1.msra.mxu0 0.0
    %2443 = vmatprep.subr.mxu0 0.0
    %2444 = vmatpush1.msra.mxu0 0.0
    %2445 = vmatprep.subr.mxu0 0.0
    %2446 = vmatpush1.msra.mxu0 0.0
    %2447 = vmatprep.subr.mxu0 0.0
    %2448 = vmatpush1.msra.mxu0 0.0
    %2449 = vmatprep.mubr.f32.mxu0 0.0
    %2450 = vmatmul.mubr.f32.gmra.mrb[0].mxu0 %v2383
    %v2451 = vpop.f32.mrb[0].mxu0
    %v2452 = vadd.f32 %v406, %v2451
    %v2453 = vpop.f32.mrb[0].mxu0
    %v2454 = vadd.f32 %v410, %v2453
    %2455 = vdwg.mxu0
    %2456 = vmatprep.subr.mxu0 0.0
    %2457 = vmatpush1.msra.mxu0 %v355
    %2458 = vmatprep.subr.mxu0 0.0
    %2459 = vmatpush1.msra.mxu0 %v358
    %2460 = vmatprep.subr.mxu0 0.0
    %2461 = vmatpush1.msra.mxu0 %v361
    %2462 = vmatprep.subr.mxu0 0.0
    %2463 = vmatpush1.msra.mxu0 %v364
    %2464 = vmatprep.subr.mxu0 0.0
    %2465 = vmatpush1.msra.mxu0 %v367
    %2466 = vmatprep.subr.mxu0 0.0
    %2467 = vmatpush1.msra.mxu0 %v370
    %2468 = vmatprep.subr.mxu0 0.0
    %2469 = vmatpush1.msra.mxu0 %v373
    %2470 = vmatprep.subr.mxu0 0.0
    %2471 = vmatpush1.msra.mxu0 %v376
    %2472 = vmatprep.subr.mxu0 0.0
    %2473 = vmatpush1.msra.mxu0 %v379
    %2474 = vmatprep.subr.mxu0 0.0
    %2475 = vmatpush1.msra.mxu0 %v382
    %2476 = vmatprep.subr.mxu0 0.0
    %2477 = vmatpush1.msra.mxu0 %v385
    %2478 = vmatprep.subr.mxu0 0.0
    %2479 = vmatpush1.msra.mxu0 %v388
    %2480 = vmatprep.subr.mxu0 0.0
    %2481 = vmatpush1.msra.mxu0 %v391
    %2482 = vmatprep.subr.mxu0 0.0
    %2483 = vmatpush1.msra.mxu0 %v394
    %2484 = vmatprep.subr.mxu0 0.0
    %2485 = vmatpush1.msra.mxu0 %v397
    %2486 = vmatprep.subr.mxu0 0.0
    %2487 = vmatpush1.msra.mxu0 %v400
    %2488 = vmatprep.subr.mxu0 0.0
    %2489 = vmatpush1.msra.mxu0 0.0
    %2490 = vmatprep.subr.mxu0 0.0
    %2491 = vmatpush1.msra.mxu0 0.0
    %2492 = vmatprep.subr.mxu0 0.0
    %2493 = vmatpush1.msra.mxu0 0.0
    %2494 = vmatprep.subr.mxu0 0.0
    %2495 = vmatpush1.msra.mxu0 0.0
    %2496 = vmatprep.subr.mxu0 0.0
    %2497 = vmatpush1.msra.mxu0 0.0
    %2498 = vmatprep.subr.mxu0 0.0
    %2499 = vmatpush1.msra.mxu0 0.0
    %2500 = vmatprep.subr.mxu0 0.0
    %2501 = vmatpush1.msra.mxu0 0.0
    %2502 = vmatprep.subr.mxu0 0.0
    %2503 = vmatpush1.msra.mxu0 0.0
    %2504 = vmatprep.subr.mxu0 0.0
    %2505 = vmatpush1.msra.mxu0 0.0
    %2506 = vmatprep.subr.mxu0 0.0
    %2507 = vmatpush1.msra.mxu0 0.0
    %2508 = vmatprep.subr.mxu0 0.0
    %2509 = vmatpush1.msra.mxu0 0.0
    %2510 = vmatprep.subr.mxu0 0.0
    %2511 = vmatpush1.msra.mxu0 0.0
    %2512 = vmatprep.subr.mxu0 0.0
    %2513 = vmatpush1.msra.mxu0 0.0
    %2514 = vmatprep.subr.mxu0 0.0
    %2515 = vmatpush1.msra.mxu0 0.0
    %2516 = vmatprep.subr.mxu0 0.0
    %2517 = vmatpush1.msra.mxu0 0.0
    %2518 = vmatprep.subr.mxu0 0.0
    %2519 = vmatpush1.msra.mxu0 0.0
    %2520 = vmatprep.mubr.f32.mxu0 0.0
    %2521 = vmatmul.mubr.f32.gmra.mrb[0].mxu0 %v2383
    %v2522 = vpop.f32.mrb[0].mxu0
    %v2523 = vadd.f32 %v414, %v2522
    %v2524 = vpop.f32.mrb[0].mxu0
    %2525 = vdwg.mxu0
    %v2527 = vrot.slane %v2452, 3
    %v2528 = vrot.slane %v2452, 4
    %v2529 = vrot.slane %v2452, 5
    %v2530 = vrot.slane %v2452, 6
    %v2531 = vrot.slane %v2452, 7
    %v2532 = vrot.slane %v2452, 1
    %v2533 = vrot.slane %v2452, 2
    %v2542 = vadd.f32 %v202, %v2527
    %v2543 = vadd.f32 %v208, %v2528
    %v2544 = vadd.f32 %v214, %v2529
    %v2545 = vadd.f32 %v220, %v2530
    %v2546 = vadd.f32 %v226, %v2531
    %v2547 = vadd.f32 %v232, %v2452
    %v2548 = vadd.f32 %v238, %v2532
    %v2549 = vadd.f32 %v244, %v2533
    %v2550 = vxor.u32 %v2542, 2147483648
    %v2551 = vxor.u32 %v2543, 2147483648
    %v2552 = vxor.u32 %v2544, 2147483648
    %v2553 = vxor.u32 %v2545, 2147483648
    %v2554 = vxor.u32 %v2546, 2147483648
    %v2555 = vxor.u32 %v2547, 2147483648
    %v2556 = vxor.u32 %v2548, 2147483648
    %v2557 = vxor.u32 %v2549, 2147483648
    %v2558 = vmul.f32 %v2550, 1.442695
    %v2559 = vpow.pop %v2558
    %v2560 = vmul.f32 %v2551, 1.442695
    %v2561 = vpow.pop %v2560
    %v2562 = vmul.f32 %v2552, 1.442695
    %v2563 = vpow.pop %v2562
    %v2564 = vmul.f32 %v2553, 1.442695
    %v2565 = vpow.pop %v2564
    %v2566 = vmul.f32 %v2554, 1.442695
    %v2567 = vpow.pop %v2566
    %v2568 = vmul.f32 %v2555, 1.442695
    %v2569 = vpow.pop %v2568
    %v2570 = vmul.f32 %v2556, 1.442695
    %v2571 = vpow.pop %v2570
    %v2572 = vmul.f32 %v2557, 1.442695
    %v2573 = vpow.pop %v2572
    %v2574 = vadd.f32 %v2559, 1.0
    %v2575 = vadd.f32 %v2561, 1.0
    %v2576 = vadd.f32 %v2563, 1.0
    %v2577 = vadd.f32 %v2565, 1.0
    %v2578 = vadd.f32 %v2567, 1.0
    %v2579 = vadd.f32 %v2569, 1.0
    %v2580 = vadd.f32 %v2571, 1.0
    %v2581 = vadd.f32 %v2573, 1.0
    %v2582 = vrcp.pop %v2574
    %v2583 = vmul.f32 1.0, %v2582
    %v2584 = vrcp.pop %v2575
    %v2585 = vmul.f32 1.0, %v2584
    %v2586 = vrcp.pop %v2576
    %v2587 = vmul.f32 1.0, %v2586
    %v2588 = vrcp.pop %v2577
    %v2589 = vmul.f32 1.0, %v2588
    %v2590 = vrcp.pop %v2578
    %v2591 = vmul.f32 1.0, %v2590
    %v2592 = vrcp.pop %v2579
    %v2593 = vmul.f32 1.0, %v2592
    %v2594 = vrcp.pop %v2580
    %v2595 = vmul.f32 1.0, %v2594
    %v2596 = vrcp.pop %v2581
    %v2597 = vmul.f32 1.0, %v2596
    %v2599 = vrot.slane %v2454, 3
    %v2600 = vrot.slane %v2454, 4
    %v2601 = vrot.slane %v2454, 5
    %v2602 = vrot.slane %v2454, 6
    %v2603 = vrot.slane %v2454, 7
    %v2604 = vrot.slane %v2454, 1
    %v2605 = vrot.slane %v2454, 2
    %v2614 = vadd.f32 %v204, %v2599
    %v2615 = vadd.f32 %v210, %v2600
    %v2616 = vadd.f32 %v216, %v2601
    %v2617 = vadd.f32 %v222, %v2602
    %v2618 = vadd.f32 %v228, %v2603
    %v2619 = vadd.f32 %v234, %v2454
    %v2620 = vadd.f32 %v240, %v2604
    %v2621 = vadd.f32 %v246, %v2605
    %v2622 = vxor.u32 %v2614, 2147483648
    %v2623 = vxor.u32 %v2615, 2147483648
    %v2624 = vxor.u32 %v2616, 2147483648
    %v2625 = vxor.u32 %v2617, 2147483648
    %v2626 = vxor.u32 %v2618, 2147483648
    %v2627 = vxor.u32 %v2619, 2147483648
    %v2628 = vxor.u32 %v2620, 2147483648
    %v2629 = vxor.u32 %v2621, 2147483648
    %v2630 = vmul.f32 %v2622, 1.442695
    %v2631 = vpow.pop %v2630
    %v2632 = vmul.f32 %v2623, 1.442695
    %v2633 = vpow.pop %v2632
    %v2634 = vmul.f32 %v2624, 1.442695
    %v2635 = vpow.pop %v2634
    %v2636 = vmul.f32 %v2625, 1.442695
    %v2637 = vpow.pop %v2636
    %v2638 = vmul.f32 %v2626, 1.442695
    %v2639 = vpow.pop %v2638
    %v2640 = vmul.f32 %v2627, 1.442695
    %v2641 = vpow.pop %v2640
    %v2642 = vmul.f32 %v2628, 1.442695
    %v2643 = vpow.pop %v2642
    %v2644 = vmul.f32 %v2629, 1.442695
    %v2645 = vpow.pop %v2644
    %v2646 = vadd.f32 %v2631, 1.0
    %v2647 = vadd.f32 %v2633, 1.0
    %v2648 = vadd.f32 %v2635, 1.0
    %v2649 = vadd.f32 %v2637, 1.0
    %v2650 = vadd.f32 %v2639, 1.0
    %v2651 = vadd.f32 %v2641, 1.0
    %v2652 = vadd.f32 %v2643, 1.0
    %v2653 = vadd.f32 %v2645, 1.0
    %v2654 = vrcp.pop %v2646
    %v2655 = vmul.f32 1.0, %v2654
    %v2656 = vrcp.pop %v2647
    %v2657 = vmul.f32 1.0, %v2656
    %v2658 = vrcp.pop %v2648
    %v2659 = vmul.f32 1.0, %v2658
    %v2660 = vrcp.pop %v2649
    %v2661 = vmul.f32 1.0, %v2660
    %v2662 = vrcp.pop %v2650
    %v2663 = vmul.f32 1.0, %v2662
    %v2664 = vrcp.pop %v2651
    %v2665 = vmul.f32 1.0, %v2664
    %v2666 = vrcp.pop %v2652
    %v2667 = vmul.f32 1.0, %v2666
    %v2668 = vrcp.pop %v2653
    %v2669 = vmul.f32 1.0, %v2668
    %v2671 = vrot.slane %v2523, 3
    %v2672 = vrot.slane %v2523, 4
    %v2673 = vrot.slane %v2523, 5
    %v2674 = vrot.slane %v2523, 6
    %v2675 = vrot.slane %v2523, 7
    %v2676 = vrot.slane %v2523, 1
    %v2677 = vrot.slane %v2523, 2
    %v2686 = vmul.f32 %v2583, %v2671
    %v2687 = vmul.f32 %v2585, %v2672
    %v2688 = vmul.f32 %v2587, %v2673
    %v2689 = vmul.f32 %v2589, %v2674
    %v2690 = vmul.f32 %v2591, %v2675
    %v2691 = vmul.f32 %v2593, %v2523
    %v2692 = vmul.f32 %v2595, %v2676
    %v2693 = vmul.f32 %v2597, %v2677
    %v2694 = vadd.f32 %v315, %v2686
    %v2695 = vadd.f32 %v320, %v2687
    %v2696 = vadd.f32 %v325, %v2688
    %v2697 = vadd.f32 %v330, %v2689
    %v2698 = vadd.f32 %v335, %v2690
    %v2699 = vadd.f32 %v340, %v2691
    %v2700 = vadd.f32 %v345, %v2692
    %v2701 = vadd.f32 %v350, %v2693
    %v2702 = vtanh.pop %v2694
    %v2703 = vtanh.pop %v2695
    %v2704 = vtanh.pop %v2696
    %v2705 = vtanh.pop %v2697
    %v2706 = vtanh.pop %v2698
    %v2707 = vtanh.pop %v2699
    %v2708 = vtanh.pop %v2700
    %v2709 = vtanh.pop %v2701
    %v2710 = vsub.f32 1.0, %v2655
    %v2711 = vsub.f32 1.0, %v2657
    %v2712 = vsub.f32 1.0, %v2659
    %v2713 = vsub.f32 1.0, %v2661
    %v2714 = vsub.f32 1.0, %v2663
    %v2715 = vsub.f32 1.0, %v2665
    %v2716 = vsub.f32 1.0, %v2667
    %v2717 = vsub.f32 1.0, %v2669
    %v2718 = vmul.f32 %v2710, %v2702
    %v2719 = vmul.f32 %v2711, %v2703
    %v2720 = vmul.f32 %v2712, %v2704
    %v2721 = vmul.f32 %v2713, %v2705
    %v2722 = vmul.f32 %v2714, %v2706
    %v2723 = vmul.f32 %v2715, %v2707
    %v2724 = vmul.f32 %v2716, %v2708
    %v2725 = vmul.f32 %v2717, %v2709
    %v2726 = vrot.slane %v2354, 7
    %v2727 = vrot.slane %v2355, 7
    %v2728 = vrot.slane %v2356, 7
    %v2729 = vrot.slane %v2357, 7
    %v2730 = vrot.slane %v2358, 7
    %v2731 = vrot.slane %v2360, 7
    %v2732 = vrot.slane %v2361, 7
    %v2741 = vmul.f32 %v2655, %v2726
    %v2742 = vmul.f32 %v2657, %v2727
    %v2743 = vmul.f32 %v2659, %v2728
    %v2744 = vmul.f32 %v2661, %v2729
    %v2745 = vmul.f32 %v2663, %v2730
    %v2746 = vmul.f32 %v2665, %v2378
    %v2747 = vmul.f32 %v2667, %v2731
    %v2748 = vmul.f32 %v2669, %v2732
    %v2749 = vadd.f32 %v2718, %v2741
    %v2750 = vadd.f32 %v2719, %v2742
    %v2751 = vadd.f32 %v2720, %v2743
    %v2752 = vadd.f32 %v2721, %v2744
    %v2753 = vadd.f32 %v2722, %v2745
    %v2754 = vadd.f32 %v2723, %v2746
    %v2755 = vadd.f32 %v2724, %v2747
    %v2756 = vadd.f32 %v2725, %v2748
    %v2765 = vrot.slane %v2749, 5
    %v2766 = vrot.slane %v2750, 4
    %v2767 = vsel %vm784, %v2766, %v2765
    %v2768 = vrot.slane %v2751, 3
    %v2769 = vsel %vm787, %v2768, %v2767
    %v2770 = vrot.slane %v2752, 2
    %v2771 = vsel %vm790, %v2770, %v2769
    %v2772 = vrot.slane %v2753, 1
    %v2773 = vsel %vm793, %v2772, %v2771
    %v2774 = vsel %vm796, %v2754, %v2773
    %v2775 = vrot.slane %v2755, 7
    %v2776 = vsel %vm799, %v2775, %v2774
    %v2777 = vrot.slane %v2756, 6
    %v2778 = vsel %vm802, %v2777, %v2776
    %2780 = vmatprep.subr.mxu0 %v354
    %2781 = vmatpush1.msra.mxu0 %v353
    %2782 = vmatprep.subr.mxu0 %v357
    %2783 = vmatpush1.msra.mxu0 %v356
    %2784 = vmatprep.subr.mxu0 %v360
    %2785 = vmatpush1.msra.mxu0 %v359
    %2786 = vmatprep.subr.mxu0 %v363
    %2787 = vmatpush1.msra.mxu0 %v362
    %2788 = vmatprep.subr.mxu0 %v366
    %2789 = vmatpush1.msra.mxu0 %v365
    %2790 = vmatprep.subr.mxu0 %v369
    %2791 = vmatpush1.msra.mxu0 %v368
    %2792 = vmatprep.subr.mxu0 %v372
    %2793 = vmatpush1.msra.mxu0 %v371
    %2794 = vmatprep.subr.mxu0 %v375
    %2795 = vmatpush1.msra.mxu0 %v374
    %2796 = vmatprep.subr.mxu0 %v378
    %2797 = vmatpush1.msra.mxu0 %v377
    %2798 = vmatprep.subr.mxu0 %v381
    %2799 = vmatpush1.msra.mxu0 %v380
    %2800 = vmatprep.subr.mxu0 %v384
    %2801 = vmatpush1.msra.mxu0 %v383
    %2802 = vmatprep.subr.mxu0 %v387
    %2803 = vmatpush1.msra.mxu0 %v386
    %2804 = vmatprep.subr.mxu0 %v390
    %2805 = vmatpush1.msra.mxu0 %v389
    %2806 = vmatprep.subr.mxu0 %v393
    %2807 = vmatpush1.msra.mxu0 %v392
    %2808 = vmatprep.subr.mxu0 %v396
    %2809 = vmatpush1.msra.mxu0 %v395
    %2810 = vmatprep.subr.mxu0 %v399
    %2811 = vmatpush1.msra.mxu0 %v398
    %2812 = vmatprep.subr.mxu0 0.0
    %2813 = vmatpush1.msra.mxu0 0.0
    %2814 = vmatprep.subr.mxu0 0.0
    %2815 = vmatpush1.msra.mxu0 0.0
    %2816 = vmatprep.subr.mxu0 0.0
    %2817 = vmatpush1.msra.mxu0 0.0
    %2818 = vmatprep.subr.mxu0 0.0
    %2819 = vmatpush1.msra.mxu0 0.0
    %2820 = vmatprep.subr.mxu0 0.0
    %2821 = vmatpush1.msra.mxu0 0.0
    %2822 = vmatprep.subr.mxu0 0.0
    %2823 = vmatpush1.msra.mxu0 0.0
    %2824 = vmatprep.subr.mxu0 0.0
    %2825 = vmatpush1.msra.mxu0 0.0
    %2826 = vmatprep.subr.mxu0 0.0
    %2827 = vmatpush1.msra.mxu0 0.0
    %2828 = vmatprep.subr.mxu0 0.0
    %2829 = vmatpush1.msra.mxu0 0.0
    %2830 = vmatprep.subr.mxu0 0.0
    %2831 = vmatpush1.msra.mxu0 0.0
    %2832 = vmatprep.subr.mxu0 0.0
    %2833 = vmatpush1.msra.mxu0 0.0
    %2834 = vmatprep.subr.mxu0 0.0
    %2835 = vmatpush1.msra.mxu0 0.0
    %2836 = vmatprep.subr.mxu0 0.0
    %2837 = vmatpush1.msra.mxu0 0.0
    %2838 = vmatprep.subr.mxu0 0.0
    %2839 = vmatpush1.msra.mxu0 0.0
    %2840 = vmatprep.subr.mxu0 0.0
    %2841 = vmatpush1.msra.mxu0 0.0
    %2842 = vmatprep.subr.mxu0 0.0
    %2843 = vmatpush1.msra.mxu0 0.0
    %2844 = vmatprep.mubr.f32.mxu0 0.0
    %2845 = vmatmul.mubr.f32.gmra.mrb[0].mxu0 %v2778
    %v2846 = vpop.f32.mrb[0].mxu0
    %v2847 = vadd.f32 %v406, %v2846
    %v2848 = vpop.f32.mrb[0].mxu0
    %v2849 = vadd.f32 %v410, %v2848
    %2850 = vdwg.mxu0
    %2851 = vmatprep.subr.mxu0 0.0
    %2852 = vmatpush1.msra.mxu0 %v355
    %2853 = vmatprep.subr.mxu0 0.0
    %2854 = vmatpush1.msra.mxu0 %v358
    %2855 = vmatprep.subr.mxu0 0.0
    %2856 = vmatpush1.msra.mxu0 %v361
    %2857 = vmatprep.subr.mxu0 0.0
    %2858 = vmatpush1.msra.mxu0 %v364
    %2859 = vmatprep.subr.mxu0 0.0
    %2860 = vmatpush1.msra.mxu0 %v367
    %2861 = vmatprep.subr.mxu0 0.0
    %2862 = vmatpush1.msra.mxu0 %v370
    %2863 = vmatprep.subr.mxu0 0.0
    %2864 = vmatpush1.msra.mxu0 %v373
    %2865 = vmatprep.subr.mxu0 0.0
    %2866 = vmatpush1.msra.mxu0 %v376
    %2867 = vmatprep.subr.mxu0 0.0
    %2868 = vmatpush1.msra.mxu0 %v379
    %2869 = vmatprep.subr.mxu0 0.0
    %2870 = vmatpush1.msra.mxu0 %v382
    %2871 = vmatprep.subr.mxu0 0.0
    %2872 = vmatpush1.msra.mxu0 %v385
    %2873 = vmatprep.subr.mxu0 0.0
    %2874 = vmatpush1.msra.mxu0 %v388
    %2875 = vmatprep.subr.mxu0 0.0
    %2876 = vmatpush1.msra.mxu0 %v391
    %2877 = vmatprep.subr.mxu0 0.0
    %2878 = vmatpush1.msra.mxu0 %v394
    %2879 = vmatprep.subr.mxu0 0.0
    %2880 = vmatpush1.msra.mxu0 %v397
    %2881 = vmatprep.subr.mxu0 0.0
    %2882 = vmatpush1.msra.mxu0 %v400
    %2883 = vmatprep.subr.mxu0 0.0
    %2884 = vmatpush1.msra.mxu0 0.0
    %2885 = vmatprep.subr.mxu0 0.0
    %2886 = vmatpush1.msra.mxu0 0.0
    %2887 = vmatprep.subr.mxu0 0.0
    %2888 = vmatpush1.msra.mxu0 0.0
    %2889 = vmatprep.subr.mxu0 0.0
    %2890 = vmatpush1.msra.mxu0 0.0
    %2891 = vmatprep.subr.mxu0 0.0
    %2892 = vmatpush1.msra.mxu0 0.0
    %2893 = vmatprep.subr.mxu0 0.0
    %2894 = vmatpush1.msra.mxu0 0.0
    %2895 = vmatprep.subr.mxu0 0.0
    %2896 = vmatpush1.msra.mxu0 0.0
    %2897 = vmatprep.subr.mxu0 0.0
    %2898 = vmatpush1.msra.mxu0 0.0
    %2899 = vmatprep.subr.mxu0 0.0
    %2900 = vmatpush1.msra.mxu0 0.0
    %2901 = vmatprep.subr.mxu0 0.0
    %2902 = vmatpush1.msra.mxu0 0.0
    %2903 = vmatprep.subr.mxu0 0.0
    %2904 = vmatpush1.msra.mxu0 0.0
    %2905 = vmatprep.subr.mxu0 0.0
    %2906 = vmatpush1.msra.mxu0 0.0
    %2907 = vmatprep.subr.mxu0 0.0
    %2908 = vmatpush1.msra.mxu0 0.0
    %2909 = vmatprep.subr.mxu0 0.0
    %2910 = vmatpush1.msra.mxu0 0.0
    %2911 = vmatprep.subr.mxu0 0.0
    %2912 = vmatpush1.msra.mxu0 0.0
    %2913 = vmatprep.subr.mxu0 0.0
    %2914 = vmatpush1.msra.mxu0 0.0
    %2915 = vmatprep.mubr.f32.mxu0 0.0
    %2916 = vmatmul.mubr.f32.gmra.mrb[0].mxu0 %v2778
    %v2917 = vpop.f32.mrb[0].mxu0
    %v2918 = vadd.f32 %v414, %v2917
    %v2919 = vpop.f32.mrb[0].mxu0
    %2920 = vdwg.mxu0
    %v2922 = vrot.slane %v2847, 2
    %v2923 = vrot.slane %v2847, 3
    %v2924 = vrot.slane %v2847, 4
    %v2925 = vrot.slane %v2847, 5
    %v2926 = vrot.slane %v2847, 6
    %v2927 = vrot.slane %v2847, 7
    %v2928 = vrot.slane %v2847, 1
    %v2937 = vadd.f32 %v202, %v2922
    %v2938 = vadd.f32 %v208, %v2923
    %v2939 = vadd.f32 %v214, %v2924
    %v2940 = vadd.f32 %v220, %v2925
    %v2941 = vadd.f32 %v226, %v2926
    %v2942 = vadd.f32 %v232, %v2927
    %v2943 = vadd.f32 %v238, %v2847
    %v2944 = vadd.f32 %v244, %v2928
    %v2945 = vxor.u32 %v2937, 2147483648
    %v2946 = vxor.u32 %v2938, 2147483648
    %v2947 = vxor.u32 %v2939, 2147483648
    %v2948 = vxor.u32 %v2940, 2147483648
    %v2949 = vxor.u32 %v2941, 2147483648
    %v2950 = vxor.u32 %v2942, 2147483648
    %v2951 = vxor.u32 %v2943, 2147483648
    %v2952 = vxor.u32 %v2944, 2147483648
    %v2953 = vmul.f32 %v2945, 1.442695
    %v2954 = vpow.pop %v2953
    %v2955 = vmul.f32 %v2946, 1.442695
    %v2956 = vpow.pop %v2955
    %v2957 = vmul.f32 %v2947, 1.442695
    %v2958 = vpow.pop %v2957
    %v2959 = vmul.f32 %v2948, 1.442695
    %v2960 = vpow.pop %v2959
    %v2961 = vmul.f32 %v2949, 1.442695
    %v2962 = vpow.pop %v2961
    %v2963 = vmul.f32 %v2950, 1.442695
    %v2964 = vpow.pop %v2963
    %v2965 = vmul.f32 %v2951, 1.442695
    %v2966 = vpow.pop %v2965
    %v2967 = vmul.f32 %v2952, 1.442695
    %v2968 = vpow.pop %v2967
    %v2969 = vadd.f32 %v2954, 1.0
    %v2970 = vadd.f32 %v2956, 1.0
    %v2971 = vadd.f32 %v2958, 1.0
    %v2972 = vadd.f32 %v2960, 1.0
    %v2973 = vadd.f32 %v2962, 1.0
    %v2974 = vadd.f32 %v2964, 1.0
    %v2975 = vadd.f32 %v2966, 1.0
    %v2976 = vadd.f32 %v2968, 1.0
    %v2977 = vrcp.pop %v2969
    %v2978 = vmul.f32 1.0, %v2977
    %v2979 = vrcp.pop %v2970
    %v2980 = vmul.f32 1.0, %v2979
    %v2981 = vrcp.pop %v2971
    %v2982 = vmul.f32 1.0, %v2981
    %v2983 = vrcp.pop %v2972
    %v2984 = vmul.f32 1.0, %v2983
    %v2985 = vrcp.pop %v2973
    %v2986 = vmul.f32 1.0, %v2985
    %v2987 = vrcp.pop %v2974
    %v2988 = vmul.f32 1.0, %v2987
    %v2989 = vrcp.pop %v2975
    %v2990 = vmul.f32 1.0, %v2989
    %v2991 = vrcp.pop %v2976
    %v2992 = vmul.f32 1.0, %v2991
    %v2994 = vrot.slane %v2849, 2
    %v2995 = vrot.slane %v2849, 3
    %v2996 = vrot.slane %v2849, 4
    %v2997 = vrot.slane %v2849, 5
    %v2998 = vrot.slane %v2849, 6
    %v2999 = vrot.slane %v2849, 7
    %v3000 = vrot.slane %v2849, 1
    %v3009 = vadd.f32 %v204, %v2994
    %v3010 = vadd.f32 %v210, %v2995
    %v3011 = vadd.f32 %v216, %v2996
    %v3012 = vadd.f32 %v222, %v2997
    %v3013 = vadd.f32 %v228, %v2998
    %v3014 = vadd.f32 %v234, %v2999
    %v3015 = vadd.f32 %v240, %v2849
    %v3016 = vadd.f32 %v246, %v3000
    %v3017 = vxor.u32 %v3009, 2147483648
    %v3018 = vxor.u32 %v3010, 2147483648
    %v3019 = vxor.u32 %v3011, 2147483648
    %v3020 = vxor.u32 %v3012, 2147483648
    %v3021 = vxor.u32 %v3013, 2147483648
    %v3022 = vxor.u32 %v3014, 2147483648
    %v3023 = vxor.u32 %v3015, 2147483648
    %v3024 = vxor.u32 %v3016, 2147483648
    %v3025 = vmul.f32 %v3017, 1.442695
    %v3026 = vpow.pop %v3025
    %v3027 = vmul.f32 %v3018, 1.442695
    %v3028 = vpow.pop %v3027
    %v3029 = vmul.f32 %v3019, 1.442695
    %v3030 = vpow.pop %v3029
    %v3031 = vmul.f32 %v3020, 1.442695
    %v3032 = vpow.pop %v3031
    %v3033 = vmul.f32 %v3021, 1.442695
    %v3034 = vpow.pop %v3033
    %v3035 = vmul.f32 %v3022, 1.442695
    %v3036 = vpow.pop %v3035
    %v3037 = vmul.f32 %v3023, 1.442695
    %v3038 = vpow.pop %v3037
    %v3039 = vmul.f32 %v3024, 1.442695
    %v3040 = vpow.pop %v3039
    %v3041 = vadd.f32 %v3026, 1.0
    %v3042 = vadd.f32 %v3028, 1.0
    %v3043 = vadd.f32 %v3030, 1.0
    %v3044 = vadd.f32 %v3032, 1.0
    %v3045 = vadd.f32 %v3034, 1.0
    %v3046 = vadd.f32 %v3036, 1.0
    %v3047 = vadd.f32 %v3038, 1.0
    %v3048 = vadd.f32 %v3040, 1.0
    %v3049 = vrcp.pop %v3041
    %v3050 = vmul.f32 1.0, %v3049
    %v3051 = vrcp.pop %v3042
    %v3052 = vmul.f32 1.0, %v3051
    %v3053 = vrcp.pop %v3043
    %v3054 = vmul.f32 1.0, %v3053
    %v3055 = vrcp.pop %v3044
    %v3056 = vmul.f32 1.0, %v3055
    %v3057 = vrcp.pop %v3045
    %v3058 = vmul.f32 1.0, %v3057
    %v3059 = vrcp.pop %v3046
    %v3060 = vmul.f32 1.0, %v3059
    %v3061 = vrcp.pop %v3047
    %v3062 = vmul.f32 1.0, %v3061
    %v3063 = vrcp.pop %v3048
    %v3064 = vmul.f32 1.0, %v3063
    %v3066 = vrot.slane %v2918, 2
    %v3067 = vrot.slane %v2918, 3
    %v3068 = vrot.slane %v2918, 4
    %v3069 = vrot.slane %v2918, 5
    %v3070 = vrot.slane %v2918, 6
    %v3071 = vrot.slane %v2918, 7
    %v3072 = vrot.slane %v2918, 1
    %v3081 = vmul.f32 %v2978, %v3066
    %v3082 = vmul.f32 %v2980, %v3067
    %v3083 = vmul.f32 %v2982, %v3068
    %v3084 = vmul.f32 %v2984, %v3069
    %v3085 = vmul.f32 %v2986, %v3070
    %v3086 = vmul.f32 %v2988, %v3071
    %v3087 = vmul.f32 %v2990, %v2918
    %v3088 = vmul.f32 %v2992, %v3072
    %v3089 = vadd.f32 %v315, %v3081
    %v3090 = vadd.f32 %v320, %v3082
    %v3091 = vadd.f32 %v325, %v3083
    %v3092 = vadd.f32 %v330, %v3084
    %v3093 = vadd.f32 %v335, %v3085
    %v3094 = vadd.f32 %v340, %v3086
    %v3095 = vadd.f32 %v345, %v3087
    %v3096 = vadd.f32 %v350, %v3088
    %v3097 = vtanh.pop %v3089
    %v3098 = vtanh.pop %v3090
    %v3099 = vtanh.pop %v3091
    %v3100 = vtanh.pop %v3092
    %v3101 = vtanh.pop %v3093
    %v3102 = vtanh.pop %v3094
    %v3103 = vtanh.pop %v3095
    %v3104 = vtanh.pop %v3096
    %v3105 = vsub.f32 1.0, %v3050
    %v3106 = vsub.f32 1.0, %v3052
    %v3107 = vsub.f32 1.0, %v3054
    %v3108 = vsub.f32 1.0, %v3056
    %v3109 = vsub.f32 1.0, %v3058
    %v3110 = vsub.f32 1.0, %v3060
    %v3111 = vsub.f32 1.0, %v3062
    %v3112 = vsub.f32 1.0, %v3064
    %v3113 = vmul.f32 %v3105, %v3097
    %v3114 = vmul.f32 %v3106, %v3098
    %v3115 = vmul.f32 %v3107, %v3099
    %v3116 = vmul.f32 %v3108, %v3100
    %v3117 = vmul.f32 %v3109, %v3101
    %v3118 = vmul.f32 %v3110, %v3102
    %v3119 = vmul.f32 %v3111, %v3103
    %v3120 = vmul.f32 %v3112, %v3104
    %v3121 = vrot.slane %v2749, 7
    %v3122 = vrot.slane %v2750, 7
    %v3123 = vrot.slane %v2751, 7
    %v3124 = vrot.slane %v2752, 7
    %v3125 = vrot.slane %v2753, 7
    %v3126 = vrot.slane %v2754, 7
    %v3127 = vrot.slane %v2756, 7
    %v3136 = vmul.f32 %v3050, %v3121
    %v3137 = vmul.f32 %v3052, %v3122
    %v3138 = vmul.f32 %v3054, %v3123
    %v3139 = vmul.f32 %v3056, %v3124
    %v3140 = vmul.f32 %v3058, %v3125
    %v3141 = vmul.f32 %v3060, %v3126
    %v3142 = vmul.f32 %v3062, %v2775
    %v3143 = vmul.f32 %v3064, %v3127
    %v3144 = vadd.f32 %v3113, %v3136
    %v3145 = vadd.f32 %v3114, %v3137
    %v3146 = vadd.f32 %v3115, %v3138
    %v3147 = vadd.f32 %v3116, %v3139
    %v3148 = vadd.f32 %v3117, %v3140
    %v3149 = vadd.f32 %v3118, %v3141
    %v3150 = vadd.f32 %v3119, %v3142
    %v3151 = vadd.f32 %v3120, %v3143
    %v3160 = vrot.slane %v3144, 6
    %v3161 = vrot.slane %v3145, 5
    %v3162 = vsel %vm784, %v3161, %v3160
    %v3163 = vrot.slane %v3146, 4
    %v3164 = vsel %vm787, %v3163, %v3162
    %v3165 = vrot.slane %v3147, 3
    %v3166 = vsel %vm790, %v3165, %v3164
    %v3167 = vrot.slane %v3148, 2
    %v3168 = vsel %vm793, %v3167, %v3166
    %v3169 = vrot.slane %v3149, 1
    %v3170 = vsel %vm796, %v3169, %v3168
    %v3171 = vsel %vm799, %v3150, %v3170
    %v3172 = vrot.slane %v3151, 7
    %v3173 = vsel %vm802, %v3172, %v3171
    %3175 = vmatprep.subr.mxu0 %v354
    %3176 = vmatpush1.msra.mxu0 %v353
    %3177 = vmatprep.subr.mxu0 %v357
    %3178 = vmatpush1.msra.mxu0 %v356
    %3179 = vmatprep.subr.mxu0 %v360
    %3180 = vmatpush1.msra.mxu0 %v359
    %3181 = vmatprep.subr.mxu0 %v363
    %3182 = vmatpush1.msra.mxu0 %v362
    %3183 = vmatprep.subr.mxu0 %v366
    %3184 = vmatpush1.msra.mxu0 %v365
    %3185 = vmatprep.subr.mxu0 %v369
    %3186 = vmatpush1.msra.mxu0 %v368
    %3187 = vmatprep.subr.mxu0 %v372
    %3188 = vmatpush1.msra.mxu0 %v371
    %3189 = vmatprep.subr.mxu0 %v375
    %3190 = vmatpush1.msra.mxu0 %v374
    %3191 = vmatprep.subr.mxu0 %v378
    %3192 = vmatpush1.msra.mxu0 %v377
    %3193 = vmatprep.subr.mxu0 %v381
    %3194 = vmatpush1.msra.mxu0 %v380
    %3195 = vmatprep.subr.mxu0 %v384
    %3196 = vmatpush1.msra.mxu0 %v383
    %3197 = vmatprep.subr.mxu0 %v387
    %3198 = vmatpush1.msra.mxu0 %v386
    %3199 = vmatprep.subr.mxu0 %v390
    %3200 = vmatpush1.msra.mxu0 %v389
    %3201 = vmatprep.subr.mxu0 %v393
    %3202 = vmatpush1.msra.mxu0 %v392
    %3203 = vmatprep.subr.mxu0 %v396
    %3204 = vmatpush1.msra.mxu0 %v395
    %3205 = vmatprep.subr.mxu0 %v399
    %3206 = vmatpush1.msra.mxu0 %v398
    %3207 = vmatprep.subr.mxu0 0.0
    %3208 = vmatpush1.msra.mxu0 0.0
    %3209 = vmatprep.subr.mxu0 0.0
    %3210 = vmatpush1.msra.mxu0 0.0
    %3211 = vmatprep.subr.mxu0 0.0
    %3212 = vmatpush1.msra.mxu0 0.0
    %3213 = vmatprep.subr.mxu0 0.0
    %3214 = vmatpush1.msra.mxu0 0.0
    %3215 = vmatprep.subr.mxu0 0.0
    %3216 = vmatpush1.msra.mxu0 0.0
    %3217 = vmatprep.subr.mxu0 0.0
    %3218 = vmatpush1.msra.mxu0 0.0
    %3219 = vmatprep.subr.mxu0 0.0
    %3220 = vmatpush1.msra.mxu0 0.0
    %3221 = vmatprep.subr.mxu0 0.0
    %3222 = vmatpush1.msra.mxu0 0.0
    %3223 = vmatprep.subr.mxu0 0.0
    %3224 = vmatpush1.msra.mxu0 0.0
    %3225 = vmatprep.subr.mxu0 0.0
    %3226 = vmatpush1.msra.mxu0 0.0
    %3227 = vmatprep.subr.mxu0 0.0
    %3228 = vmatpush1.msra.mxu0 0.0
    %3229 = vmatprep.subr.mxu0 0.0
    %3230 = vmatpush1.msra.mxu0 0.0
    %3231 = vmatprep.subr.mxu0 0.0
    %3232 = vmatpush1.msra.mxu0 0.0
    %3233 = vmatprep.subr.mxu0 0.0
    %3234 = vmatpush1.msra.mxu0 0.0
    %3235 = vmatprep.subr.mxu0 0.0
    %3236 = vmatpush1.msra.mxu0 0.0
    %3237 = vmatprep.subr.mxu0 0.0
    %3238 = vmatpush1.msra.mxu0 0.0
    %3239 = vmatprep.mubr.f32.mxu0 0.0
    %3240 = vmatmul.mubr.f32.gmra.mrb[0].mxu0 %v3173
    %v3241 = vpop.f32.mrb[0].mxu0
    %v3242 = vadd.f32 %v406, %v3241
    %v3243 = vpop.f32.mrb[0].mxu0
    %v3244 = vadd.f32 %v410, %v3243
    %3245 = vdwg.mxu0
    %3246 = vmatprep.subr.mxu0 0.0
    %3247 = vmatpush1.msra.mxu0 %v355
    %3248 = vmatprep.subr.mxu0 0.0
    %3249 = vmatpush1.msra.mxu0 %v358
    %3250 = vmatprep.subr.mxu0 0.0
    %3251 = vmatpush1.msra.mxu0 %v361
    %3252 = vmatprep.subr.mxu0 0.0
    %3253 = vmatpush1.msra.mxu0 %v364
    %3254 = vmatprep.subr.mxu0 0.0
    %3255 = vmatpush1.msra.mxu0 %v367
    %3256 = vmatprep.subr.mxu0 0.0
    %3257 = vmatpush1.msra.mxu0 %v370
    %3258 = vmatprep.subr.mxu0 0.0
    %3259 = vmatpush1.msra.mxu0 %v373
    %3260 = vmatprep.subr.mxu0 0.0
    %3261 = vmatpush1.msra.mxu0 %v376
    %3262 = vmatprep.subr.mxu0 0.0
    %3263 = vmatpush1.msra.mxu0 %v379
    %3264 = vmatprep.subr.mxu0 0.0
    %3265 = vmatpush1.msra.mxu0 %v382
    %3266 = vmatprep.subr.mxu0 0.0
    %3267 = vmatpush1.msra.mxu0 %v385
    %3268 = vmatprep.subr.mxu0 0.0
    %3269 = vmatpush1.msra.mxu0 %v388
    %3270 = vmatprep.subr.mxu0 0.0
    %3271 = vmatpush1.msra.mxu0 %v391
    %3272 = vmatprep.subr.mxu0 0.0
    %3273 = vmatpush1.msra.mxu0 %v394
    %3274 = vmatprep.subr.mxu0 0.0
    %3275 = vmatpush1.msra.mxu0 %v397
    %3276 = vmatprep.subr.mxu0 0.0
    %3277 = vmatpush1.msra.mxu0 %v400
    %3278 = vmatprep.subr.mxu0 0.0
    %3279 = vmatpush1.msra.mxu0 0.0
    %3280 = vmatprep.subr.mxu0 0.0
    %3281 = vmatpush1.msra.mxu0 0.0
    %3282 = vmatprep.subr.mxu0 0.0
    %3283 = vmatpush1.msra.mxu0 0.0
    %3284 = vmatprep.subr.mxu0 0.0
    %3285 = vmatpush1.msra.mxu0 0.0
    %3286 = vmatprep.subr.mxu0 0.0
    %3287 = vmatpush1.msra.mxu0 0.0
    %3288 = vmatprep.subr.mxu0 0.0
    %3289 = vmatpush1.msra.mxu0 0.0
    %3290 = vmatprep.subr.mxu0 0.0
    %3291 = vmatpush1.msra.mxu0 0.0
    %3292 = vmatprep.subr.mxu0 0.0
    %3293 = vmatpush1.msra.mxu0 0.0
    %3294 = vmatprep.subr.mxu0 0.0
    %3295 = vmatpush1.msra.mxu0 0.0
    %3296 = vmatprep.subr.mxu0 0.0
    %3297 = vmatpush1.msra.mxu0 0.0
    %3298 = vmatprep.subr.mxu0 0.0
    %3299 = vmatpush1.msra.mxu0 0.0
    %3300 = vmatprep.subr.mxu0 0.0
    %3301 = vmatpush1.msra.mxu0 0.0
    %3302 = vmatprep.subr.mxu0 0.0
    %3303 = vmatpush1.msra.mxu0 0.0
    %3304 = vmatprep.subr.mxu0 0.0
    %3305 = vmatpush1.msra.mxu0 0.0
    %3306 = vmatprep.subr.mxu0 0.0
    %3307 = vmatpush1.msra.mxu0 0.0
    %3308 = vmatprep.subr.mxu0 0.0
    %3309 = vmatpush1.msra.mxu0 0.0
    %3310 = vmatprep.mubr.f32.mxu0 0.0
    %3311 = vmatmul.mubr.f32.gmra.mrb[0].mxu0 %v3173
    %v3312 = vpop.f32.mrb[0].mxu0
    %v3313 = vadd.f32 %v414, %v3312
    %v3314 = vpop.f32.mrb[0].mxu0
    %3315 = vdwg.mxu0
    %v3317 = vrot.slane %v3242, 1
    %v3318 = vrot.slane %v3242, 2
    %v3319 = vrot.slane %v3242, 3
    %v3320 = vrot.slane %v3242, 4
    %v3321 = vrot.slane %v3242, 5
    %v3322 = vrot.slane %v3242, 6
    %v3323 = vrot.slane %v3242, 7
    %v3332 = vadd.f32 %v202, %v3317
    %v3333 = vadd.f32 %v208, %v3318
    %v3334 = vadd.f32 %v214, %v3319
    %v3335 = vadd.f32 %v220, %v3320
    %v3336 = vadd.f32 %v226, %v3321
    %v3337 = vadd.f32 %v232, %v3322
    %v3338 = vadd.f32 %v238, %v3323
    %v3339 = vadd.f32 %v244, %v3242
    %v3340 = vxor.u32 %v3332, 2147483648
    %v3341 = vxor.u32 %v3333, 2147483648
    %v3342 = vxor.u32 %v3334, 2147483648
    %v3343 = vxor.u32 %v3335, 2147483648
    %v3344 = vxor.u32 %v3336, 2147483648
    %v3345 = vxor.u32 %v3337, 2147483648
    %v3346 = vxor.u32 %v3338, 2147483648
    %v3347 = vxor.u32 %v3339, 2147483648
    %v3348 = vmul.f32 %v3340, 1.442695
    %v3349 = vpow.pop %v3348
    %v3350 = vmul.f32 %v3341, 1.442695
    %v3351 = vpow.pop %v3350
    %v3352 = vmul.f32 %v3342, 1.442695
    %v3353 = vpow.pop %v3352
    %v3354 = vmul.f32 %v3343, 1.442695
    %v3355 = vpow.pop %v3354
    %v3356 = vmul.f32 %v3344, 1.442695
    %v3357 = vpow.pop %v3356
    %v3358 = vmul.f32 %v3345, 1.442695
    %v3359 = vpow.pop %v3358
    %v3360 = vmul.f32 %v3346, 1.442695
    %v3361 = vpow.pop %v3360
    %v3362 = vmul.f32 %v3347, 1.442695
    %v3363 = vpow.pop %v3362
    %v3364 = vadd.f32 %v3349, 1.0
    %v3365 = vadd.f32 %v3351, 1.0
    %v3366 = vadd.f32 %v3353, 1.0
    %v3367 = vadd.f32 %v3355, 1.0
    %v3368 = vadd.f32 %v3357, 1.0
    %v3369 = vadd.f32 %v3359, 1.0
    %v3370 = vadd.f32 %v3361, 1.0
    %v3371 = vadd.f32 %v3363, 1.0
    %v3372 = vrcp.pop %v3364
    %v3373 = vmul.f32 1.0, %v3372
    %v3374 = vrcp.pop %v3365
    %v3375 = vmul.f32 1.0, %v3374
    %v3376 = vrcp.pop %v3366
    %v3377 = vmul.f32 1.0, %v3376
    %v3378 = vrcp.pop %v3367
    %v3379 = vmul.f32 1.0, %v3378
    %v3380 = vrcp.pop %v3368
    %v3381 = vmul.f32 1.0, %v3380
    %v3382 = vrcp.pop %v3369
    %v3383 = vmul.f32 1.0, %v3382
    %v3384 = vrcp.pop %v3370
    %v3385 = vmul.f32 1.0, %v3384
    %v3386 = vrcp.pop %v3371
    %v3387 = vmul.f32 1.0, %v3386
    %v3389 = vrot.slane %v3244, 1
    %v3390 = vrot.slane %v3244, 2
    %v3391 = vrot.slane %v3244, 3
    %v3392 = vrot.slane %v3244, 4
    %v3393 = vrot.slane %v3244, 5
    %v3394 = vrot.slane %v3244, 6
    %v3395 = vrot.slane %v3244, 7
    %v3404 = vadd.f32 %v204, %v3389
    %v3405 = vadd.f32 %v210, %v3390
    %v3406 = vadd.f32 %v216, %v3391
    %v3407 = vadd.f32 %v222, %v3392
    %v3408 = vadd.f32 %v228, %v3393
    %v3409 = vadd.f32 %v234, %v3394
    %v3410 = vadd.f32 %v240, %v3395
    %v3411 = vadd.f32 %v246, %v3244
    %v3412 = vxor.u32 %v3404, 2147483648
    %v3413 = vxor.u32 %v3405, 2147483648
    %v3414 = vxor.u32 %v3406, 2147483648
    %v3415 = vxor.u32 %v3407, 2147483648
    %v3416 = vxor.u32 %v3408, 2147483648
    %v3417 = vxor.u32 %v3409, 2147483648
    %v3418 = vxor.u32 %v3410, 2147483648
    %v3419 = vxor.u32 %v3411, 2147483648
    %v3420 = vmul.f32 %v3412, 1.442695
    %v3421 = vpow.pop %v3420
    %v3422 = vmul.f32 %v3413, 1.442695
    %v3423 = vpow.pop %v3422
    %v3424 = vmul.f32 %v3414, 1.442695
    %v3425 = vpow.pop %v3424
    %v3426 = vmul.f32 %v3415, 1.442695
    %v3427 = vpow.pop %v3426
    %v3428 = vmul.f32 %v3416, 1.442695
    %v3429 = vpow.pop %v3428
    %v3430 = vmul.f32 %v3417, 1.442695
    %v3431 = vpow.pop %v3430
    %v3432 = vmul.f32 %v3418, 1.442695
    %v3433 = vpow.pop %v3432
    %v3434 = vmul.f32 %v3419, 1.442695
    %v3435 = vpow.pop %v3434
    %v3436 = vadd.f32 %v3421, 1.0
    %v3437 = vadd.f32 %v3423, 1.0
    %v3438 = vadd.f32 %v3425, 1.0
    %v3439 = vadd.f32 %v3427, 1.0
    %v3440 = vadd.f32 %v3429, 1.0
    %v3441 = vadd.f32 %v3431, 1.0
    %v3442 = vadd.f32 %v3433, 1.0
    %v3443 = vadd.f32 %v3435, 1.0
    %v3444 = vrcp.pop %v3436
    %v3445 = vmul.f32 1.0, %v3444
    %v3446 = vrcp.pop %v3437
    %v3447 = vmul.f32 1.0, %v3446
    %v3448 = vrcp.pop %v3438
    %v3449 = vmul.f32 1.0, %v3448
    %v3450 = vrcp.pop %v3439
    %v3451 = vmul.f32 1.0, %v3450
    %v3452 = vrcp.pop %v3440
    %v3453 = vmul.f32 1.0, %v3452
    %v3454 = vrcp.pop %v3441
    %v3455 = vmul.f32 1.0, %v3454
    %v3456 = vrcp.pop %v3442
    %v3457 = vmul.f32 1.0, %v3456
    %v3458 = vrcp.pop %v3443
    %v3459 = vmul.f32 1.0, %v3458
    %v3461 = vrot.slane %v3313, 1
    %v3462 = vrot.slane %v3313, 2
    %v3463 = vrot.slane %v3313, 3
    %v3464 = vrot.slane %v3313, 4
    %v3465 = vrot.slane %v3313, 5
    %v3466 = vrot.slane %v3313, 6
    %v3467 = vrot.slane %v3313, 7
    %v3476 = vmul.f32 %v3373, %v3461
    %v3477 = vmul.f32 %v3375, %v3462
    %v3478 = vmul.f32 %v3377, %v3463
    %v3479 = vmul.f32 %v3379, %v3464
    %v3480 = vmul.f32 %v3381, %v3465
    %v3481 = vmul.f32 %v3383, %v3466
    %v3482 = vmul.f32 %v3385, %v3467
    %v3483 = vmul.f32 %v3387, %v3313
    %v3484 = vadd.f32 %v315, %v3476
    %v3485 = vadd.f32 %v320, %v3477
    %v3486 = vadd.f32 %v325, %v3478
    %v3487 = vadd.f32 %v330, %v3479
    %v3488 = vadd.f32 %v335, %v3480
    %v3489 = vadd.f32 %v340, %v3481
    %v3490 = vadd.f32 %v345, %v3482
    %v3491 = vadd.f32 %v350, %v3483
    %v3492 = vtanh.pop %v3484
    %v3493 = vtanh.pop %v3485
    %v3494 = vtanh.pop %v3486
    %v3495 = vtanh.pop %v3487
    %v3496 = vtanh.pop %v3488
    %v3497 = vtanh.pop %v3489
    %v3498 = vtanh.pop %v3490
    %v3499 = vtanh.pop %v3491
    %v3500 = vsub.f32 1.0, %v3445
    %v3501 = vsub.f32 1.0, %v3447
    %v3502 = vsub.f32 1.0, %v3449
    %v3503 = vsub.f32 1.0, %v3451
    %v3504 = vsub.f32 1.0, %v3453
    %v3505 = vsub.f32 1.0, %v3455
    %v3506 = vsub.f32 1.0, %v3457
    %v3507 = vsub.f32 1.0, %v3459
    %v3508 = vmul.f32 %v3500, %v3492
    %v3509 = vmul.f32 %v3501, %v3493
    %v3510 = vmul.f32 %v3502, %v3494
    %v3511 = vmul.f32 %v3503, %v3495
    %v3512 = vmul.f32 %v3504, %v3496
    %v3513 = vmul.f32 %v3505, %v3497
    %v3514 = vmul.f32 %v3506, %v3498
    %v3515 = vmul.f32 %v3507, %v3499
    %v3516 = vrot.slane %v3144, 7
    %v3517 = vrot.slane %v3145, 7
    %v3518 = vrot.slane %v3146, 7
    %v3519 = vrot.slane %v3147, 7
    %v3520 = vrot.slane %v3148, 7
    %v3521 = vrot.slane %v3149, 7
    %v3522 = vrot.slane %v3150, 7
    %v3531 = vmul.f32 %v3445, %v3516
    %v3532 = vmul.f32 %v3447, %v3517
    %v3533 = vmul.f32 %v3449, %v3518
    %v3534 = vmul.f32 %v3451, %v3519
    %v3535 = vmul.f32 %v3453, %v3520
    %v3536 = vmul.f32 %v3455, %v3521
    %v3537 = vmul.f32 %v3457, %v3522
    %v3538 = vmul.f32 %v3459, %v3172
    %v3539 = vadd.f32 %v3508, %v3531
    %v3540 = vadd.f32 %v3509, %v3532
    %v3541 = vadd.f32 %v3510, %v3533
    %v3542 = vadd.f32 %v3511, %v3534
    %v3543 = vadd.f32 %v3512, %v3535
    %v3544 = vadd.f32 %v3513, %v3536
    %v3545 = vadd.f32 %v3514, %v3537
    %v3546 = vadd.f32 %v3515, %v3538
    %v3555 = vrot.slane %v3540, 7
    %v3556 = vrot.slane %v3541, 6
    %v3557 = vsel %vm784, %v3556, %v3555
    %v3558 = vrot.slane %v3542, 5
    %v3559 = vsel %vm787, %v3558, %v3557
    %v3560 = vrot.slane %v3543, 4
    %v3561 = vsel %vm790, %v3560, %v3559
    %v3562 = vrot.slane %v3544, 3
    %v3563 = vsel %vm793, %v3562, %v3561
    %v3564 = vrot.slane %v3545, 2
    %v3565 = vsel %vm796, %v3564, %v3563
    %v3566 = vrot.slane %v3546, 1
    %v3567 = vsel %vm799, %v3566, %v3565
    %3570 = vst [vmem:[#allocation8 - $0x7] sm:$0x80] %v3539
    %3571 = vst [vmem:[#allocation8 + $0x1] sm:$0x7f] %v3567
    // Predicated region
    $region34: #{tpu_custom_call.1} parent=1 // pred_check
      _
    $region35: #{tpu_custom_call.1} parent=1 // pred_check_branch
      %3573 = sbr.rel (0) target = $region37
    $region36: #{tpu_custom_call.1} parent=1 // pred_region
      %s3575 = ssub.s32 128, 128
      %3576 = vsyncadd [#allocation4], %s3575
      %s3578 = sshll.u32 [#allocation8], 4
      %s3579 = int_to_ptr.vmem [resolvable:$true] %s3578
      %3581 = dma.vmem_to_hbm [thread:$0]  %s3579, 128, %s5, [#allocation4]
    $region37: #{tpu_custom_call.1} parent=1 // pred_fallthru
      _
    // Predicated region
    $region38: #{tpu_custom_call.1} parent=1 // pred_check
      _
    $region39: #{tpu_custom_call.1} parent=1 // pred_check_branch
      %3583 = sbr.rel (0) target = $region41
    $region40: #{tpu_custom_call.1} parent=1 // pred_region
      %3584 = dma.done [#allocation4], 128
    $region41: #{tpu_custom_call.1} parent=1 // pred_fallthru
      _
    %3585 = vsyncpa [#allocation3], 1
    %3586 = vsyncpa [#allocation6], 1
    %3587 = vsyncpa [#allocation4], 1

</llo_original>
